<compile_context>
chip_gen: v6e
topology: v6e:2x2x1
jax: 0.10.0
libtpu: 0.0.40
codegen_flags: <defaults>
</compile_context>

<pallas_src>
import jax
import jax.numpy as jnp
import numpy as np
from jax.experimental import pallas as pl
from jax.experimental.pallas import tpu as pltpu  # noqa: F401  (kept for TPU-specific params if scaled up)


# -------------------- fused whole-model kernel --------------------------------
def _make_fused_kernel(n_layers, T, B, H):
    """Build the fused kernel.

    Ref order (as passed by pallas_call):
        x2d, (Wcat_l, Ucat_l, bcat_l) * n_layers, Wd, bd, out
    x2d is time-major flattened: row t*B + b  ==  X[b, t].
    """

    def kernel(x_ref, *refs):
        out_ref = refs[-1]
        wd = refs[-3][...]                 # (T*H, out)
        bd = refs[-2][...]                 # (1, out)

        # ---- layer 0: batch the non-recurrent input projection into ONE matmul.
        #      gx_all[t*B:(t+1)*B] == X[:, t] @ Wcat0 + b0  (bias broadcast hoisted)
        W0 = refs[0][...]
        b0 = refs[2][...]
        gx_all = jnp.dot(x_ref[...], W0, preferred_element_type=jnp.float32) + b0
        gx_steps = [gx_all[t * B:(t + 1) * B, :] for t in range(T)]   # static slices

        ys = None
        for l in range(n_layers):
            if l > 0:
                # Non-recurrent input projection for every timestep, precomputed
                # BEFORE the recurrent loop (off the serial h-chain).
                W = refs[3 * l][...]
                b = refs[3 * l + 2][...]
                gx_steps = [
                    jnp.dot(y, W, preferred_element_type=jnp.float32) + b
                    for y in ys
                ]
            U = refs[3 * l + 1][...]       # (H, 4H), VMEM-resident

            # Fully unrolled recurrence; h/s stay in vregs.  Only the single
            # (B,H)@(H,4H) matmul per step sits on the serial critical path.
            h = jnp.zeros((B, H), jnp.float32)
            s = jnp.zeros((B, H), jnp.float32)
            ys = []
            for t in range(T):
                gates = gx_steps[t] + jnp.dot(
                    h, U, preferred_element_type=jnp.float32)        # (B, 4H)
                f = jax.nn.sigmoid(gates[:, 0 * H:1 * H])
                i = jax.nn.sigmoid(gates[:, 1 * H:2 * H])
                o = jax.nn.sigmoid(gates[:, 2 * H:3 * H])
                c = jnp.tanh(gates[:, 3 * H:4 * H])
                s = f * s + i * c
                h = o * jnp.tanh(s)
                # CustomLSTM applies sigmoid to the stacked hidden states.
                ys.append(jax.nn.sigmoid(h))

        # ---- dense head on a lane-dense (B, T*H) slab (never leaves VMEM).
        #      flat[b] = [y_0[b], y_1[b], ..., y_{T-1}[b]]  ==  next_X.reshape(-1, H*T)
        flat = jnp.concatenate(ys, axis=1)                            # (B, T*H)
        out = jnp.dot(flat, wd, preferred_element_type=jnp.float32) + bd
        out_ref[...] = jax.nn.sigmoid(out)

    return kernel


def custom_lstm_forward(X, layers, Wd, bd):
    """X: (B, T, input_size) — same convention as the PyTorch module (X[:, t])."""
    B, T, F_in = X.shape
    H = layers[0][1].shape[0]
    n_layers = len(layers)
    out_size = Wd.shape[1]

    # One tiny host-side relayout: time-major flatten so row t*B + b == X[b, t].
    x2d = jnp.transpose(X, (1, 0, 2)).reshape(T * B, F_in)

    args = [x2d]
    for (Wc, Uc, bc) in layers:
        args += [Wc, Uc, bc]
    args += [Wd, bd]

    kernel = _make_fused_kernel(n_layers, T, B, H)
    return pl.pallas_call(
        kernel,
        out_shape=jax.ShapeDtypeStruct((B, out_size), jnp.float32),
        in_specs=[pl.BlockSpec(a.shape, lambda: (0, 0)) for a in args],
        out_specs=pl.BlockSpec((B, out_size), lambda: (0, 0)),
        # TODO(synk): if B grows beyond toy size, add a batch-tile grid axis
        # marked "parallel" so v7x's two TensorCores each run a batch shard.
    )(*args)


# -------------------- parameter init ------------------------------------------
def init_params(key, input_size, input_number, hidden_number, hidden_size,
                output_size):
    # Deterministic stand-in for `init_weights(f)`: small normal weights.
    layers = []
    in_sizes = [input_size] + [hidden_size] * hidden_number
    for fin in in_sizes:
        key, kw, ku, kb = jax.random.split(key, 4)
        Wcat = 0.1 * jax.random.normal(kw, (fin, 4 * hidden_size), jnp.float32)
        Ucat = 0.1 * jax.random.normal(ku, (hidden_size, 4 * hidden_size),
                                       jnp.float32)
        bcat = 0.1 * jax.random.normal(kb, (1, 4 * hidden_size), jnp.float32)
        layers.append((Wcat, Ucat, bcat))
    key, kdw, kdb = jax.random.split(key, 3)
    Wd = 0.1 * jax.random.normal(kdw, (hidden_size * input_number, output_size),
                                 jnp.float32)
    bd = 0.1 * jax.random.normal(kdb, (1, output_size), jnp.float32)
    return layers, Wd, bd


# -------------------- pure-JAX reference (mirrors the torch code) -------------
def reference_forward(X, layers, Wd, bd):
    B, T, _ = X.shape
    nxt = X
    for (Wcat, Ucat, bcat) in layers:
        H = Ucat.shape[0]
        Wf, Wi, Wo, Ws = (Wcat[:, k * H:(k + 1) * H] for k in range(4))
        Uf, Ui, Uo, Us = (Ucat[:, k * H:(k + 1) * H] for k in range(4))
        bf, bi, bo, bs = (bcat[0, k * H:(k + 1) * H] for k in range(4))
        s = jnp.zeros((H,), jnp.float32)
        h = jnp.zeros((H,), jnp.float32)
        Hs = []
        for t in range(T):
            xt = nxt[:, t]
            f = jax.nn.sigmoid(xt @ Wf + h @ Uf + bf)
            i = jax.nn.sigmoid(xt @ Wi + h @ Ui + bi)
            o = jax.nn.sigmoid(xt @ Wo + h @ Uo + bo)
            sc = jnp.tanh(xt @ Ws + h @ Us + bs)
            s = f * s + i * sc
            h = o * jnp.tanh(s)
            Hs.append(h)
        nxt = jax.nn.sigmoid(jnp.stack(Hs).swapaxes(0, 1))
    flat = nxt.reshape(-1, nxt.shape[1] * nxt.shape[2])
    return jax.nn.sigmoid(flat @ Wd + bd)


if __name__ == "__main__":
    # Small shapes consistent with the module's forward:
    #   X: (batch, input_number, input_size)
    batch, input_size, input_number = 2, 8, 8
    hidden_number, hidden_size, output_size = 2, 32, 4

    key = jax.random.PRNGKey(0)
    key, kx, kp = jax.random.split(key, 3)
    X = jax.random.normal(kx, (batch, input_number, input_size), jnp.float32)
    layers, Wd, bd = init_params(kp, input_size, input_number, hidden_number,
                                 hidden_size, output_size)

    fwd = jax.jit(custom_lstm_forward)
    out = jax.block_until_ready(fwd(X, layers, Wd, bd))
    ref = jax.block_until_ready(reference_forward(X, layers, Wd, bd))
    np.testing.assert_allclose(np.asarray(out), np.asarray(ref),
                               rtol=1e-5, atol=1e-5)
    assert out.shape == (batch, output_size)
    print("KERNEL_OK")
</pallas_src>

<mosaic_0001>
module attributes {stable_mosaic.version = 11 : i64} {
  func.func @kernel(%arg0: memref<16x8xf32, #tpu.memory_space<vmem>>, %arg1: memref<8x128xf32, #tpu.memory_space<vmem>>, %arg2: memref<32x128xf32, #tpu.memory_space<vmem>>, %arg3: memref<1x128xf32, #tpu.memory_space<vmem>>, %arg4: memref<32x128xf32, #tpu.memory_space<vmem>>, %arg5: memref<32x128xf32, #tpu.memory_space<vmem>>, %arg6: memref<1x128xf32, #tpu.memory_space<vmem>>, %arg7: memref<32x128xf32, #tpu.memory_space<vmem>>, %arg8: memref<32x128xf32, #tpu.memory_space<vmem>>, %arg9: memref<1x128xf32, #tpu.memory_space<vmem>>, %arg10: memref<256x4xf32, #tpu.memory_space<vmem>>, %arg11: memref<1x4xf32, #tpu.memory_space<vmem>>, %arg12: memref<2x4xf32, #tpu.memory_space<vmem>>) attributes {dimension_semantics = [], scalar_prefetch = 0 : i64, scratch_operands = 0 : i64, tpu.core_type = #tpu.core_type<tc>} {
    %c0 = arith.constant 0 : index
    %c0_0 = arith.constant 0 : index
    %0 = vector.load %arg10[%c0, %c0_0] : memref<256x4xf32, #tpu.memory_space<vmem>>, vector<256x4xf32>
    %c0_1 = arith.constant 0 : index
    %c0_2 = arith.constant 0 : index
    %1 = vector.load %arg11[%c0_1, %c0_2] : memref<1x4xf32, #tpu.memory_space<vmem>>, vector<1x4xf32>
    %c0_3 = arith.constant 0 : index
    %c0_4 = arith.constant 0 : index
    %2 = vector.load %arg1[%c0_3, %c0_4] : memref<8x128xf32, #tpu.memory_space<vmem>>, vector<8x128xf32>
    %c0_5 = arith.constant 0 : index
    %c0_6 = arith.constant 0 : index
    %3 = vector.load %arg3[%c0_5, %c0_6] : memref<1x128xf32, #tpu.memory_space<vmem>>, vector<1x128xf32>
    %c0_7 = arith.constant 0 : index
    %c0_8 = arith.constant 0 : index
    %4 = vector.load %arg0[%c0_7, %c0_8] : memref<16x8xf32, #tpu.memory_space<vmem>>, vector<16x8xf32>
    %cst = arith.constant dense<0.000000e+00> : vector<16x128xf32>
    %5 = tpu.matmul %4, %2, %cst {dimension_numbers = #tpu.dot_dimension_numbers<[1], [0], [0], [1], [0, 0, 1, 1], [], []>} : vector<16x8xf32>, vector<8x128xf32>, vector<16x128xf32> -> vector<16x128xf32>
    %6 = vector.broadcast %3 : vector<1x128xf32> to vector<16x128xf32>
    %7 = arith.addf %5, %6 : vector<16x128xf32>
    %8 = vector.extract_strided_slice %7 {offsets = [0, 0], sizes = [2, 128], strides = [1, 1]} : vector<16x128xf32> to vector<2x128xf32>
    %9 = vector.extract_strided_slice %7 {offsets = [2, 0], sizes = [2, 128], strides = [1, 1]} : vector<16x128xf32> to vector<2x128xf32>
    %10 = vector.extract_strided_slice %7 {offsets = [4, 0], sizes = [2, 128], strides = [1, 1]} : vector<16x128xf32> to vector<2x128xf32>
    %11 = vector.extract_strided_slice %7 {offsets = [6, 0], sizes = [2, 128], strides = [1, 1]} : vector<16x128xf32> to vector<2x128xf32>
    %12 = vector.extract_strided_slice %7 {offsets = [8, 0], sizes = [2, 128], strides = [1, 1]} : vector<16x128xf32> to vector<2x128xf32>
    %13 = vector.extract_strided_slice %7 {offsets = [10, 0], sizes = [2, 128], strides = [1, 1]} : vector<16x128xf32> to vector<2x128xf32>
    %14 = vector.extract_strided_slice %7 {offsets = [12, 0], sizes = [2, 128], strides = [1, 1]} : vector<16x128xf32> to vector<2x128xf32>
    %15 = vector.extract_strided_slice %7 {offsets = [14, 0], sizes = [2, 128], strides = [1, 1]} : vector<16x128xf32> to vector<2x128xf32>
    %c0_9 = arith.constant 0 : index
    %c0_10 = arith.constant 0 : index
    %16 = vector.load %arg2[%c0_9, %c0_10] : memref<32x128xf32, #tpu.memory_space<vmem>>, vector<32x128xf32>
    %cst_11 = arith.constant 0.000000e+00 : f32
    %17 = vector.broadcast %cst_11 : f32 to vector<2x32xf32>
    %cst_12 = arith.constant 0.000000e+00 : f32
    %18 = vector.broadcast %cst_12 : f32 to vector<2x32xf32>
    %cst_13 = arith.constant dense<0.000000e+00> : vector<2x128xf32>
    %19 = tpu.matmul %17, %16, %cst_13 {dimension_numbers = #tpu.dot_dimension_numbers<[1], [0], [0], [1], [0, 0, 1, 1], [], []>} : vector<2x32xf32>, vector<32x128xf32>, vector<2x128xf32> -> vector<2x128xf32>
    %20 = arith.addf %8, %19 : vector<2x128xf32>
    %21 = vector.extract_strided_slice %20 {offsets = [0, 0], sizes = [2, 32], strides = [1, 1]} : vector<2x128xf32> to vector<2x32xf32>
    %22 = arith.negf %21 : vector<2x32xf32>
    %23 = math.exp %22 : vector<2x32xf32>
    %cst_14 = arith.constant 1.000000e+00 : f32
    %24 = vector.broadcast %cst_14 : f32 to vector<2x32xf32>
    %25 = arith.addf %24, %23 : vector<2x32xf32>
    %26 = arith.divf %24, %25 : vector<2x32xf32>
    %27 = vector.extract_strided_slice %20 {offsets = [0, 32], sizes = [2, 32], strides = [1, 1]} : vector<2x128xf32> to vector<2x32xf32>
    %28 = arith.negf %27 : vector<2x32xf32>
    %29 = math.exp %28 : vector<2x32xf32>
    %cst_15 = arith.constant 1.000000e+00 : f32
    %30 = vector.broadcast %cst_15 : f32 to vector<2x32xf32>
    %31 = arith.addf %30, %29 : vector<2x32xf32>
    %32 = arith.divf %30, %31 : vector<2x32xf32>
    %33 = vector.extract_strided_slice %20 {offsets = [0, 64], sizes = [2, 32], strides = [1, 1]} : vector<2x128xf32> to vector<2x32xf32>
    %34 = arith.negf %33 : vector<2x32xf32>
    %35 = math.exp %34 : vector<2x32xf32>
    %cst_16 = arith.constant 1.000000e+00 : f32
    %36 = vector.broadcast %cst_16 : f32 to vector<2x32xf32>
    %37 = arith.addf %36, %35 : vector<2x32xf32>
    %38 = arith.divf %36, %37 : vector<2x32xf32>
    %39 = vector.extract_strided_slice %20 {offsets = [0, 96], sizes = [2, 32], strides = [1, 1]} : vector<2x128xf32> to vector<2x32xf32>
    %40 = math.tanh %39 : vector<2x32xf32>
    %41 = arith.mulf %26, %18 : vector<2x32xf32>
    %42 = arith.mulf %32, %40 : vector<2x32xf32>
    %43 = arith.addf %41, %42 : vector<2x32xf32>
    %44 = math.tanh %43 : vector<2x32xf32>
    %45 = arith.mulf %38, %44 : vector<2x32xf32>
    %46 = arith.negf %45 : vector<2x32xf32>
    %47 = math.exp %46 : vector<2x32xf32>
    %cst_17 = arith.constant 1.000000e+00 : f32
    %48 = vector.broadcast %cst_17 : f32 to vector<2x32xf32>
    %49 = arith.addf %48, %47 : vector<2x32xf32>
    %50 = arith.divf %48, %49 : vector<2x32xf32>
    %cst_18 = arith.constant dense<0.000000e+00> : vector<2x128xf32>
    %51 = tpu.matmul %45, %16, %cst_18 {dimension_numbers = #tpu.dot_dimension_numbers<[1], [0], [0], [1], [0, 0, 1, 1], [], []>} : vector<2x32xf32>, vector<32x128xf32>, vector<2x128xf32> -> vector<2x128xf32>
    %52 = arith.addf %9, %51 : vector<2x128xf32>
    %53 = vector.extract_strided_slice %52 {offsets = [0, 0], sizes = [2, 32], strides = [1, 1]} : vector<2x128xf32> to vector<2x32xf32>
    %54 = arith.negf %53 : vector<2x32xf32>
    %55 = math.exp %54 : vector<2x32xf32>
    %cst_19 = arith.constant 1.000000e+00 : f32
    %56 = vector.broadcast %cst_19 : f32 to vector<2x32xf32>
    %57 = arith.addf %56, %55 : vector<2x32xf32>
    %58 = arith.divf %56, %57 : vector<2x32xf32>
    %59 = vector.extract_strided_slice %52 {offsets = [0, 32], sizes = [2, 32], strides = [1, 1]} : vector<2x128xf32> to vector<2x32xf32>
    %60 = arith.negf %59 : vector<2x32xf32>
    %61 = math.exp %60 : vector<2x32xf32>
    %cst_20 = arith.constant 1.000000e+00 : f32
    %62 = vector.broadcast %cst_20 : f32 to vector<2x32xf32>
    %63 = arith.addf %62, %61 : vector<2x32xf32>
    %64 = arith.divf %62, %63 : vector<2x32xf32>
    %65 = vector.extract_strided_slice %52 {offsets = [0, 64], sizes = [2, 32], strides = [1, 1]} : vector<2x128xf32> to vector<2x32xf32>
    %66 = arith.negf %65 : vector<2x32xf32>
    %67 = math.exp %66 : vector<2x32xf32>
    %cst_21 = arith.constant 1.000000e+00 : f32
    %68 = vector.broadcast %cst_21 : f32 to vector<2x32xf32>
    %69 = arith.addf %68, %67 : vector<2x32xf32>
    %70 = arith.divf %68, %69 : vector<2x32xf32>
    %71 = vector.extract_strided_slice %52 {offsets = [0, 96], sizes = [2, 32], strides = [1, 1]} : vector<2x128xf32> to vector<2x32xf32>
    %72 = math.tanh %71 : vector<2x32xf32>
    %73 = arith.mulf %58, %43 : vector<2x32xf32>
    %74 = arith.mulf %64, %72 : vector<2x32xf32>
    %75 = arith.addf %73, %74 : vector<2x32xf32>
    %76 = math.tanh %75 : vector<2x32xf32>
    %77 = arith.mulf %70, %76 : vector<2x32xf32>
    %78 = arith.negf %77 : vector<2x32xf32>
    %79 = math.exp %78 : vector<2x32xf32>
    %cst_22 = arith.constant 1.000000e+00 : f32
    %80 = vector.broadcast %cst_22 : f32 to vector<2x32xf32>
    %81 = arith.addf %80, %79 : vector<2x32xf32>
    %82 = arith.divf %80, %81 : vector<2x32xf32>
    %cst_23 = arith.constant dense<0.000000e+00> : vector<2x128xf32>
    %83 = tpu.matmul %77, %16, %cst_23 {dimension_numbers = #tpu.dot_dimension_numbers<[1], [0], [0], [1], [0, 0, 1, 1], [], []>} : vector<2x32xf32>, vector<32x128xf32>, vector<2x128xf32> -> vector<2x128xf32>
    %84 = arith.addf %10, %83 : vector<2x128xf32>
    %85 = vector.extract_strided_slice %84 {offsets = [0, 0], sizes = [2, 32], strides = [1, 1]} : vector<2x128xf32> to vector<2x32xf32>
    %86 = arith.negf %85 : vector<2x32xf32>
    %87 = math.exp %86 : vector<2x32xf32>
    %cst_24 = arith.constant 1.000000e+00 : f32
    %88 = vector.broadcast %cst_24 : f32 to vector<2x32xf32>
    %89 = arith.addf %88, %87 : vector<2x32xf32>
    %90 = arith.divf %88, %89 : vector<2x32xf32>
    %91 = vector.extract_strided_slice %84 {offsets = [0, 32], sizes = [2, 32], strides = [1, 1]} : vector<2x128xf32> to vector<2x32xf32>
    %92 = arith.negf %91 : vector<2x32xf32>
    %93 = math.exp %92 : vector<2x32xf32>
    %cst_25 = arith.constant 1.000000e+00 : f32
    %94 = vector.broadcast %cst_25 : f32 to vector<2x32xf32>
    %95 = arith.addf %94, %93 : vector<2x32xf32>
    %96 = arith.divf %94, %95 : vector<2x32xf32>
    %97 = vector.extract_strided_slice %84 {offsets = [0, 64], sizes = [2, 32], strides = [1, 1]} : vector<2x128xf32> to vector<2x32xf32>
    %98 = arith.negf %97 : vector<2x32xf32>
    %99 = math.exp %98 : vector<2x32xf32>
    %cst_26 = arith.constant 1.000000e+00 : f32
    %100 = vector.broadcast %cst_26 : f32 to vector<2x32xf32>
    %101 = arith.addf %100, %99 : vector<2x32xf32>
    %102 = arith.divf %100, %101 : vector<2x32xf32>
    %103 = vector.extract_strided_slice %84 {offsets = [0, 96], sizes = [2, 32], strides = [1, 1]} : vector<2x128xf32> to vector<2x32xf32>
    %104 = math.tanh %103 : vector<2x32xf32>
    %105 = arith.mulf %90, %75 : vector<2x32xf32>
    %106 = arith.mulf %96, %104 : vector<2x32xf32>
    %107 = arith.addf %105, %106 : vector<2x32xf32>
    %108 = math.tanh %107 : vector<2x32xf32>
    %109 = arith.mulf %102, %108 : vector<2x32xf32>
    %110 = arith.negf %109 : vector<2x32xf32>
    %111 = math.exp %110 : vector<2x32xf32>
    %cst_27 = arith.constant 1.000000e+00 : f32
    %112 = vector.broadcast %cst_27 : f32 to vector<2x32xf32>
    %113 = arith.addf %112, %111 : vector<2x32xf32>
    %114 = arith.divf %112, %113 : vector<2x32xf32>
    %cst_28 = arith.constant dense<0.000000e+00> : vector<2x128xf32>
    %115 = tpu.matmul %109, %16, %cst_28 {dimension_numbers = #tpu.dot_dimension_numbers<[1], [0], [0], [1], [0, 0, 1, 1], [], []>} : vector<2x32xf32>, vector<32x128xf32>, vector<2x128xf32> -> vector<2x128xf32>
    %116 = arith.addf %11, %115 : vector<2x128xf32>
    %117 = vector.extract_strided_slice %116 {offsets = [0, 0], sizes = [2, 32], strides = [1, 1]} : vector<2x128xf32> to vector<2x32xf32>
    %118 = arith.negf %117 : vector<2x32xf32>
    %119 = math.exp %118 : vector<2x32xf32>
    %cst_29 = arith.constant 1.000000e+00 : f32
    %120 = vector.broadcast %cst_29 : f32 to vector<2x32xf32>
    %121 = arith.addf %120, %119 : vector<2x32xf32>
    %122 = arith.divf %120, %121 : vector<2x32xf32>
    %123 = vector.extract_strided_slice %116 {offsets = [0, 32], sizes = [2, 32], strides = [1, 1]} : vector<2x128xf32> to vector<2x32xf32>
    %124 = arith.negf %123 : vector<2x32xf32>
    %125 = math.exp %124 : vector<2x32xf32>
    %cst_30 = arith.constant 1.000000e+00 : f32
    %126 = vector.broadcast %cst_30 : f32 to vector<2x32xf32>
    %127 = arith.addf %126, %125 : vector<2x32xf32>
    %128 = arith.divf %126, %127 : vector<2x32xf32>
    %129 = vector.extract_strided_slice %116 {offsets = [0, 64], sizes = [2, 32], strides = [1, 1]} : vector<2x128xf32> to vector<2x32xf32>
    %130 = arith.negf %129 : vector<2x32xf32>
    %131 = math.exp %130 : vector<2x32xf32>
    %cst_31 = arith.constant 1.000000e+00 : f32
    %132 = vector.broadcast %cst_31 : f32 to vector<2x32xf32>
    %133 = arith.addf %132, %131 : vector<2x32xf32>
    %134 = arith.divf %132, %133 : vector<2x32xf32>
    %135 = vector.extract_strided_slice %116 {offsets = [0, 96], sizes = [2, 32], strides = [1, 1]} : vector<2x128xf32> to vector<2x32xf32>
    %136 = math.tanh %135 : vector<2x32xf32>
    %137 = arith.mulf %122, %107 : vector<2x32xf32>
    %138 = arith.mulf %128, %136 : vector<2x32xf32>
    %139 = arith.addf %137, %138 : vector<2x32xf32>
    %140 = math.tanh %139 : vector<2x32xf32>
    %141 = arith.mulf %134, %140 : vector<2x32xf32>
    %142 = arith.negf %141 : vector<2x32xf32>
    %143 = math.exp %142 : vector<2x32xf32>
    %cst_32 = arith.constant 1.000000e+00 : f32
    %144 = vector.broadcast %cst_32 : f32 to vector<2x32xf32>
    %145 = arith.addf %144, %143 : vector<2x32xf32>
    %146 = arith.divf %144, %145 : vector<2x32xf32>
    %cst_33 = arith.constant dense<0.000000e+00> : vector<2x128xf32>
    %147 = tpu.matmul %141, %16, %cst_33 {dimension_numbers = #tpu.dot_dimension_numbers<[1], [0], [0], [1], [0, 0, 1, 1], [], []>} : vector<2x32xf32>, vector<32x128xf32>, vector<2x128xf32> -> vector<2x128xf32>
    %148 = arith.addf %12, %147 : vector<2x128xf32>
    %149 = vector.extract_strided_slice %148 {offsets = [0, 0], sizes = [2, 32], strides = [1, 1]} : vector<2x128xf32> to vector<2x32xf32>
    %150 = arith.negf %149 : vector<2x32xf32>
    %151 = math.exp %150 : vector<2x32xf32>
    %cst_34 = arith.constant 1.000000e+00 : f32
    %152 = vector.broadcast %cst_34 : f32 to vector<2x32xf32>
    %153 = arith.addf %152, %151 : vector<2x32xf32>
    %154 = arith.divf %152, %153 : vector<2x32xf32>
    %155 = vector.extract_strided_slice %148 {offsets = [0, 32], sizes = [2, 32], strides = [1, 1]} : vector<2x128xf32> to vector<2x32xf32>
    %156 = arith.negf %155 : vector<2x32xf32>
    %157 = math.exp %156 : vector<2x32xf32>
    %cst_35 = arith.constant 1.000000e+00 : f32
    %158 = vector.broadcast %cst_35 : f32 to vector<2x32xf32>
    %159 = arith.addf %158, %157 : vector<2x32xf32>
    %160 = arith.divf %158, %159 : vector<2x32xf32>
    %161 = vector.extract_strided_slice %148 {offsets = [0, 64], sizes = [2, 32], strides = [1, 1]} : vector<2x128xf32> to vector<2x32xf32>
    %162 = arith.negf %161 : vector<2x32xf32>
    %163 = math.exp %162 : vector<2x32xf32>
    %cst_36 = arith.constant 1.000000e+00 : f32
    %164 = vector.broadcast %cst_36 : f32 to vector<2x32xf32>
    %165 = arith.addf %164, %163 : vector<2x32xf32>
    %166 = arith.divf %164, %165 : vector<2x32xf32>
    %167 = vector.extract_strided_slice %148 {offsets = [0, 96], sizes = [2, 32], strides = [1, 1]} : vector<2x128xf32> to vector<2x32xf32>
    %168 = math.tanh %167 : vector<2x32xf32>
    %169 = arith.mulf %154, %139 : vector<2x32xf32>
    %170 = arith.mulf %160, %168 : vector<2x32xf32>
    %171 = arith.addf %169, %170 : vector<2x32xf32>
    %172 = math.tanh %171 : vector<2x32xf32>
    %173 = arith.mulf %166, %172 : vector<2x32xf32>
    %174 = arith.negf %173 : vector<2x32xf32>
    %175 = math.exp %174 : vector<2x32xf32>
    %cst_37 = arith.constant 1.000000e+00 : f32
    %176 = vector.broadcast %cst_37 : f32 to vector<2x32xf32>
    %177 = arith.addf %176, %175 : vector<2x32xf32>
    %178 = arith.divf %176, %177 : vector<2x32xf32>
    %cst_38 = arith.constant dense<0.000000e+00> : vector<2x128xf32>
    %179 = tpu.matmul %173, %16, %cst_38 {dimension_numbers = #tpu.dot_dimension_numbers<[1], [0], [0], [1], [0, 0, 1, 1], [], []>} : vector<2x32xf32>, vector<32x128xf32>, vector<2x128xf32> -> vector<2x128xf32>
    %180 = arith.addf %13, %179 : vector<2x128xf32>
    %181 = vector.extract_strided_slice %180 {offsets = [0, 0], sizes = [2, 32], strides = [1, 1]} : vector<2x128xf32> to vector<2x32xf32>
    %182 = arith.negf %181 : vector<2x32xf32>
    %183 = math.exp %182 : vector<2x32xf32>
    %cst_39 = arith.constant 1.000000e+00 : f32
    %184 = vector.broadcast %cst_39 : f32 to vector<2x32xf32>
    %185 = arith.addf %184, %183 : vector<2x32xf32>
    %186 = arith.divf %184, %185 : vector<2x32xf32>
    %187 = vector.extract_strided_slice %180 {offsets = [0, 32], sizes = [2, 32], strides = [1, 1]} : vector<2x128xf32> to vector<2x32xf32>
    %188 = arith.negf %187 : vector<2x32xf32>
    %189 = math.exp %188 : vector<2x32xf32>
    %cst_40 = arith.constant 1.000000e+00 : f32
    %190 = vector.broadcast %cst_40 : f32 to vector<2x32xf32>
    %191 = arith.addf %190, %189 : vector<2x32xf32>
    %192 = arith.divf %190, %191 : vector<2x32xf32>
    %193 = vector.extract_strided_slice %180 {offsets = [0, 64], sizes = [2, 32], strides = [1, 1]} : vector<2x128xf32> to vector<2x32xf32>
    %194 = arith.negf %193 : vector<2x32xf32>
    %195 = math.exp %194 : vector<2x32xf32>
    %cst_41 = arith.constant 1.000000e+00 : f32
    %196 = vector.broadcast %cst_41 : f32 to vector<2x32xf32>
    %197 = arith.addf %196, %195 : vector<2x32xf32>
    %198 = arith.divf %196, %197 : vector<2x32xf32>
    %199 = vector.extract_strided_slice %180 {offsets = [0, 96], sizes = [2, 32], strides = [1, 1]} : vector<2x128xf32> to vector<2x32xf32>
    %200 = math.tanh %199 : vector<2x32xf32>
    %201 = arith.mulf %186, %171 : vector<2x32xf32>
    %202 = arith.mulf %192, %200 : vector<2x32xf32>
    %203 = arith.addf %201, %202 : vector<2x32xf32>
    %204 = math.tanh %203 : vector<2x32xf32>
    %205 = arith.mulf %198, %204 : vector<2x32xf32>
    %206 = arith.negf %205 : vector<2x32xf32>
    %207 = math.exp %206 : vector<2x32xf32>
    %cst_42 = arith.constant 1.000000e+00 : f32
    %208 = vector.broadcast %cst_42 : f32 to vector<2x32xf32>
    %209 = arith.addf %208, %207 : vector<2x32xf32>
    %210 = arith.divf %208, %209 : vector<2x32xf32>
    %cst_43 = arith.constant dense<0.000000e+00> : vector<2x128xf32>
    %211 = tpu.matmul %205, %16, %cst_43 {dimension_numbers = #tpu.dot_dimension_numbers<[1], [0], [0], [1], [0, 0, 1, 1], [], []>} : vector<2x32xf32>, vector<32x128xf32>, vector<2x128xf32> -> vector<2x128xf32>
    %212 = arith.addf %14, %211 : vector<2x128xf32>
    %213 = vector.extract_strided_slice %212 {offsets = [0, 0], sizes = [2, 32], strides = [1, 1]} : vector<2x128xf32> to vector<2x32xf32>
    %214 = arith.negf %213 : vector<2x32xf32>
    %215 = math.exp %214 : vector<2x32xf32>
    %cst_44 = arith.constant 1.000000e+00 : f32
    %216 = vector.broadcast %cst_44 : f32 to vector<2x32xf32>
    %217 = arith.addf %216, %215 : vector<2x32xf32>
    %218 = arith.divf %216, %217 : vector<2x32xf32>
    %219 = vector.extract_strided_slice %212 {offsets = [0, 32], sizes = [2, 32], strides = [1, 1]} : vector<2x128xf32> to vector<2x32xf32>
    %220 = arith.negf %219 : vector<2x32xf32>
    %221 = math.exp %220 : vector<2x32xf32>
    %cst_45 = arith.constant 1.000000e+00 : f32
    %222 = vector.broadcast %cst_45 : f32 to vector<2x32xf32>
    %223 = arith.addf %222, %221 : vector<2x32xf32>
    %224 = arith.divf %222, %223 : vector<2x32xf32>
    %225 = vector.extract_strided_slice %212 {offsets = [0, 64], sizes = [2, 32], strides = [1, 1]} : vector<2x128xf32> to vector<2x32xf32>
    %226 = arith.negf %225 : vector<2x32xf32>
    %227 = math.exp %226 : vector<2x32xf32>
    %cst_46 = arith.constant 1.000000e+00 : f32
    %228 = vector.broadcast %cst_46 : f32 to vector<2x32xf32>
    %229 = arith.addf %228, %227 : vector<2x32xf32>
    %230 = arith.divf %228, %229 : vector<2x32xf32>
    %231 = vector.extract_strided_slice %212 {offsets = [0, 96], sizes = [2, 32], strides = [1, 1]} : vector<2x128xf32> to vector<2x32xf32>
    %232 = math.tanh %231 : vector<2x32xf32>
    %233 = arith.mulf %218, %203 : vector<2x32xf32>
    %234 = arith.mulf %224, %232 : vector<2x32xf32>
    %235 = arith.addf %233, %234 : vector<2x32xf32>
    %236 = math.tanh %235 : vector<2x32xf32>
    %237 = arith.mulf %230, %236 : vector<2x32xf32>
    %238 = arith.negf %237 : vector<2x32xf32>
    %239 = math.exp %238 : vector<2x32xf32>
    %cst_47 = arith.constant 1.000000e+00 : f32
    %240 = vector.broadcast %cst_47 : f32 to vector<2x32xf32>
    %241 = arith.addf %240, %239 : vector<2x32xf32>
    %242 = arith.divf %240, %241 : vector<2x32xf32>
    %cst_48 = arith.constant dense<0.000000e+00> : vector<2x128xf32>
    %243 = tpu.matmul %237, %16, %cst_48 {dimension_numbers = #tpu.dot_dimension_numbers<[1], [0], [0], [1], [0, 0, 1, 1], [], []>} : vector<2x32xf32>, vector<32x128xf32>, vector<2x128xf32> -> vector<2x128xf32>
    %244 = arith.addf %15, %243 : vector<2x128xf32>
    %245 = vector.extract_strided_slice %244 {offsets = [0, 0], sizes = [2, 32], strides = [1, 1]} : vector<2x128xf32> to vector<2x32xf32>
    %246 = arith.negf %245 : vector<2x32xf32>
    %247 = math.exp %246 : vector<2x32xf32>
    %cst_49 = arith.constant 1.000000e+00 : f32
    %248 = vector.broadcast %cst_49 : f32 to vector<2x32xf32>
    %249 = arith.addf %248, %247 : vector<2x32xf32>
    %250 = arith.divf %248, %249 : vector<2x32xf32>
    %251 = vector.extract_strided_slice %244 {offsets = [0, 32], sizes = [2, 32], strides = [1, 1]} : vector<2x128xf32> to vector<2x32xf32>
    %252 = arith.negf %251 : vector<2x32xf32>
    %253 = math.exp %252 : vector<2x32xf32>
    %cst_50 = arith.constant 1.000000e+00 : f32
    %254 = vector.broadcast %cst_50 : f32 to vector<2x32xf32>
    %255 = arith.addf %254, %253 : vector<2x32xf32>
    %256 = arith.divf %254, %255 : vector<2x32xf32>
    %257 = vector.extract_strided_slice %244 {offsets = [0, 64], sizes = [2, 32], strides = [1, 1]} : vector<2x128xf32> to vector<2x32xf32>
    %258 = arith.negf %257 : vector<2x32xf32>
    %259 = math.exp %258 : vector<2x32xf32>
    %cst_51 = arith.constant 1.000000e+00 : f32
    %260 = vector.broadcast %cst_51 : f32 to vector<2x32xf32>
    %261 = arith.addf %260, %259 : vector<2x32xf32>
    %262 = arith.divf %260, %261 : vector<2x32xf32>
    %263 = vector.extract_strided_slice %244 {offsets = [0, 96], sizes = [2, 32], strides = [1, 1]} : vector<2x128xf32> to vector<2x32xf32>
    %264 = math.tanh %263 : vector<2x32xf32>
    %265 = arith.mulf %250, %235 : vector<2x32xf32>
    %266 = arith.mulf %256, %264 : vector<2x32xf32>
    %267 = arith.addf %265, %266 : vector<2x32xf32>
    %268 = math.tanh %267 : vector<2x32xf32>
    %269 = arith.mulf %262, %268 : vector<2x32xf32>
    %270 = arith.negf %269 : vector<2x32xf32>
    %271 = math.exp %270 : vector<2x32xf32>
    %cst_52 = arith.constant 1.000000e+00 : f32
    %272 = vector.broadcast %cst_52 : f32 to vector<2x32xf32>
    %273 = arith.addf %272, %271 : vector<2x32xf32>
    %274 = arith.divf %272, %273 : vector<2x32xf32>
    %c0_53 = arith.constant 0 : index
    %c0_54 = arith.constant 0 : index
    %275 = vector.load %arg4[%c0_53, %c0_54] : memref<32x128xf32, #tpu.memory_space<vmem>>, vector<32x128xf32>
    %c0_55 = arith.constant 0 : index
    %c0_56 = arith.constant 0 : index
    %276 = vector.load %arg6[%c0_55, %c0_56] : memref<1x128xf32, #tpu.memory_space<vmem>>, vector<1x128xf32>
    %cst_57 = arith.constant dense<0.000000e+00> : vector<2x128xf32>
    %277 = tpu.matmul %50, %275, %cst_57 {dimension_numbers = #tpu.dot_dimension_numbers<[1], [0], [0], [1], [0, 0, 1, 1], [], []>} : vector<2x32xf32>, vector<32x128xf32>, vector<2x128xf32> -> vector<2x128xf32>
    %278 = vector.broadcast %276 : vector<1x128xf32> to vector<2x128xf32>
    %279 = arith.addf %277, %278 : vector<2x128xf32>
    %cst_58 = arith.constant dense<0.000000e+00> : vector<2x128xf32>
    %280 = tpu.matmul %82, %275, %cst_58 {dimension_numbers = #tpu.dot_dimension_numbers<[1], [0], [0], [1], [0, 0, 1, 1], [], []>} : vector<2x32xf32>, vector<32x128xf32>, vector<2x128xf32> -> vector<2x128xf32>
    %281 = vector.broadcast %276 : vector<1x128xf32> to vector<2x128xf32>
    %282 = arith.addf %280, %281 : vector<2x128xf32>
    %cst_59 = arith.constant dense<0.000000e+00> : vector<2x128xf32>
    %283 = tpu.matmul %114, %275, %cst_59 {dimension_numbers = #tpu.dot_dimension_numbers<[1], [0], [0], [1], [0, 0, 1, 1], [], []>} : vector<2x32xf32>, vector<32x128xf32>, vector<2x128xf32> -> vector<2x128xf32>
    %284 = vector.broadcast %276 : vector<1x128xf32> to vector<2x128xf32>
    %285 = arith.addf %283, %284 : vector<2x128xf32>
    %cst_60 = arith.constant dense<0.000000e+00> : vector<2x128xf32>
    %286 = tpu.matmul %146, %275, %cst_60 {dimension_numbers = #tpu.dot_dimension_numbers<[1], [0], [0], [1], [0, 0, 1, 1], [], []>} : vector<2x32xf32>, vector<32x128xf32>, vector<2x128xf32> -> vector<2x128xf32>
    %287 = vector.broadcast %276 : vector<1x128xf32> to vector<2x128xf32>
    %288 = arith.addf %286, %287 : vector<2x128xf32>
    %cst_61 = arith.constant dense<0.000000e+00> : vector<2x128xf32>
    %289 = tpu.matmul %178, %275, %cst_61 {dimension_numbers = #tpu.dot_dimension_numbers<[1], [0], [0], [1], [0, 0, 1, 1], [], []>} : vector<2x32xf32>, vector<32x128xf32>, vector<2x128xf32> -> vector<2x128xf32>
    %290 = vector.broadcast %276 : vector<1x128xf32> to vector<2x128xf32>
    %291 = arith.addf %289, %290 : vector<2x128xf32>
    %cst_62 = arith.constant dense<0.000000e+00> : vector<2x128xf32>
    %292 = tpu.matmul %210, %275, %cst_62 {dimension_numbers = #tpu.dot_dimension_numbers<[1], [0], [0], [1], [0, 0, 1, 1], [], []>} : vector<2x32xf32>, vector<32x128xf32>, vector<2x128xf32> -> vector<2x128xf32>
    %293 = vector.broadcast %276 : vector<1x128xf32> to vector<2x128xf32>
    %294 = arith.addf %292, %293 : vector<2x128xf32>
    %cst_63 = arith.constant dense<0.000000e+00> : vector<2x128xf32>
    %295 = tpu.matmul %242, %275, %cst_63 {dimension_numbers = #tpu.dot_dimension_numbers<[1], [0], [0], [1], [0, 0, 1, 1], [], []>} : vector<2x32xf32>, vector<32x128xf32>, vector<2x128xf32> -> vector<2x128xf32>
    %296 = vector.broadcast %276 : vector<1x128xf32> to vector<2x128xf32>
    %297 = arith.addf %295, %296 : vector<2x128xf32>
    %cst_64 = arith.constant dense<0.000000e+00> : vector<2x128xf32>
    %298 = tpu.matmul %274, %275, %cst_64 {dimension_numbers = #tpu.dot_dimension_numbers<[1], [0], [0], [1], [0, 0, 1, 1], [], []>} : vector<2x32xf32>, vector<32x128xf32>, vector<2x128xf32> -> vector<2x128xf32>
    %299 = vector.broadcast %276 : vector<1x128xf32> to vector<2x128xf32>
    %300 = arith.addf %298, %299 : vector<2x128xf32>
    %c0_65 = arith.constant 0 : index
    %c0_66 = arith.constant 0 : index
    %301 = vector.load %arg5[%c0_65, %c0_66] : memref<32x128xf32, #tpu.memory_space<vmem>>, vector<32x128xf32>
    %cst_67 = arith.constant 0.000000e+00 : f32
    %302 = vector.broadcast %cst_67 : f32 to vector<2x32xf32>
    %cst_68 = arith.constant 0.000000e+00 : f32
    %303 = vector.broadcast %cst_68 : f32 to vector<2x32xf32>
    %cst_69 = arith.constant dense<0.000000e+00> : vector<2x128xf32>
    %304 = tpu.matmul %302, %301, %cst_69 {dimension_numbers = #tpu.dot_dimension_numbers<[1], [0], [0], [1], [0, 0, 1, 1], [], []>} : vector<2x32xf32>, vector<32x128xf32>, vector<2x128xf32> -> vector<2x128xf32>
    %305 = arith.addf %279, %304 : vector<2x128xf32>
    %306 = vector.extract_strided_slice %305 {offsets = [0, 0], sizes = [2, 32], strides = [1, 1]} : vector<2x128xf32> to vector<2x32xf32>
    %307 = arith.negf %306 : vector<2x32xf32>
    %308 = math.exp %307 : vector<2x32xf32>
    %cst_70 = arith.constant 1.000000e+00 : f32
    %309 = vector.broadcast %cst_70 : f32 to vector<2x32xf32>
    %310 = arith.addf %309, %308 : vector<2x32xf32>
    %311 = arith.divf %309, %310 : vector<2x32xf32>
    %312 = vector.extract_strided_slice %305 {offsets = [0, 32], sizes = [2, 32], strides = [1, 1]} : vector<2x128xf32> to vector<2x32xf32>
    %313 = arith.negf %312 : vector<2x32xf32>
    %314 = math.exp %313 : vector<2x32xf32>
    %cst_71 = arith.constant 1.000000e+00 : f32
    %315 = vector.broadcast %cst_71 : f32 to vector<2x32xf32>
    %316 = arith.addf %315, %314 : vector<2x32xf32>
    %317 = arith.divf %315, %316 : vector<2x32xf32>
    %318 = vector.extract_strided_slice %305 {offsets = [0, 64], sizes = [2, 32], strides = [1, 1]} : vector<2x128xf32> to vector<2x32xf32>
    %319 = arith.negf %318 : vector<2x32xf32>
    %320 = math.exp %319 : vector<2x32xf32>
    %cst_72 = arith.constant 1.000000e+00 : f32
    %321 = vector.broadcast %cst_72 : f32 to vector<2x32xf32>
    %322 = arith.addf %321, %320 : vector<2x32xf32>
    %323 = arith.divf %321, %322 : vector<2x32xf32>
    %324 = vector.extract_strided_slice %305 {offsets = [0, 96], sizes = [2, 32], strides = [1, 1]} : vector<2x128xf32> to vector<2x32xf32>
    %325 = math.tanh %324 : vector<2x32xf32>
    %326 = arith.mulf %311, %303 : vector<2x32xf32>
    %327 = arith.mulf %317, %325 : vector<2x32xf32>
    %328 = arith.addf %326, %327 : vector<2x32xf32>
    %329 = math.tanh %328 : vector<2x32xf32>
    %330 = arith.mulf %323, %329 : vector<2x32xf32>
    %331 = arith.negf %330 : vector<2x32xf32>
    %332 = math.exp %331 : vector<2x32xf32>
    %cst_73 = arith.constant 1.000000e+00 : f32
    %333 = vector.broadcast %cst_73 : f32 to vector<2x32xf32>
    %334 = arith.addf %333, %332 : vector<2x32xf32>
    %335 = arith.divf %333, %334 : vector<2x32xf32>
    %cst_74 = arith.constant dense<0.000000e+00> : vector<2x128xf32>
    %336 = tpu.matmul %330, %301, %cst_74 {dimension_numbers = #tpu.dot_dimension_numbers<[1], [0], [0], [1], [0, 0, 1, 1], [], []>} : vector<2x32xf32>, vector<32x128xf32>, vector<2x128xf32> -> vector<2x128xf32>
    %337 = arith.addf %282, %336 : vector<2x128xf32>
    %338 = vector.extract_strided_slice %337 {offsets = [0, 0], sizes = [2, 32], strides = [1, 1]} : vector<2x128xf32> to vector<2x32xf32>
    %339 = arith.negf %338 : vector<2x32xf32>
    %340 = math.exp %339 : vector<2x32xf32>
    %cst_75 = arith.constant 1.000000e+00 : f32
    %341 = vector.broadcast %cst_75 : f32 to vector<2x32xf32>
    %342 = arith.addf %341, %340 : vector<2x32xf32>
    %343 = arith.divf %341, %342 : vector<2x32xf32>
    %344 = vector.extract_strided_slice %337 {offsets = [0, 32], sizes = [2, 32], strides = [1, 1]} : vector<2x128xf32> to vector<2x32xf32>
    %345 = arith.negf %344 : vector<2x32xf32>
    %346 = math.exp %345 : vector<2x32xf32>
    %cst_76 = arith.constant 1.000000e+00 : f32
    %347 = vector.broadcast %cst_76 : f32 to vector<2x32xf32>
    %348 = arith.addf %347, %346 : vector<2x32xf32>
    %349 = arith.divf %347, %348 : vector<2x32xf32>
    %350 = vector.extract_strided_slice %337 {offsets = [0, 64], sizes = [2, 32], strides = [1, 1]} : vector<2x128xf32> to vector<2x32xf32>
    %351 = arith.negf %350 : vector<2x32xf32>
    %352 = math.exp %351 : vector<2x32xf32>
    %cst_77 = arith.constant 1.000000e+00 : f32
    %353 = vector.broadcast %cst_77 : f32 to vector<2x32xf32>
    %354 = arith.addf %353, %352 : vector<2x32xf32>
    %355 = arith.divf %353, %354 : vector<2x32xf32>
    %356 = vector.extract_strided_slice %337 {offsets = [0, 96], sizes = [2, 32], strides = [1, 1]} : vector<2x128xf32> to vector<2x32xf32>
    %357 = math.tanh %356 : vector<2x32xf32>
    %358 = arith.mulf %343, %328 : vector<2x32xf32>
    %359 = arith.mulf %349, %357 : vector<2x32xf32>
    %360 = arith.addf %358, %359 : vector<2x32xf32>
    %361 = math.tanh %360 : vector<2x32xf32>
    %362 = arith.mulf %355, %361 : vector<2x32xf32>
    %363 = arith.negf %362 : vector<2x32xf32>
    %364 = math.exp %363 : vector<2x32xf32>
    %cst_78 = arith.constant 1.000000e+00 : f32
    %365 = vector.broadcast %cst_78 : f32 to vector<2x32xf32>
    %366 = arith.addf %365, %364 : vector<2x32xf32>
    %367 = arith.divf %365, %366 : vector<2x32xf32>
    %cst_79 = arith.constant dense<0.000000e+00> : vector<2x128xf32>
    %368 = tpu.matmul %362, %301, %cst_79 {dimension_numbers = #tpu.dot_dimension_numbers<[1], [0], [0], [1], [0, 0, 1, 1], [], []>} : vector<2x32xf32>, vector<32x128xf32>, vector<2x128xf32> -> vector<2x128xf32>
    %369 = arith.addf %285, %368 : vector<2x128xf32>
    %370 = vector.extract_strided_slice %369 {offsets = [0, 0], sizes = [2, 32], strides = [1, 1]} : vector<2x128xf32> to vector<2x32xf32>
    %371 = arith.negf %370 : vector<2x32xf32>
    %372 = math.exp %371 : vector<2x32xf32>
    %cst_80 = arith.constant 1.000000e+00 : f32
    %373 = vector.broadcast %cst_80 : f32 to vector<2x32xf32>
    %374 = arith.addf %373, %372 : vector<2x32xf32>
    %375 = arith.divf %373, %374 : vector<2x32xf32>
    %376 = vector.extract_strided_slice %369 {offsets = [0, 32], sizes = [2, 32], strides = [1, 1]} : vector<2x128xf32> to vector<2x32xf32>
    %377 = arith.negf %376 : vector<2x32xf32>
    %378 = math.exp %377 : vector<2x32xf32>
    %cst_81 = arith.constant 1.000000e+00 : f32
    %379 = vector.broadcast %cst_81 : f32 to vector<2x32xf32>
    %380 = arith.addf %379, %378 : vector<2x32xf32>
    %381 = arith.divf %379, %380 : vector<2x32xf32>
    %382 = vector.extract_strided_slice %369 {offsets = [0, 64], sizes = [2, 32], strides = [1, 1]} : vector<2x128xf32> to vector<2x32xf32>
    %383 = arith.negf %382 : vector<2x32xf32>
    %384 = math.exp %383 : vector<2x32xf32>
    %cst_82 = arith.constant 1.000000e+00 : f32
    %385 = vector.broadcast %cst_82 : f32 to vector<2x32xf32>
    %386 = arith.addf %385, %384 : vector<2x32xf32>
    %387 = arith.divf %385, %386 : vector<2x32xf32>
    %388 = vector.extract_strided_slice %369 {offsets = [0, 96], sizes = [2, 32], strides = [1, 1]} : vector<2x128xf32> to vector<2x32xf32>
    %389 = math.tanh %388 : vector<2x32xf32>
    %390 = arith.mulf %375, %360 : vector<2x32xf32>
    %391 = arith.mulf %381, %389 : vector<2x32xf32>
    %392 = arith.addf %390, %391 : vector<2x32xf32>
    %393 = math.tanh %392 : vector<2x32xf32>
    %394 = arith.mulf %387, %393 : vector<2x32xf32>
    %395 = arith.negf %394 : vector<2x32xf32>
    %396 = math.exp %395 : vector<2x32xf32>
    %cst_83 = arith.constant 1.000000e+00 : f32
    %397 = vector.broadcast %cst_83 : f32 to vector<2x32xf32>
    %398 = arith.addf %397, %396 : vector<2x32xf32>
    %399 = arith.divf %397, %398 : vector<2x32xf32>
    %cst_84 = arith.constant dense<0.000000e+00> : vector<2x128xf32>
    %400 = tpu.matmul %394, %301, %cst_84 {dimension_numbers = #tpu.dot_dimension_numbers<[1], [0], [0], [1], [0, 0, 1, 1], [], []>} : vector<2x32xf32>, vector<32x128xf32>, vector<2x128xf32> -> vector<2x128xf32>
    %401 = arith.addf %288, %400 : vector<2x128xf32>
    %402 = vector.extract_strided_slice %401 {offsets = [0, 0], sizes = [2, 32], strides = [1, 1]} : vector<2x128xf32> to vector<2x32xf32>
    %403 = arith.negf %402 : vector<2x32xf32>
    %404 = math.exp %403 : vector<2x32xf32>
    %cst_85 = arith.constant 1.000000e+00 : f32
    %405 = vector.broadcast %cst_85 : f32 to vector<2x32xf32>
    %406 = arith.addf %405, %404 : vector<2x32xf32>
    %407 = arith.divf %405, %406 : vector<2x32xf32>
    %408 = vector.extract_strided_slice %401 {offsets = [0, 32], sizes = [2, 32], strides = [1, 1]} : vector<2x128xf32> to vector<2x32xf32>
    %409 = arith.negf %408 : vector<2x32xf32>
    %410 = math.exp %409 : vector<2x32xf32>
    %cst_86 = arith.constant 1.000000e+00 : f32
    %411 = vector.broadcast %cst_86 : f32 to vector<2x32xf32>
    %412 = arith.addf %411, %410 : vector<2x32xf32>
    %413 = arith.divf %411, %412 : vector<2x32xf32>
    %414 = vector.extract_strided_slice %401 {offsets = [0, 64], sizes = [2, 32], strides = [1, 1]} : vector<2x128xf32> to vector<2x32xf32>
    %415 = arith.negf %414 : vector<2x32xf32>
    %416 = math.exp %415 : vector<2x32xf32>
    %cst_87 = arith.constant 1.000000e+00 : f32
    %417 = vector.broadcast %cst_87 : f32 to vector<2x32xf32>
    %418 = arith.addf %417, %416 : vector<2x32xf32>
    %419 = arith.divf %417, %418 : vector<2x32xf32>
    %420 = vector.extract_strided_slice %401 {offsets = [0, 96], sizes = [2, 32], strides = [1, 1]} : vector<2x128xf32> to vector<2x32xf32>
    %421 = math.tanh %420 : vector<2x32xf32>
    %422 = arith.mulf %407, %392 : vector<2x32xf32>
    %423 = arith.mulf %413, %421 : vector<2x32xf32>
    %424 = arith.addf %422, %423 : vector<2x32xf32>
    %425 = math.tanh %424 : vector<2x32xf32>
    %426 = arith.mulf %419, %425 : vector<2x32xf32>
    %427 = arith.negf %426 : vector<2x32xf32>
    %428 = math.exp %427 : vector<2x32xf32>
    %cst_88 = arith.constant 1.000000e+00 : f32
    %429 = vector.broadcast %cst_88 : f32 to vector<2x32xf32>
    %430 = arith.addf %429, %428 : vector<2x32xf32>
    %431 = arith.divf %429, %430 : vector<2x32xf32>
    %cst_89 = arith.constant dense<0.000000e+00> : vector<2x128xf32>
    %432 = tpu.matmul %426, %301, %cst_89 {dimension_numbers = #tpu.dot_dimension_numbers<[1], [0], [0], [1], [0, 0, 1, 1], [], []>} : vector<2x32xf32>, vector<32x128xf32>, vector<2x128xf32> -> vector<2x128xf32>
    %433 = arith.addf %291, %432 : vector<2x128xf32>
    %434 = vector.extract_strided_slice %433 {offsets = [0, 0], sizes = [2, 32], strides = [1, 1]} : vector<2x128xf32> to vector<2x32xf32>
    %435 = arith.negf %434 : vector<2x32xf32>
    %436 = math.exp %435 : vector<2x32xf32>
    %cst_90 = arith.constant 1.000000e+00 : f32
    %437 = vector.broadcast %cst_90 : f32 to vector<2x32xf32>
    %438 = arith.addf %437, %436 : vector<2x32xf32>
    %439 = arith.divf %437, %438 : vector<2x32xf32>
    %440 = vector.extract_strided_slice %433 {offsets = [0, 32], sizes = [2, 32], strides = [1, 1]} : vector<2x128xf32> to vector<2x32xf32>
    %441 = arith.negf %440 : vector<2x32xf32>
    %442 = math.exp %441 : vector<2x32xf32>
    %cst_91 = arith.constant 1.000000e+00 : f32
    %443 = vector.broadcast %cst_91 : f32 to vector<2x32xf32>
    %444 = arith.addf %443, %442 : vector<2x32xf32>
    %445 = arith.divf %443, %444 : vector<2x32xf32>
    %446 = vector.extract_strided_slice %433 {offsets = [0, 64], sizes = [2, 32], strides = [1, 1]} : vector<2x128xf32> to vector<2x32xf32>
    %447 = arith.negf %446 : vector<2x32xf32>
    %448 = math.exp %447 : vector<2x32xf32>
    %cst_92 = arith.constant 1.000000e+00 : f32
    %449 = vector.broadcast %cst_92 : f32 to vector<2x32xf32>
    %450 = arith.addf %449, %448 : vector<2x32xf32>
    %451 = arith.divf %449, %450 : vector<2x32xf32>
    %452 = vector.extract_strided_slice %433 {offsets = [0, 96], sizes = [2, 32], strides = [1, 1]} : vector<2x128xf32> to vector<2x32xf32>
    %453 = math.tanh %452 : vector<2x32xf32>
    %454 = arith.mulf %439, %424 : vector<2x32xf32>
    %455 = arith.mulf %445, %453 : vector<2x32xf32>
    %456 = arith.addf %454, %455 : vector<2x32xf32>
    %457 = math.tanh %456 : vector<2x32xf32>
    %458 = arith.mulf %451, %457 : vector<2x32xf32>
    %459 = arith.negf %458 : vector<2x32xf32>
    %460 = math.exp %459 : vector<2x32xf32>
    %cst_93 = arith.constant 1.000000e+00 : f32
    %461 = vector.broadcast %cst_93 : f32 to vector<2x32xf32>
    %462 = arith.addf %461, %460 : vector<2x32xf32>
    %463 = arith.divf %461, %462 : vector<2x32xf32>
    %cst_94 = arith.constant dense<0.000000e+00> : vector<2x128xf32>
    %464 = tpu.matmul %458, %301, %cst_94 {dimension_numbers = #tpu.dot_dimension_numbers<[1], [0], [0], [1], [0, 0, 1, 1], [], []>} : vector<2x32xf32>, vector<32x128xf32>, vector<2x128xf32> -> vector<2x128xf32>
    %465 = arith.addf %294, %464 : vector<2x128xf32>
    %466 = vector.extract_strided_slice %465 {offsets = [0, 0], sizes = [2, 32], strides = [1, 1]} : vector<2x128xf32> to vector<2x32xf32>
    %467 = arith.negf %466 : vector<2x32xf32>
    %468 = math.exp %467 : vector<2x32xf32>
    %cst_95 = arith.constant 1.000000e+00 : f32
    %469 = vector.broadcast %cst_95 : f32 to vector<2x32xf32>
    %470 = arith.addf %469, %468 : vector<2x32xf32>
    %471 = arith.divf %469, %470 : vector<2x32xf32>
    %472 = vector.extract_strided_slice %465 {offsets = [0, 32], sizes = [2, 32], strides = [1, 1]} : vector<2x128xf32> to vector<2x32xf32>
    %473 = arith.negf %472 : vector<2x32xf32>
    %474 = math.exp %473 : vector<2x32xf32>
    %cst_96 = arith.constant 1.000000e+00 : f32
    %475 = vector.broadcast %cst_96 : f32 to vector<2x32xf32>
    %476 = arith.addf %475, %474 : vector<2x32xf32>
    %477 = arith.divf %475, %476 : vector<2x32xf32>
    %478 = vector.extract_strided_slice %465 {offsets = [0, 64], sizes = [2, 32], strides = [1, 1]} : vector<2x128xf32> to vector<2x32xf32>
    %479 = arith.negf %478 : vector<2x32xf32>
    %480 = math.exp %479 : vector<2x32xf32>
    %cst_97 = arith.constant 1.000000e+00 : f32
    %481 = vector.broadcast %cst_97 : f32 to vector<2x32xf32>
    %482 = arith.addf %481, %480 : vector<2x32xf32>
    %483 = arith.divf %481, %482 : vector<2x32xf32>
    %484 = vector.extract_strided_slice %465 {offsets = [0, 96], sizes = [2, 32], strides = [1, 1]} : vector<2x128xf32> to vector<2x32xf32>
    %485 = math.tanh %484 : vector<2x32xf32>
    %486 = arith.mulf %471, %456 : vector<2x32xf32>
    %487 = arith.mulf %477, %485 : vector<2x32xf32>
    %488 = arith.addf %486, %487 : vector<2x32xf32>
    %489 = math.tanh %488 : vector<2x32xf32>
    %490 = arith.mulf %483, %489 : vector<2x32xf32>
    %491 = arith.negf %490 : vector<2x32xf32>
    %492 = math.exp %491 : vector<2x32xf32>
    %cst_98 = arith.constant 1.000000e+00 : f32
    %493 = vector.broadcast %cst_98 : f32 to vector<2x32xf32>
    %494 = arith.addf %493, %492 : vector<2x32xf32>
    %495 = arith.divf %493, %494 : vector<2x32xf32>
    %cst_99 = arith.constant dense<0.000000e+00> : vector<2x128xf32>
    %496 = tpu.matmul %490, %301, %cst_99 {dimension_numbers = #tpu.dot_dimension_numbers<[1], [0], [0], [1], [0, 0, 1, 1], [], []>} : vector<2x32xf32>, vector<32x128xf32>, vector<2x128xf32> -> vector<2x128xf32>
    %497 = arith.addf %297, %496 : vector<2x128xf32>
    %498 = vector.extract_strided_slice %497 {offsets = [0, 0], sizes = [2, 32], strides = [1, 1]} : vector<2x128xf32> to vector<2x32xf32>
    %499 = arith.negf %498 : vector<2x32xf32>
    %500 = math.exp %499 : vector<2x32xf32>
    %cst_100 = arith.constant 1.000000e+00 : f32
    %501 = vector.broadcast %cst_100 : f32 to vector<2x32xf32>
    %502 = arith.addf %501, %500 : vector<2x32xf32>
    %503 = arith.divf %501, %502 : vector<2x32xf32>
    %504 = vector.extract_strided_slice %497 {offsets = [0, 32], sizes = [2, 32], strides = [1, 1]} : vector<2x128xf32> to vector<2x32xf32>
    %505 = arith.negf %504 : vector<2x32xf32>
    %506 = math.exp %505 : vector<2x32xf32>
    %cst_101 = arith.constant 1.000000e+00 : f32
    %507 = vector.broadcast %cst_101 : f32 to vector<2x32xf32>
    %508 = arith.addf %507, %506 : vector<2x32xf32>
    %509 = arith.divf %507, %508 : vector<2x32xf32>
    %510 = vector.extract_strided_slice %497 {offsets = [0, 64], sizes = [2, 32], strides = [1, 1]} : vector<2x128xf32> to vector<2x32xf32>
    %511 = arith.negf %510 : vector<2x32xf32>
    %512 = math.exp %511 : vector<2x32xf32>
    %cst_102 = arith.constant 1.000000e+00 : f32
    %513 = vector.broadcast %cst_102 : f32 to vector<2x32xf32>
    %514 = arith.addf %513, %512 : vector<2x32xf32>
    %515 = arith.divf %513, %514 : vector<2x32xf32>
    %516 = vector.extract_strided_slice %497 {offsets = [0, 96], sizes = [2, 32], strides = [1, 1]} : vector<2x128xf32> to vector<2x32xf32>
    %517 = math.tanh %516 : vector<2x32xf32>
    %518 = arith.mulf %503, %488 : vector<2x32xf32>
    %519 = arith.mulf %509, %517 : vector<2x32xf32>
    %520 = arith.addf %518, %519 : vector<2x32xf32>
    %521 = math.tanh %520 : vector<2x32xf32>
    %522 = arith.mulf %515, %521 : vector<2x32xf32>
    %523 = arith.negf %522 : vector<2x32xf32>
    %524 = math.exp %523 : vector<2x32xf32>
    %cst_103 = arith.constant 1.000000e+00 : f32
    %525 = vector.broadcast %cst_103 : f32 to vector<2x32xf32>
    %526 = arith.addf %525, %524 : vector<2x32xf32>
    %527 = arith.divf %525, %526 : vector<2x32xf32>
    %cst_104 = arith.constant dense<0.000000e+00> : vector<2x128xf32>
    %528 = tpu.matmul %522, %301, %cst_104 {dimension_numbers = #tpu.dot_dimension_numbers<[1], [0], [0], [1], [0, 0, 1, 1], [], []>} : vector<2x32xf32>, vector<32x128xf32>, vector<2x128xf32> -> vector<2x128xf32>
    %529 = arith.addf %300, %528 : vector<2x128xf32>
    %530 = vector.extract_strided_slice %529 {offsets = [0, 0], sizes = [2, 32], strides = [1, 1]} : vector<2x128xf32> to vector<2x32xf32>
    %531 = arith.negf %530 : vector<2x32xf32>
    %532 = math.exp %531 : vector<2x32xf32>
    %cst_105 = arith.constant 1.000000e+00 : f32
    %533 = vector.broadcast %cst_105 : f32 to vector<2x32xf32>
    %534 = arith.addf %533, %532 : vector<2x32xf32>
    %535 = arith.divf %533, %534 : vector<2x32xf32>
    %536 = vector.extract_strided_slice %529 {offsets = [0, 32], sizes = [2, 32], strides = [1, 1]} : vector<2x128xf32> to vector<2x32xf32>
    %537 = arith.negf %536 : vector<2x32xf32>
    %538 = math.exp %537 : vector<2x32xf32>
    %cst_106 = arith.constant 1.000000e+00 : f32
    %539 = vector.broadcast %cst_106 : f32 to vector<2x32xf32>
    %540 = arith.addf %539, %538 : vector<2x32xf32>
    %541 = arith.divf %539, %540 : vector<2x32xf32>
    %542 = vector.extract_strided_slice %529 {offsets = [0, 64], sizes = [2, 32], strides = [1, 1]} : vector<2x128xf32> to vector<2x32xf32>
    %543 = arith.negf %542 : vector<2x32xf32>
    %544 = math.exp %543 : vector<2x32xf32>
    %cst_107 = arith.constant 1.000000e+00 : f32
    %545 = vector.broadcast %cst_107 : f32 to vector<2x32xf32>
    %546 = arith.addf %545, %544 : vector<2x32xf32>
    %547 = arith.divf %545, %546 : vector<2x32xf32>
    %548 = vector.extract_strided_slice %529 {offsets = [0, 96], sizes = [2, 32], strides = [1, 1]} : vector<2x128xf32> to vector<2x32xf32>
    %549 = math.tanh %548 : vector<2x32xf32>
    %550 = arith.mulf %535, %520 : vector<2x32xf32>
    %551 = arith.mulf %541, %549 : vector<2x32xf32>
    %552 = arith.addf %550, %551 : vector<2x32xf32>
    %553 = math.tanh %552 : vector<2x32xf32>
    %554 = arith.mulf %547, %553 : vector<2x32xf32>
    %555 = arith.negf %554 : vector<2x32xf32>
    %556 = math.exp %555 : vector<2x32xf32>
    %cst_108 = arith.constant 1.000000e+00 : f32
    %557 = vector.broadcast %cst_108 : f32 to vector<2x32xf32>
    %558 = arith.addf %557, %556 : vector<2x32xf32>
    %559 = arith.divf %557, %558 : vector<2x32xf32>
    %c0_109 = arith.constant 0 : index
    %c0_110 = arith.constant 0 : index
    %560 = vector.load %arg7[%c0_109, %c0_110] : memref<32x128xf32, #tpu.memory_space<vmem>>, vector<32x128xf32>
    %c0_111 = arith.constant 0 : index
    %c0_112 = arith.constant 0 : index
    %561 = vector.load %arg9[%c0_111, %c0_112] : memref<1x128xf32, #tpu.memory_space<vmem>>, vector<1x128xf32>
    %cst_113 = arith.constant dense<0.000000e+00> : vector<2x128xf32>
    %562 = tpu.matmul %335, %560, %cst_113 {dimension_numbers = #tpu.dot_dimension_numbers<[1], [0], [0], [1], [0, 0, 1, 1], [], []>} : vector<2x32xf32>, vector<32x128xf32>, vector<2x128xf32> -> vector<2x128xf32>
    %563 = vector.broadcast %561 : vector<1x128xf32> to vector<2x128xf32>
    %564 = arith.addf %562, %563 : vector<2x128xf32>
    %cst_114 = arith.constant dense<0.000000e+00> : vector<2x128xf32>
    %565 = tpu.matmul %367, %560, %cst_114 {dimension_numbers = #tpu.dot_dimension_numbers<[1], [0], [0], [1], [0, 0, 1, 1], [], []>} : vector<2x32xf32>, vector<32x128xf32>, vector<2x128xf32> -> vector<2x128xf32>
    %566 = vector.broadcast %561 : vector<1x128xf32> to vector<2x128xf32>
    %567 = arith.addf %565, %566 : vector<2x128xf32>
    %cst_115 = arith.constant dense<0.000000e+00> : vector<2x128xf32>
    %568 = tpu.matmul %399, %560, %cst_115 {dimension_numbers = #tpu.dot_dimension_numbers<[1], [0], [0], [1], [0, 0, 1, 1], [], []>} : vector<2x32xf32>, vector<32x128xf32>, vector<2x128xf32> -> vector<2x128xf32>
    %569 = vector.broadcast %561 : vector<1x128xf32> to vector<2x128xf32>
    %570 = arith.addf %568, %569 : vector<2x128xf32>
    %cst_116 = arith.constant dense<0.000000e+00> : vector<2x128xf32>
    %571 = tpu.matmul %431, %560, %cst_116 {dimension_numbers = #tpu.dot_dimension_numbers<[1], [0], [0], [1], [0, 0, 1, 1], [], []>} : vector<2x32xf32>, vector<32x128xf32>, vector<2x128xf32> -> vector<2x128xf32>
    %572 = vector.broadcast %561 : vector<1x128xf32> to vector<2x128xf32>
    %573 = arith.addf %571, %572 : vector<2x128xf32>
    %cst_117 = arith.constant dense<0.000000e+00> : vector<2x128xf32>
    %574 = tpu.matmul %463, %560, %cst_117 {dimension_numbers = #tpu.dot_dimension_numbers<[1], [0], [0], [1], [0, 0, 1, 1], [], []>} : vector<2x32xf32>, vector<32x128xf32>, vector<2x128xf32> -> vector<2x128xf32>
    %575 = vector.broadcast %561 : vector<1x128xf32> to vector<2x128xf32>
    %576 = arith.addf %574, %575 : vector<2x128xf32>
    %cst_118 = arith.constant dense<0.000000e+00> : vector<2x128xf32>
    %577 = tpu.matmul %495, %560, %cst_118 {dimension_numbers = #tpu.dot_dimension_numbers<[1], [0], [0], [1], [0, 0, 1, 1], [], []>} : vector<2x32xf32>, vector<32x128xf32>, vector<2x128xf32> -> vector<2x128xf32>
    %578 = vector.broadcast %561 : vector<1x128xf32> to vector<2x128xf32>
    %579 = arith.addf %577, %578 : vector<2x128xf32>
    %cst_119 = arith.constant dense<0.000000e+00> : vector<2x128xf32>
    %580 = tpu.matmul %527, %560, %cst_119 {dimension_numbers = #tpu.dot_dimension_numbers<[1], [0], [0], [1], [0, 0, 1, 1], [], []>} : vector<2x32xf32>, vector<32x128xf32>, vector<2x128xf32> -> vector<2x128xf32>
    %581 = vector.broadcast %561 : vector<1x128xf32> to vector<2x128xf32>
    %582 = arith.addf %580, %581 : vector<2x128xf32>
    %cst_120 = arith.constant dense<0.000000e+00> : vector<2x128xf32>
    %583 = tpu.matmul %559, %560, %cst_120 {dimension_numbers = #tpu.dot_dimension_numbers<[1], [0], [0], [1], [0, 0, 1, 1], [], []>} : vector<2x32xf32>, vector<32x128xf32>, vector<2x128xf32> -> vector<2x128xf32>
    %584 = vector.broadcast %561 : vector<1x128xf32> to vector<2x128xf32>
    %585 = arith.addf %583, %584 : vector<2x128xf32>
    %c0_121 = arith.constant 0 : index
    %c0_122 = arith.constant 0 : index
    %586 = vector.load %arg8[%c0_121, %c0_122] : memref<32x128xf32, #tpu.memory_space<vmem>>, vector<32x128xf32>
    %cst_123 = arith.constant 0.000000e+00 : f32
    %587 = vector.broadcast %cst_123 : f32 to vector<2x32xf32>
    %cst_124 = arith.constant 0.000000e+00 : f32
    %588 = vector.broadcast %cst_124 : f32 to vector<2x32xf32>
    %cst_125 = arith.constant dense<0.000000e+00> : vector<2x128xf32>
    %589 = tpu.matmul %587, %586, %cst_125 {dimension_numbers = #tpu.dot_dimension_numbers<[1], [0], [0], [1], [0, 0, 1, 1], [], []>} : vector<2x32xf32>, vector<32x128xf32>, vector<2x128xf32> -> vector<2x128xf32>
    %590 = arith.addf %564, %589 : vector<2x128xf32>
    %591 = vector.extract_strided_slice %590 {offsets = [0, 0], sizes = [2, 32], strides = [1, 1]} : vector<2x128xf32> to vector<2x32xf32>
    %592 = arith.negf %591 : vector<2x32xf32>
    %593 = math.exp %592 : vector<2x32xf32>
    %cst_126 = arith.constant 1.000000e+00 : f32
    %594 = vector.broadcast %cst_126 : f32 to vector<2x32xf32>
    %595 = arith.addf %594, %593 : vector<2x32xf32>
    %596 = arith.divf %594, %595 : vector<2x32xf32>
    %597 = vector.extract_strided_slice %590 {offsets = [0, 32], sizes = [2, 32], strides = [1, 1]} : vector<2x128xf32> to vector<2x32xf32>
    %598 = arith.negf %597 : vector<2x32xf32>
    %599 = math.exp %598 : vector<2x32xf32>
    %cst_127 = arith.constant 1.000000e+00 : f32
    %600 = vector.broadcast %cst_127 : f32 to vector<2x32xf32>
    %601 = arith.addf %600, %599 : vector<2x32xf32>
    %602 = arith.divf %600, %601 : vector<2x32xf32>
    %603 = vector.extract_strided_slice %590 {offsets = [0, 64], sizes = [2, 32], strides = [1, 1]} : vector<2x128xf32> to vector<2x32xf32>
    %604 = arith.negf %603 : vector<2x32xf32>
    %605 = math.exp %604 : vector<2x32xf32>
    %cst_128 = arith.constant 1.000000e+00 : f32
    %606 = vector.broadcast %cst_128 : f32 to vector<2x32xf32>
    %607 = arith.addf %606, %605 : vector<2x32xf32>
    %608 = arith.divf %606, %607 : vector<2x32xf32>
    %609 = vector.extract_strided_slice %590 {offsets = [0, 96], sizes = [2, 32], strides = [1, 1]} : vector<2x128xf32> to vector<2x32xf32>
    %610 = math.tanh %609 : vector<2x32xf32>
    %611 = arith.mulf %596, %588 : vector<2x32xf32>
    %612 = arith.mulf %602, %610 : vector<2x32xf32>
    %613 = arith.addf %611, %612 : vector<2x32xf32>
    %614 = math.tanh %613 : vector<2x32xf32>
    %615 = arith.mulf %608, %614 : vector<2x32xf32>
    %616 = arith.negf %615 : vector<2x32xf32>
    %617 = math.exp %616 : vector<2x32xf32>
    %cst_129 = arith.constant 1.000000e+00 : f32
    %618 = vector.broadcast %cst_129 : f32 to vector<2x32xf32>
    %619 = arith.addf %618, %617 : vector<2x32xf32>
    %620 = arith.divf %618, %619 : vector<2x32xf32>
    %cst_130 = arith.constant dense<0.000000e+00> : vector<2x128xf32>
    %621 = tpu.matmul %615, %586, %cst_130 {dimension_numbers = #tpu.dot_dimension_numbers<[1], [0], [0], [1], [0, 0, 1, 1], [], []>} : vector<2x32xf32>, vector<32x128xf32>, vector<2x128xf32> -> vector<2x128xf32>
    %622 = arith.addf %567, %621 : vector<2x128xf32>
    %623 = vector.extract_strided_slice %622 {offsets = [0, 0], sizes = [2, 32], strides = [1, 1]} : vector<2x128xf32> to vector<2x32xf32>
    %624 = arith.negf %623 : vector<2x32xf32>
    %625 = math.exp %624 : vector<2x32xf32>
    %cst_131 = arith.constant 1.000000e+00 : f32
    %626 = vector.broadcast %cst_131 : f32 to vector<2x32xf32>
    %627 = arith.addf %626, %625 : vector<2x32xf32>
    %628 = arith.divf %626, %627 : vector<2x32xf32>
    %629 = vector.extract_strided_slice %622 {offsets = [0, 32], sizes = [2, 32], strides = [1, 1]} : vector<2x128xf32> to vector<2x32xf32>
    %630 = arith.negf %629 : vector<2x32xf32>
    %631 = math.exp %630 : vector<2x32xf32>
    %cst_132 = arith.constant 1.000000e+00 : f32
    %632 = vector.broadcast %cst_132 : f32 to vector<2x32xf32>
    %633 = arith.addf %632, %631 : vector<2x32xf32>
    %634 = arith.divf %632, %633 : vector<2x32xf32>
    %635 = vector.extract_strided_slice %622 {offsets = [0, 64], sizes = [2, 32], strides = [1, 1]} : vector<2x128xf32> to vector<2x32xf32>
    %636 = arith.negf %635 : vector<2x32xf32>
    %637 = math.exp %636 : vector<2x32xf32>
    %cst_133 = arith.constant 1.000000e+00 : f32
    %638 = vector.broadcast %cst_133 : f32 to vector<2x32xf32>
    %639 = arith.addf %638, %637 : vector<2x32xf32>
    %640 = arith.divf %638, %639 : vector<2x32xf32>
    %641 = vector.extract_strided_slice %622 {offsets = [0, 96], sizes = [2, 32], strides = [1, 1]} : vector<2x128xf32> to vector<2x32xf32>
    %642 = math.tanh %641 : vector<2x32xf32>
    %643 = arith.mulf %628, %613 : vector<2x32xf32>
    %644 = arith.mulf %634, %642 : vector<2x32xf32>
    %645 = arith.addf %643, %644 : vector<2x32xf32>
    %646 = math.tanh %645 : vector<2x32xf32>
    %647 = arith.mulf %640, %646 : vector<2x32xf32>
    %648 = arith.negf %647 : vector<2x32xf32>
    %649 = math.exp %648 : vector<2x32xf32>
    %cst_134 = arith.constant 1.000000e+00 : f32
    %650 = vector.broadcast %cst_134 : f32 to vector<2x32xf32>
    %651 = arith.addf %650, %649 : vector<2x32xf32>
    %652 = arith.divf %650, %651 : vector<2x32xf32>
    %cst_135 = arith.constant dense<0.000000e+00> : vector<2x128xf32>
    %653 = tpu.matmul %647, %586, %cst_135 {dimension_numbers = #tpu.dot_dimension_numbers<[1], [0], [0], [1], [0, 0, 1, 1], [], []>} : vector<2x32xf32>, vector<32x128xf32>, vector<2x128xf32> -> vector<2x128xf32>
    %654 = arith.addf %570, %653 : vector<2x128xf32>
    %655 = vector.extract_strided_slice %654 {offsets = [0, 0], sizes = [2, 32], strides = [1, 1]} : vector<2x128xf32> to vector<2x32xf32>
    %656 = arith.negf %655 : vector<2x32xf32>
    %657 = math.exp %656 : vector<2x32xf32>
    %cst_136 = arith.constant 1.000000e+00 : f32
    %658 = vector.broadcast %cst_136 : f32 to vector<2x32xf32>
    %659 = arith.addf %658, %657 : vector<2x32xf32>
    %660 = arith.divf %658, %659 : vector<2x32xf32>
    %661 = vector.extract_strided_slice %654 {offsets = [0, 32], sizes = [2, 32], strides = [1, 1]} : vector<2x128xf32> to vector<2x32xf32>
    %662 = arith.negf %661 : vector<2x32xf32>
    %663 = math.exp %662 : vector<2x32xf32>
    %cst_137 = arith.constant 1.000000e+00 : f32
    %664 = vector.broadcast %cst_137 : f32 to vector<2x32xf32>
    %665 = arith.addf %664, %663 : vector<2x32xf32>
    %666 = arith.divf %664, %665 : vector<2x32xf32>
    %667 = vector.extract_strided_slice %654 {offsets = [0, 64], sizes = [2, 32], strides = [1, 1]} : vector<2x128xf32> to vector<2x32xf32>
    %668 = arith.negf %667 : vector<2x32xf32>
    %669 = math.exp %668 : vector<2x32xf32>
    %cst_138 = arith.constant 1.000000e+00 : f32
    %670 = vector.broadcast %cst_138 : f32 to vector<2x32xf32>
    %671 = arith.addf %670, %669 : vector<2x32xf32>
    %672 = arith.divf %670, %671 : vector<2x32xf32>
    %673 = vector.extract_strided_slice %654 {offsets = [0, 96], sizes = [2, 32], strides = [1, 1]} : vector<2x128xf32> to vector<2x32xf32>
    %674 = math.tanh %673 : vector<2x32xf32>
    %675 = arith.mulf %660, %645 : vector<2x32xf32>
    %676 = arith.mulf %666, %674 : vector<2x32xf32>
    %677 = arith.addf %675, %676 : vector<2x32xf32>
    %678 = math.tanh %677 : vector<2x32xf32>
    %679 = arith.mulf %672, %678 : vector<2x32xf32>
    %680 = arith.negf %679 : vector<2x32xf32>
    %681 = math.exp %680 : vector<2x32xf32>
    %cst_139 = arith.constant 1.000000e+00 : f32
    %682 = vector.broadcast %cst_139 : f32 to vector<2x32xf32>
    %683 = arith.addf %682, %681 : vector<2x32xf32>
    %684 = arith.divf %682, %683 : vector<2x32xf32>
    %cst_140 = arith.constant dense<0.000000e+00> : vector<2x128xf32>
    %685 = tpu.matmul %679, %586, %cst_140 {dimension_numbers = #tpu.dot_dimension_numbers<[1], [0], [0], [1], [0, 0, 1, 1], [], []>} : vector<2x32xf32>, vector<32x128xf32>, vector<2x128xf32> -> vector<2x128xf32>
    %686 = arith.addf %573, %685 : vector<2x128xf32>
    %687 = vector.extract_strided_slice %686 {offsets = [0, 0], sizes = [2, 32], strides = [1, 1]} : vector<2x128xf32> to vector<2x32xf32>
    %688 = arith.negf %687 : vector<2x32xf32>
    %689 = math.exp %688 : vector<2x32xf32>
    %cst_141 = arith.constant 1.000000e+00 : f32
    %690 = vector.broadcast %cst_141 : f32 to vector<2x32xf32>
    %691 = arith.addf %690, %689 : vector<2x32xf32>
    %692 = arith.divf %690, %691 : vector<2x32xf32>
    %693 = vector.extract_strided_slice %686 {offsets = [0, 32], sizes = [2, 32], strides = [1, 1]} : vector<2x128xf32> to vector<2x32xf32>
    %694 = arith.negf %693 : vector<2x32xf32>
    %695 = math.exp %694 : vector<2x32xf32>
    %cst_142 = arith.constant 1.000000e+00 : f32
    %696 = vector.broadcast %cst_142 : f32 to vector<2x32xf32>
    %697 = arith.addf %696, %695 : vector<2x32xf32>
    %698 = arith.divf %696, %697 : vector<2x32xf32>
    %699 = vector.extract_strided_slice %686 {offsets = [0, 64], sizes = [2, 32], strides = [1, 1]} : vector<2x128xf32> to vector<2x32xf32>
    %700 = arith.negf %699 : vector<2x32xf32>
    %701 = math.exp %700 : vector<2x32xf32>
    %cst_143 = arith.constant 1.000000e+00 : f32
    %702 = vector.broadcast %cst_143 : f32 to vector<2x32xf32>
    %703 = arith.addf %702, %701 : vector<2x32xf32>
    %704 = arith.divf %702, %703 : vector<2x32xf32>
    %705 = vector.extract_strided_slice %686 {offsets = [0, 96], sizes = [2, 32], strides = [1, 1]} : vector<2x128xf32> to vector<2x32xf32>
    %706 = math.tanh %705 : vector<2x32xf32>
    %707 = arith.mulf %692, %677 : vector<2x32xf32>
    %708 = arith.mulf %698, %706 : vector<2x32xf32>
    %709 = arith.addf %707, %708 : vector<2x32xf32>
    %710 = math.tanh %709 : vector<2x32xf32>
    %711 = arith.mulf %704, %710 : vector<2x32xf32>
    %712 = arith.negf %711 : vector<2x32xf32>
    %713 = math.exp %712 : vector<2x32xf32>
    %cst_144 = arith.constant 1.000000e+00 : f32
    %714 = vector.broadcast %cst_144 : f32 to vector<2x32xf32>
    %715 = arith.addf %714, %713 : vector<2x32xf32>
    %716 = arith.divf %714, %715 : vector<2x32xf32>
    %cst_145 = arith.constant dense<0.000000e+00> : vector<2x128xf32>
    %717 = tpu.matmul %711, %586, %cst_145 {dimension_numbers = #tpu.dot_dimension_numbers<[1], [0], [0], [1], [0, 0, 1, 1], [], []>} : vector<2x32xf32>, vector<32x128xf32>, vector<2x128xf32> -> vector<2x128xf32>
    %718 = arith.addf %576, %717 : vector<2x128xf32>
    %719 = vector.extract_strided_slice %718 {offsets = [0, 0], sizes = [2, 32], strides = [1, 1]} : vector<2x128xf32> to vector<2x32xf32>
    %720 = arith.negf %719 : vector<2x32xf32>
    %721 = math.exp %720 : vector<2x32xf32>
    %cst_146 = arith.constant 1.000000e+00 : f32
    %722 = vector.broadcast %cst_146 : f32 to vector<2x32xf32>
    %723 = arith.addf %722, %721 : vector<2x32xf32>
    %724 = arith.divf %722, %723 : vector<2x32xf32>
    %725 = vector.extract_strided_slice %718 {offsets = [0, 32], sizes = [2, 32], strides = [1, 1]} : vector<2x128xf32> to vector<2x32xf32>
    %726 = arith.negf %725 : vector<2x32xf32>
    %727 = math.exp %726 : vector<2x32xf32>
    %cst_147 = arith.constant 1.000000e+00 : f32
    %728 = vector.broadcast %cst_147 : f32 to vector<2x32xf32>
    %729 = arith.addf %728, %727 : vector<2x32xf32>
    %730 = arith.divf %728, %729 : vector<2x32xf32>
    %731 = vector.extract_strided_slice %718 {offsets = [0, 64], sizes = [2, 32], strides = [1, 1]} : vector<2x128xf32> to vector<2x32xf32>
    %732 = arith.negf %731 : vector<2x32xf32>
    %733 = math.exp %732 : vector<2x32xf32>
    %cst_148 = arith.constant 1.000000e+00 : f32
    %734 = vector.broadcast %cst_148 : f32 to vector<2x32xf32>
    %735 = arith.addf %734, %733 : vector<2x32xf32>
    %736 = arith.divf %734, %735 : vector<2x32xf32>
    %737 = vector.extract_strided_slice %718 {offsets = [0, 96], sizes = [2, 32], strides = [1, 1]} : vector<2x128xf32> to vector<2x32xf32>
    %738 = math.tanh %737 : vector<2x32xf32>
    %739 = arith.mulf %724, %709 : vector<2x32xf32>
    %740 = arith.mulf %730, %738 : vector<2x32xf32>
    %741 = arith.addf %739, %740 : vector<2x32xf32>
    %742 = math.tanh %741 : vector<2x32xf32>
    %743 = arith.mulf %736, %742 : vector<2x32xf32>
    %744 = arith.negf %743 : vector<2x32xf32>
    %745 = math.exp %744 : vector<2x32xf32>
    %cst_149 = arith.constant 1.000000e+00 : f32
    %746 = vector.broadcast %cst_149 : f32 to vector<2x32xf32>
    %747 = arith.addf %746, %745 : vector<2x32xf32>
    %748 = arith.divf %746, %747 : vector<2x32xf32>
    %cst_150 = arith.constant dense<0.000000e+00> : vector<2x128xf32>
    %749 = tpu.matmul %743, %586, %cst_150 {dimension_numbers = #tpu.dot_dimension_numbers<[1], [0], [0], [1], [0, 0, 1, 1], [], []>} : vector<2x32xf32>, vector<32x128xf32>, vector<2x128xf32> -> vector<2x128xf32>
    %750 = arith.addf %579, %749 : vector<2x128xf32>
    %751 = vector.extract_strided_slice %750 {offsets = [0, 0], sizes = [2, 32], strides = [1, 1]} : vector<2x128xf32> to vector<2x32xf32>
    %752 = arith.negf %751 : vector<2x32xf32>
    %753 = math.exp %752 : vector<2x32xf32>
    %cst_151 = arith.constant 1.000000e+00 : f32
    %754 = vector.broadcast %cst_151 : f32 to vector<2x32xf32>
    %755 = arith.addf %754, %753 : vector<2x32xf32>
    %756 = arith.divf %754, %755 : vector<2x32xf32>
    %757 = vector.extract_strided_slice %750 {offsets = [0, 32], sizes = [2, 32], strides = [1, 1]} : vector<2x128xf32> to vector<2x32xf32>
    %758 = arith.negf %757 : vector<2x32xf32>
    %759 = math.exp %758 : vector<2x32xf32>
    %cst_152 = arith.constant 1.000000e+00 : f32
    %760 = vector.broadcast %cst_152 : f32 to vector<2x32xf32>
    %761 = arith.addf %760, %759 : vector<2x32xf32>
    %762 = arith.divf %760, %761 : vector<2x32xf32>
    %763 = vector.extract_strided_slice %750 {offsets = [0, 64], sizes = [2, 32], strides = [1, 1]} : vector<2x128xf32> to vector<2x32xf32>
    %764 = arith.negf %763 : vector<2x32xf32>
    %765 = math.exp %764 : vector<2x32xf32>
    %cst_153 = arith.constant 1.000000e+00 : f32
    %766 = vector.broadcast %cst_153 : f32 to vector<2x32xf32>
    %767 = arith.addf %766, %765 : vector<2x32xf32>
    %768 = arith.divf %766, %767 : vector<2x32xf32>
    %769 = vector.extract_strided_slice %750 {offsets = [0, 96], sizes = [2, 32], strides = [1, 1]} : vector<2x128xf32> to vector<2x32xf32>
    %770 = math.tanh %769 : vector<2x32xf32>
    %771 = arith.mulf %756, %741 : vector<2x32xf32>
    %772 = arith.mulf %762, %770 : vector<2x32xf32>
    %773 = arith.addf %771, %772 : vector<2x32xf32>
    %774 = math.tanh %773 : vector<2x32xf32>
    %775 = arith.mulf %768, %774 : vector<2x32xf32>
    %776 = arith.negf %775 : vector<2x32xf32>
    %777 = math.exp %776 : vector<2x32xf32>
    %cst_154 = arith.constant 1.000000e+00 : f32
    %778 = vector.broadcast %cst_154 : f32 to vector<2x32xf32>
    %779 = arith.addf %778, %777 : vector<2x32xf32>
    %780 = arith.divf %778, %779 : vector<2x32xf32>
    %cst_155 = arith.constant dense<0.000000e+00> : vector<2x128xf32>
    %781 = tpu.matmul %775, %586, %cst_155 {dimension_numbers = #tpu.dot_dimension_numbers<[1], [0], [0], [1], [0, 0, 1, 1], [], []>} : vector<2x32xf32>, vector<32x128xf32>, vector<2x128xf32> -> vector<2x128xf32>
    %782 = arith.addf %582, %781 : vector<2x128xf32>
    %783 = vector.extract_strided_slice %782 {offsets = [0, 0], sizes = [2, 32], strides = [1, 1]} : vector<2x128xf32> to vector<2x32xf32>
    %784 = arith.negf %783 : vector<2x32xf32>
    %785 = math.exp %784 : vector<2x32xf32>
    %cst_156 = arith.constant 1.000000e+00 : f32
    %786 = vector.broadcast %cst_156 : f32 to vector<2x32xf32>
    %787 = arith.addf %786, %785 : vector<2x32xf32>
    %788 = arith.divf %786, %787 : vector<2x32xf32>
    %789 = vector.extract_strided_slice %782 {offsets = [0, 32], sizes = [2, 32], strides = [1, 1]} : vector<2x128xf32> to vector<2x32xf32>
    %790 = arith.negf %789 : vector<2x32xf32>
    %791 = math.exp %790 : vector<2x32xf32>
    %cst_157 = arith.constant 1.000000e+00 : f32
    %792 = vector.broadcast %cst_157 : f32 to vector<2x32xf32>
    %793 = arith.addf %792, %791 : vector<2x32xf32>
    %794 = arith.divf %792, %793 : vector<2x32xf32>
    %795 = vector.extract_strided_slice %782 {offsets = [0, 64], sizes = [2, 32], strides = [1, 1]} : vector<2x128xf32> to vector<2x32xf32>
    %796 = arith.negf %795 : vector<2x32xf32>
    %797 = math.exp %796 : vector<2x32xf32>
    %cst_158 = arith.constant 1.000000e+00 : f32
    %798 = vector.broadcast %cst_158 : f32 to vector<2x32xf32>
    %799 = arith.addf %798, %797 : vector<2x32xf32>
    %800 = arith.divf %798, %799 : vector<2x32xf32>
    %801 = vector.extract_strided_slice %782 {offsets = [0, 96], sizes = [2, 32], strides = [1, 1]} : vector<2x128xf32> to vector<2x32xf32>
    %802 = math.tanh %801 : vector<2x32xf32>
    %803 = arith.mulf %788, %773 : vector<2x32xf32>
    %804 = arith.mulf %794, %802 : vector<2x32xf32>
    %805 = arith.addf %803, %804 : vector<2x32xf32>
    %806 = math.tanh %805 : vector<2x32xf32>
    %807 = arith.mulf %800, %806 : vector<2x32xf32>
    %808 = arith.negf %807 : vector<2x32xf32>
    %809 = math.exp %808 : vector<2x32xf32>
    %cst_159 = arith.constant 1.000000e+00 : f32
    %810 = vector.broadcast %cst_159 : f32 to vector<2x32xf32>
    %811 = arith.addf %810, %809 : vector<2x32xf32>
    %812 = arith.divf %810, %811 : vector<2x32xf32>
    %cst_160 = arith.constant dense<0.000000e+00> : vector<2x128xf32>
    %813 = tpu.matmul %807, %586, %cst_160 {dimension_numbers = #tpu.dot_dimension_numbers<[1], [0], [0], [1], [0, 0, 1, 1], [], []>} : vector<2x32xf32>, vector<32x128xf32>, vector<2x128xf32> -> vector<2x128xf32>
    %814 = arith.addf %585, %813 : vector<2x128xf32>
    %815 = vector.extract_strided_slice %814 {offsets = [0, 0], sizes = [2, 32], strides = [1, 1]} : vector<2x128xf32> to vector<2x32xf32>
    %816 = arith.negf %815 : vector<2x32xf32>
    %817 = math.exp %816 : vector<2x32xf32>
    %cst_161 = arith.constant 1.000000e+00 : f32
    %818 = vector.broadcast %cst_161 : f32 to vector<2x32xf32>
    %819 = arith.addf %818, %817 : vector<2x32xf32>
    %820 = arith.divf %818, %819 : vector<2x32xf32>
    %821 = vector.extract_strided_slice %814 {offsets = [0, 32], sizes = [2, 32], strides = [1, 1]} : vector<2x128xf32> to vector<2x32xf32>
    %822 = arith.negf %821 : vector<2x32xf32>
    %823 = math.exp %822 : vector<2x32xf32>
    %cst_162 = arith.constant 1.000000e+00 : f32
    %824 = vector.broadcast %cst_162 : f32 to vector<2x32xf32>
    %825 = arith.addf %824, %823 : vector<2x32xf32>
    %826 = arith.divf %824, %825 : vector<2x32xf32>
    %827 = vector.extract_strided_slice %814 {offsets = [0, 64], sizes = [2, 32], strides = [1, 1]} : vector<2x128xf32> to vector<2x32xf32>
    %828 = arith.negf %827 : vector<2x32xf32>
    %829 = math.exp %828 : vector<2x32xf32>
    %cst_163 = arith.constant 1.000000e+00 : f32
    %830 = vector.broadcast %cst_163 : f32 to vector<2x32xf32>
    %831 = arith.addf %830, %829 : vector<2x32xf32>
    %832 = arith.divf %830, %831 : vector<2x32xf32>
    %833 = vector.extract_strided_slice %814 {offsets = [0, 96], sizes = [2, 32], strides = [1, 1]} : vector<2x128xf32> to vector<2x32xf32>
    %834 = math.tanh %833 : vector<2x32xf32>
    %835 = arith.mulf %820, %805 : vector<2x32xf32>
    %836 = arith.mulf %826, %834 : vector<2x32xf32>
    %837 = arith.addf %835, %836 : vector<2x32xf32>
    %838 = math.tanh %837 : vector<2x32xf32>
    %839 = arith.mulf %832, %838 : vector<2x32xf32>
    %840 = arith.negf %839 : vector<2x32xf32>
    %841 = math.exp %840 : vector<2x32xf32>
    %cst_164 = arith.constant 1.000000e+00 : f32
    %842 = vector.broadcast %cst_164 : f32 to vector<2x32xf32>
    %843 = arith.addf %842, %841 : vector<2x32xf32>
    %844 = arith.divf %842, %843 : vector<2x32xf32>
    %845 = tpu.concatenate %620, %652, %684, %716, %748, %780, %812, %844 in 1 : vector<2x32xf32>, vector<2x32xf32>, vector<2x32xf32>, vector<2x32xf32>, vector<2x32xf32>, vector<2x32xf32>, vector<2x32xf32>, vector<2x32xf32> -> vector<2x256xf32>
    %cst_165 = arith.constant dense<0.000000e+00> : vector<2x4xf32>
    %846 = tpu.matmul %845, %0, %cst_165 {dimension_numbers = #tpu.dot_dimension_numbers<[1], [0], [0], [1], [0, 0, 1, 1], [], []>} : vector<2x256xf32>, vector<256x4xf32>, vector<2x4xf32> -> vector<2x4xf32>
    %847 = vector.broadcast %1 : vector<1x4xf32> to vector<2x4xf32>
    %848 = arith.addf %846, %847 : vector<2x4xf32>
    %849 = arith.negf %848 : vector<2x4xf32>
    %850 = math.exp %849 : vector<2x4xf32>
    %cst_166 = arith.constant 1.000000e+00 : f32
    %851 = vector.broadcast %cst_166 : f32 to vector<2x4xf32>
    %852 = arith.addf %851, %850 : vector<2x4xf32>
    %853 = arith.divf %851, %852 : vector<2x4xf32>
    %c0_167 = arith.constant 0 : index
    %c0_168 = arith.constant 0 : index
    %854 = vector.load %arg12[%c0_167, %c0_168] : memref<2x4xf32, #tpu.memory_space<vmem>>, vector<2x4xf32>
    tpu.vector_store %arg12[%c0_167, %c0_168], %853 {strides = array<i32>} : memref<2x4xf32, #tpu.memory_space<vmem>>, vector<2x4xf32>,
    return
  }
}

</mosaic_0001>

<llo_original>
// kernel: custom_lstm_forward.1
$region0: #{custom_lstm_forward.1}
  #allocation0 [shape = 'u32[]', space=smem, size = 0x4, offset = 0x4, fixed_abs, tag = 'smem constant byte address 0x4 - core index']
  #allocation1 [shape = 'u32[144,128]{1,0:T(1,128)}', space=vmem, size = 0x12000, scoped, tag = 'internal scratch']
  %s0 = inlined_call_operand.vmem [shape: f32[16,8], index: 0, kind: input, shape index: {}]
  %s1 = inlined_call_operand.vmem [shape: f32[8,128], index: 1, kind: input, shape index: {}]
  %s2 = inlined_call_operand.vmem [shape: f32[32,128], index: 2, kind: input, shape index: {}]
  %s3 = inlined_call_operand.vmem [shape: f32[1,128], index: 3, kind: input, shape index: {}]
  %s4 = inlined_call_operand.vmem [shape: f32[32,128], index: 4, kind: input, shape index: {}]
  %s5 = inlined_call_operand.vmem [shape: f32[32,128], index: 5, kind: input, shape index: {}]
  %s6 = inlined_call_operand.vmem [shape: f32[1,128], index: 6, kind: input, shape index: {}]
  %s7 = inlined_call_operand.vmem [shape: f32[32,128], index: 7, kind: input, shape index: {}]
  %s8 = inlined_call_operand.vmem [shape: f32[32,128], index: 8, kind: input, shape index: {}]
  %s9 = inlined_call_operand.vmem [shape: f32[1,128], index: 9, kind: input, shape index: {}]
  %s10 = inlined_call_operand.vmem [shape: f32[256,4], index: 10, kind: input, shape index: {}]
  %s11 = inlined_call_operand.vmem [shape: f32[1,4], index: 11, kind: input, shape index: {}]
  %s12 = inlined_call_operand.hbm [shape: f32[2,4], index: 12, kind: output, shape index: {}]
  %s13 = sld [smem:[#allocation0]]
  $region58: #{custom_lstm_forward.1} parent=0
    _
  %s15 = ssub.s32 1, %s13
  %s16 = scalar_select 0, %s15, %s13
  $region1: #{custom_lstm_forward.1} parent=0
    #allocation2 [shape = 'u8[1024]{0}', space=vmem, size = 0x400, scoped, tag = 'output window, operand 0, single buffered']
    #allocation3 [shape = 's32[1]{0}', space=sflag, size = 0x4, scoped, tag = 'scoped memory for custom_lstm_forward.1']
    %17 = vsyncpa [#allocation3], 0
    // Predicated region
    $region2: #{custom_lstm_forward.1} parent=1 // pred_check
      _
    $region3: #{custom_lstm_forward.1} parent=1 // pred_check_branch
      %19 = sbr.rel (0) target = $region5
    $region4: #{custom_lstm_forward.1} parent=1 // pred_region
      _
    $region5: #{custom_lstm_forward.1} parent=1 // pred_fallthru
      _
    // Predicated region
    $region6: #{custom_lstm_forward.1} parent=1 // pred_check
      _
    $region7: #{custom_lstm_forward.1} parent=1 // pred_check_branch
      %21 = sbr.rel (0) target = $region9
    $region8: #{custom_lstm_forward.1} parent=1 // pred_region
      _
    $region9: #{custom_lstm_forward.1} parent=1 // pred_fallthru
      _
    // Predicated region
    $region10: #{custom_lstm_forward.1} parent=1 // pred_check
      _
    $region11: #{custom_lstm_forward.1} parent=1 // pred_check_branch
      %23 = sbr.rel (0) target = $region13
    $region12: #{custom_lstm_forward.1} parent=1 // pred_region
      _
    $region13: #{custom_lstm_forward.1} parent=1 // pred_fallthru
      _
    // Predicated region
    $region14: #{custom_lstm_forward.1} parent=1 // pred_check
      _
    $region15: #{custom_lstm_forward.1} parent=1 // pred_check_branch
      %25 = sbr.rel (0) target = $region17
    $region16: #{custom_lstm_forward.1} parent=1 // pred_region
      _
    $region17: #{custom_lstm_forward.1} parent=1 // pred_fallthru
      _
    // Predicated region
    $region18: #{custom_lstm_forward.1} parent=1 // pred_check
      _
    $region19: #{custom_lstm_forward.1} parent=1 // pred_check_branch
      %27 = sbr.rel (0) target = $region21
    $region20: #{custom_lstm_forward.1} parent=1 // pred_region
      _
    $region21: #{custom_lstm_forward.1} parent=1 // pred_fallthru
      _
    // Predicated region
    $region22: #{custom_lstm_forward.1} parent=1 // pred_check
      _
    $region23: #{custom_lstm_forward.1} parent=1 // pred_check_branch
      %29 = sbr.rel (0) target = $region25
    $region24: #{custom_lstm_forward.1} parent=1 // pred_region
      _
    $region25: #{custom_lstm_forward.1} parent=1 // pred_fallthru
      _
    // Predicated region
    $region26: #{custom_lstm_forward.1} parent=1 // pred_check
      _
    $region27: #{custom_lstm_forward.1} parent=1 // pred_check_branch
      %31 = sbr.rel (0) target = $region29
    $region28: #{custom_lstm_forward.1} parent=1 // pred_region
      _
    $region29: #{custom_lstm_forward.1} parent=1 // pred_fallthru
      _
    // Predicated region
    $region30: #{custom_lstm_forward.1} parent=1 // pred_check
      _
    $region31: #{custom_lstm_forward.1} parent=1 // pred_check_branch
      %33 = sbr.rel (0) target = $region33
    $region32: #{custom_lstm_forward.1} parent=1 // pred_region
      _
    $region33: #{custom_lstm_forward.1} parent=1 // pred_fallthru
      _
    // Predicated region
    $region34: #{custom_lstm_forward.1} parent=1 // pred_check
      _
    $region35: #{custom_lstm_forward.1} parent=1 // pred_check_branch
      %35 = sbr.rel (0) target = $region37
    $region36: #{custom_lstm_forward.1} parent=1 // pred_region
      _
    $region37: #{custom_lstm_forward.1} parent=1 // pred_fallthru
      _
    // Predicated region
    $region38: #{custom_lstm_forward.1} parent=1 // pred_check
      _
    $region39: #{custom_lstm_forward.1} parent=1 // pred_check_branch
      %37 = sbr.rel (0) target = $region41
    $region40: #{custom_lstm_forward.1} parent=1 // pred_region
      _
    $region41: #{custom_lstm_forward.1} parent=1 // pred_fallthru
      _
    // Predicated region
    $region42: #{custom_lstm_forward.1} parent=1 // pred_check
      _
    $region43: #{custom_lstm_forward.1} parent=1 // pred_check_branch
      %39 = sbr.rel (0) target = $region45
    $region44: #{custom_lstm_forward.1} parent=1 // pred_region
      _
    $region45: #{custom_lstm_forward.1} parent=1 // pred_fallthru
      _
    // Predicated region
    $region46: #{custom_lstm_forward.1} parent=1 // pred_check
      _
    $region47: #{custom_lstm_forward.1} parent=1 // pred_check_branch
      %41 = sbr.rel (0) target = $region49
    $region48: #{custom_lstm_forward.1} parent=1 // pred_region
      _
    $region49: #{custom_lstm_forward.1} parent=1 // pred_fallthru
      _
    %v42 = vld [vmem:[%s10] sm:$0xff]
    %v43 = vld [vmem:[%s10 + $0x8] sm:$0xff]
    %v44 = vld [vmem:[%s10 + $0x10] sm:$0xff]
    %v45 = vld [vmem:[%s10 + $0x18] sm:$0xff]
    %v46 = vld [vmem:[%s10 + $0x20] sm:$0xff]
    %v47 = vld [vmem:[%s10 + $0x28] sm:$0xff]
    %v48 = vld [vmem:[%s10 + $0x30] sm:$0xff]
    %v49 = vld [vmem:[%s10 + $0x38] sm:$0xff]
    %v50 = vld [vmem:[%s10 + $0x40] sm:$0xff]
    %v51 = vld [vmem:[%s10 + $0x48] sm:$0xff]
    %v52 = vld [vmem:[%s10 + $0x50] sm:$0xff]
    %v53 = vld [vmem:[%s10 + $0x58] sm:$0xff]
    %v54 = vld [vmem:[%s10 + $0x60] sm:$0xff]
    %v55 = vld [vmem:[%s10 + $0x68] sm:$0xff]
    %v56 = vld [vmem:[%s10 + $0x70] sm:$0xff]
    %v57 = vld [vmem:[%s10 + $0x78] sm:$0xff]
    %v58 = vld [vmem:[%s10 + $0x80] sm:$0xff]
    %v59 = vld [vmem:[%s10 + $0x88] sm:$0xff]
    %v60 = vld [vmem:[%s10 + $0x90] sm:$0xff]
    %v61 = vld [vmem:[%s10 + $0x98] sm:$0xff]
    %v62 = vld [vmem:[%s10 + $0xa0] sm:$0xff]
    %v63 = vld [vmem:[%s10 + $0xa8] sm:$0xff]
    %v64 = vld [vmem:[%s10 + $0xb0] sm:$0xff]
    %v65 = vld [vmem:[%s10 + $0xb8] sm:$0xff]
    %v66 = vld [vmem:[%s10 + $0xc0] sm:$0xff]
    %v67 = vld [vmem:[%s10 + $0xc8] sm:$0xff]
    %v68 = vld [vmem:[%s10 + $0xd0] sm:$0xff]
    %v69 = vld [vmem:[%s10 + $0xd8] sm:$0xff]
    %v70 = vld [vmem:[%s10 + $0xe0] sm:$0xff]
    %v71 = vld [vmem:[%s10 + $0xe8] sm:$0xff]
    %v72 = vld [vmem:[%s10 + $0xf0] sm:$0xff]
    %v73 = vld [vmem:[%s10 + $0xf8] sm:$0xff]
    %v74 = vld [vmem:[%s11] sm:$0x1]
    %v75 = vld [vmem:[%s1] sm:$0xff]
    %v76 = vld [vmem:[%s3] sm:$0x1]
    %v77 = vld [vmem:[%s0] sm:$0xff]
    %v78 = vld [vmem:[%s0 + $0x8] sm:$0xff]
    %v80 = vlaneseq
    %v81 = vshrl.u32 %v80, 7
    %v82 = vsub.s32 0, %v81
    %v83 = vrot.slane %v76, %v82
    %vm85 = vcmask 64512
    %v87 = vsel %vm85, %v77, 0
    %v90 = vsel %vm85, %v78, 0
    %92 = vmatprep.subr.mxu0 0.0
    %93 = vmatpush1.msra.mxu0 0.0
    %94 = vmatprep.subr.mxu0 0.0
    %95 = vmatpush1.msra.mxu0 0.0
    %96 = vmatprep.subr.mxu0 0.0
    %97 = vmatpush1.msra.mxu0 0.0
    %98 = vmatprep.subr.mxu0 0.0
    %99 = vmatpush1.msra.mxu0 0.0
    %100 = vmatprep.subr.mxu0 0.0
    %101 = vmatpush1.msra.mxu0 0.0
    %102 = vmatprep.subr.mxu0 0.0
    %103 = vmatpush1.msra.mxu0 0.0
    %104 = vmatprep.subr.mxu0 0.0
    %105 = vmatpush1.msra.mxu0 0.0
    %106 = vmatprep.subr.mxu0 0.0
    %107 = vmatpush1.msra.mxu0 0.0
    %108 = vmatprep.subr.mxu0 0.0
    %109 = vmatpush1.msra.mxu0 0.0
    %110 = vmatprep.subr.mxu0 0.0
    %111 = vmatpush1.msra.mxu0 0.0
    %112 = vmatprep.subr.mxu0 0.0
    %113 = vmatpush1.msra.mxu0 0.0
    %114 = vmatprep.subr.mxu0 0.0
    %115 = vmatpush1.msra.mxu0 0.0
    %116 = vmatprep.subr.mxu0 0.0
    %117 = vmatpush1.msra.mxu0 0.0
    %118 = vmatprep.subr.mxu0 0.0
    %119 = vmatpush1.msra.mxu0 0.0
    %120 = vmatprep.subr.mxu0 0.0
    %121 = vmatpush1.msra.mxu0 0.0
    %122 = vmatprep.subr.mxu0 0.0
    %123 = vmatpush1.msra.mxu0 %v75
    %124 = vmatprep.subr.mxu0 0.0
    %125 = vmatpush2.msra.mxu0 0.0
    %126 = vmatprep.subr.mxu0 0.0
    %127 = vmatpush2.msra.mxu0 0.0
    %128 = vmatprep.subr.mxu0 0.0
    %129 = vmatpush2.msra.mxu0 0.0
    %130 = vmatprep.subr.mxu0 0.0
    %131 = vmatpush2.msra.mxu0 0.0
    %132 = vmatprep.subr.mxu0 0.0
    %133 = vmatpush2.msra.mxu0 0.0
    %134 = vmatprep.subr.mxu0 0.0
    %135 = vmatpush2.msra.mxu0 0.0
    %136 = vmatprep.subr.mxu0 0.0
    %137 = vmatpush2.msra.mxu0 0.0
    %138 = vmatprep.subr.mxu0 0.0
    %139 = vmatpush2.msra.mxu0 0.0
    %140 = vmatprep.subr.mxu0 0.0
    %141 = vmatpush2.msra.mxu0 0.0
    %142 = vmatprep.subr.mxu0 0.0
    %143 = vmatpush2.msra.mxu0 0.0
    %144 = vmatprep.subr.mxu0 0.0
    %145 = vmatpush2.msra.mxu0 0.0
    %146 = vmatprep.subr.mxu0 0.0
    %147 = vmatpush2.msra.mxu0 0.0
    %148 = vmatprep.subr.mxu0 0.0
    %149 = vmatpush2.msra.mxu0 0.0
    %150 = vmatprep.subr.mxu0 0.0
    %151 = vmatpush2.msra.mxu0 0.0
    %152 = vmatprep.subr.mxu0 0.0
    %153 = vmatpush2.msra.mxu0 0.0
    %154 = vmatprep.subr.mxu0 0.0
    %155 = vmatpush2.msra.mxu0 0.0
    %156 = vmatprep.mubr.f32.mxu0 0.0
    %157 = vmatmul.mubr.f32.gmra.mxu0 %v87
    %v158 = vpop.f32.mrf.mxu0
    %v159 = vadd.f32 %v83, %v158
    %v160 = vpop.f32.mrf.mxu0
    %161 = vmatprep.mubr.f32.mxu0 0.0
    %162 = vmatmul.mubr.f32.gmra.mxu0 %v90
    %v163 = vpop.f32.mrf.mxu0
    %v164 = vadd.f32 %v83, %v163
    %v165 = vpop.f32.mrf.mxu0
    %166 = vdwg.mxu0
    %v167 = vld [vmem:[%s2] sm:$0xff]
    %v168 = vld [vmem:[%s2 + $0x8] sm:$0xff]
    %v169 = vld [vmem:[%s2 + $0x10] sm:$0xff]
    %v170 = vld [vmem:[%s2 + $0x18] sm:$0xff]
    %vm171 = vcmask 261120
    %v173 = vsel %vm171, 0.0, 0
    %175 = vmatprep.subr.mxu0 0.0
    %176 = vmatpush1.msra.mxu0 0.0
    %177 = vmatprep.subr.mxu0 0.0
    %178 = vmatpush1.msra.mxu0 0.0
    %179 = vmatprep.subr.mxu0 0.0
    %180 = vmatpush1.msra.mxu0 0.0
    %181 = vmatprep.subr.mxu0 0.0
    %182 = vmatpush1.msra.mxu0 0.0
    %183 = vmatprep.subr.mxu0 0.0
    %184 = vmatpush1.msra.mxu0 0.0
    %185 = vmatprep.subr.mxu0 0.0
    %186 = vmatpush1.msra.mxu0 0.0
    %187 = vmatprep.subr.mxu0 0.0
    %188 = vmatpush1.msra.mxu0 0.0
    %189 = vmatprep.subr.mxu0 0.0
    %190 = vmatpush1.msra.mxu0 0.0
    %191 = vmatprep.subr.mxu0 0.0
    %192 = vmatpush1.msra.mxu0 0.0
    %193 = vmatprep.subr.mxu0 0.0
    %194 = vmatpush1.msra.mxu0 0.0
    %195 = vmatprep.subr.mxu0 0.0
    %196 = vmatpush1.msra.mxu0 0.0
    %197 = vmatprep.subr.mxu0 0.0
    %198 = vmatpush1.msra.mxu0 0.0
    %199 = vmatprep.subr.mxu0 0.0
    %200 = vmatpush1.msra.mxu0 %v170
    %201 = vmatprep.subr.mxu0 0.0
    %202 = vmatpush1.msra.mxu0 %v169
    %203 = vmatprep.subr.mxu0 0.0
    %204 = vmatpush1.msra.mxu0 %v168
    %205 = vmatprep.subr.mxu0 0.0
    %206 = vmatpush1.msra.mxu0 %v167
    %207 = vmatprep.subr.mxu0 0.0
    %208 = vmatpush2.msra.mxu0 0.0
    %209 = vmatprep.subr.mxu0 0.0
    %210 = vmatpush2.msra.mxu0 0.0
    %211 = vmatprep.subr.mxu0 0.0
    %212 = vmatpush2.msra.mxu0 0.0
    %213 = vmatprep.subr.mxu0 0.0
    %214 = vmatpush2.msra.mxu0 0.0
    %215 = vmatprep.subr.mxu0 0.0
    %216 = vmatpush2.msra.mxu0 0.0
    %217 = vmatprep.subr.mxu0 0.0
    %218 = vmatpush2.msra.mxu0 0.0
    %219 = vmatprep.subr.mxu0 0.0
    %220 = vmatpush2.msra.mxu0 0.0
    %221 = vmatprep.subr.mxu0 0.0
    %222 = vmatpush2.msra.mxu0 0.0
    %223 = vmatprep.subr.mxu0 0.0
    %224 = vmatpush2.msra.mxu0 0.0
    %225 = vmatprep.subr.mxu0 0.0
    %226 = vmatpush2.msra.mxu0 0.0
    %227 = vmatprep.subr.mxu0 0.0
    %228 = vmatpush2.msra.mxu0 0.0
    %229 = vmatprep.subr.mxu0 0.0
    %230 = vmatpush2.msra.mxu0 0.0
    %231 = vmatprep.subr.mxu0 0.0
    %232 = vmatpush2.msra.mxu0 0.0
    %233 = vmatprep.subr.mxu0 0.0
    %234 = vmatpush2.msra.mxu0 0.0
    %235 = vmatprep.subr.mxu0 0.0
    %236 = vmatpush2.msra.mxu0 0.0
    %237 = vmatprep.subr.mxu0 0.0
    %238 = vmatpush2.msra.mxu0 0.0
    %239 = vmatprep.mubr.f32.mxu0 0.0
    %240 = vmatmul.mubr.f32.gmra.mxu0 %v173
    %v241 = vpop.f32.mrf.mxu0
    %v242 = vadd.f32 0.0, %v241
    %v243 = vpop.f32.mrf.mxu0
    %244 = vdwg.mxu0
    %v245 = vadd.f32 %v159, %v242
    %v246 = vxor.u32 %v245, 2147483648
    %v247 = vmul.f32 %v246, 1.442695
    %v248 = vpow.pop %v247
    %v249 = vadd.f32 %v248, 1.0
    %v250 = vrcp.pop %v249
    %v251 = vmul.f32 1.0, %v250
    %v252 = vtanh.pop %v245
    %v253 = vmul.f32 %v251, 0.0
    %255 = vrot.lane.b32.xlu0 %v252, 64
    %v256 = vpop.permute.xlu0 %255
    %v258 = vmul.f32 %v251, %v256
    %260 = vrot.lane.b32.xlu0 %v258, 96
    %v261 = vpop.permute.xlu0 %260
    %v263 = vadd.f32 %v253, %v261
    %v264 = vtanh.pop %v263
    %266 = vrot.lane.b32.xlu0 %v264, 64
    %v267 = vpop.permute.xlu0 %266
    %v269 = vmul.f32 %v251, %v267
    %v270 = vxor.u32 %v269, 2147483648
    %v271 = vmul.f32 %v270, 1.442695
    %v272 = vpow.pop %v271
    %v273 = vadd.f32 %v272, 1.0
    %v274 = vrcp.pop %v273
    %v275 = vmul.f32 1.0, %v274
    %277 = vrot.lane.b32.xlu0 %v269, 64
    %v278 = vpop.permute.xlu0 %277
    %v279 = vsel %vm171, %v278, 0
    %281 = vmatprep.subr.mxu0 0.0
    %282 = vmatpush1.msra.mxu0 0.0
    %283 = vmatprep.subr.mxu0 0.0
    %284 = vmatpush1.msra.mxu0 0.0
    %285 = vmatprep.subr.mxu0 0.0
    %286 = vmatpush1.msra.mxu0 0.0
    %287 = vmatprep.subr.mxu0 0.0
    %288 = vmatpush1.msra.mxu0 0.0
    %289 = vmatprep.subr.mxu0 0.0
    %290 = vmatpush1.msra.mxu0 0.0
    %291 = vmatprep.subr.mxu0 0.0
    %292 = vmatpush1.msra.mxu0 0.0
    %293 = vmatprep.subr.mxu0 0.0
    %294 = vmatpush1.msra.mxu0 0.0
    %295 = vmatprep.subr.mxu0 0.0
    %296 = vmatpush1.msra.mxu0 0.0
    %297 = vmatprep.subr.mxu0 0.0
    %298 = vmatpush1.msra.mxu0 0.0
    %299 = vmatprep.subr.mxu0 0.0
    %300 = vmatpush1.msra.mxu0 0.0
    %301 = vmatprep.subr.mxu0 0.0
    %302 = vmatpush1.msra.mxu0 0.0
    %303 = vmatprep.subr.mxu0 0.0
    %304 = vmatpush1.msra.mxu0 0.0
    %305 = vmatprep.subr.mxu0 0.0
    %306 = vmatpush1.msra.mxu0 %v170
    %307 = vmatprep.subr.mxu0 0.0
    %308 = vmatpush1.msra.mxu0 %v169
    %309 = vmatprep.subr.mxu0 0.0
    %310 = vmatpush1.msra.mxu0 %v168
    %311 = vmatprep.subr.mxu0 0.0
    %312 = vmatpush1.msra.mxu0 %v167
    %313 = vmatprep.subr.mxu0 0.0
    %314 = vmatpush2.msra.mxu0 0.0
    %315 = vmatprep.subr.mxu0 0.0
    %316 = vmatpush2.msra.mxu0 0.0
    %317 = vmatprep.subr.mxu0 0.0
    %318 = vmatpush2.msra.mxu0 0.0
    %319 = vmatprep.subr.mxu0 0.0
    %320 = vmatpush2.msra.mxu0 0.0
    %321 = vmatprep.subr.mxu0 0.0
    %322 = vmatpush2.msra.mxu0 0.0
    %323 = vmatprep.subr.mxu0 0.0
    %324 = vmatpush2.msra.mxu0 0.0
    %325 = vmatprep.subr.mxu0 0.0
    %326 = vmatpush2.msra.mxu0 0.0
    %327 = vmatprep.subr.mxu0 0.0
    %328 = vmatpush2.msra.mxu0 0.0
    %329 = vmatprep.subr.mxu0 0.0
    %330 = vmatpush2.msra.mxu0 0.0
    %331 = vmatprep.subr.mxu0 0.0
    %332 = vmatpush2.msra.mxu0 0.0
    %333 = vmatprep.subr.mxu0 0.0
    %334 = vmatpush2.msra.mxu0 0.0
    %335 = vmatprep.subr.mxu0 0.0
    %336 = vmatpush2.msra.mxu0 0.0
    %337 = vmatprep.subr.mxu0 0.0
    %338 = vmatpush2.msra.mxu0 0.0
    %339 = vmatprep.subr.mxu0 0.0
    %340 = vmatpush2.msra.mxu0 0.0
    %341 = vmatprep.subr.mxu0 0.0
    %342 = vmatpush2.msra.mxu0 0.0
    %343 = vmatprep.subr.mxu0 0.0
    %344 = vmatpush2.msra.mxu0 0.0
    %345 = vmatprep.mubr.f32.mxu0 0.0
    %346 = vmatmul.mubr.f32.gmra.mxu0 %v279
    %v347 = vpop.f32.mrf.mxu0
    %v348 = vadd.f32 0.0, %v347
    %v349 = vpop.f32.mrf.mxu0
    %350 = vdwg.mxu0
    %v352 = vrot.slane %v348, 6
    %v354 = vadd.f32 %v159, %v352
    %v355 = vxor.u32 %v354, 2147483648
    %v356 = vmul.f32 %v355, 1.442695
    %v357 = vpow.pop %v356
    %v358 = vadd.f32 %v357, 1.0
    %v359 = vrcp.pop %v358
    %v360 = vmul.f32 1.0, %v359
    %v361 = vtanh.pop %v354
    %v363 = vrot.slane %v263, 6
    %v365 = vmul.f32 %v360, %v363
    %367 = vrot.lane.b32.xlu0 %v361, 64
    %v368 = vpop.permute.xlu0 %367
    %v370 = vmul.f32 %v360, %v368
    %372 = vrot.lane.b32.xlu0 %v370, 96
    %v373 = vpop.permute.xlu0 %372
    %v375 = vadd.f32 %v365, %v373
    %v376 = vtanh.pop %v375
    %378 = vrot.lane.b32.xlu0 %v376, 64
    %v379 = vpop.permute.xlu0 %378
    %v381 = vmul.f32 %v360, %v379
    %v382 = vxor.u32 %v381, 2147483648
    %v383 = vmul.f32 %v382, 1.442695
    %v384 = vpow.pop %v383
    %v385 = vadd.f32 %v384, 1.0
    %v386 = vrcp.pop %v385
    %v387 = vmul.f32 1.0, %v386
    %v389 = vrot.slane %v381, 2
    %390 = vrot.lane.b32.xlu0 %v389, 64
    %v391 = vpop.permute.xlu0 %390
    %v392 = vsel %vm171, %v391, 0
    %394 = vmatprep.subr.mxu0 0.0
    %395 = vmatpush1.msra.mxu0 0.0
    %396 = vmatprep.subr.mxu0 0.0
    %397 = vmatpush1.msra.mxu0 0.0
    %398 = vmatprep.subr.mxu0 0.0
    %399 = vmatpush1.msra.mxu0 0.0
    %400 = vmatprep.subr.mxu0 0.0
    %401 = vmatpush1.msra.mxu0 0.0
    %402 = vmatprep.subr.mxu0 0.0
    %403 = vmatpush1.msra.mxu0 0.0
    %404 = vmatprep.subr.mxu0 0.0
    %405 = vmatpush1.msra.mxu0 0.0
    %406 = vmatprep.subr.mxu0 0.0
    %407 = vmatpush1.msra.mxu0 0.0
    %408 = vmatprep.subr.mxu0 0.0
    %409 = vmatpush1.msra.mxu0 0.0
    %410 = vmatprep.subr.mxu0 0.0
    %411 = vmatpush1.msra.mxu0 0.0
    %412 = vmatprep.subr.mxu0 0.0
    %413 = vmatpush1.msra.mxu0 0.0
    %414 = vmatprep.subr.mxu0 0.0
    %415 = vmatpush1.msra.mxu0 0.0
    %416 = vmatprep.subr.mxu0 0.0
    %417 = vmatpush1.msra.mxu0 0.0
    %418 = vmatprep.subr.mxu0 0.0
    %419 = vmatpush1.msra.mxu0 %v170
    %420 = vmatprep.subr.mxu0 0.0
    %421 = vmatpush1.msra.mxu0 %v169
    %422 = vmatprep.subr.mxu0 0.0
    %423 = vmatpush1.msra.mxu0 %v168
    %424 = vmatprep.subr.mxu0 0.0
    %425 = vmatpush1.msra.mxu0 %v167
    %426 = vmatprep.subr.mxu0 0.0
    %427 = vmatpush2.msra.mxu0 0.0
    %428 = vmatprep.subr.mxu0 0.0
    %429 = vmatpush2.msra.mxu0 0.0
    %430 = vmatprep.subr.mxu0 0.0
    %431 = vmatpush2.msra.mxu0 0.0
    %432 = vmatprep.subr.mxu0 0.0
    %433 = vmatpush2.msra.mxu0 0.0
    %434 = vmatprep.subr.mxu0 0.0
    %435 = vmatpush2.msra.mxu0 0.0
    %436 = vmatprep.subr.mxu0 0.0
    %437 = vmatpush2.msra.mxu0 0.0
    %438 = vmatprep.subr.mxu0 0.0
    %439 = vmatpush2.msra.mxu0 0.0
    %440 = vmatprep.subr.mxu0 0.0
    %441 = vmatpush2.msra.mxu0 0.0
    %442 = vmatprep.subr.mxu0 0.0
    %443 = vmatpush2.msra.mxu0 0.0
    %444 = vmatprep.subr.mxu0 0.0
    %445 = vmatpush2.msra.mxu0 0.0
    %446 = vmatprep.subr.mxu0 0.0
    %447 = vmatpush2.msra.mxu0 0.0
    %448 = vmatprep.subr.mxu0 0.0
    %449 = vmatpush2.msra.mxu0 0.0
    %450 = vmatprep.subr.mxu0 0.0
    %451 = vmatpush2.msra.mxu0 0.0
    %452 = vmatprep.subr.mxu0 0.0
    %453 = vmatpush2.msra.mxu0 0.0
    %454 = vmatprep.subr.mxu0 0.0
    %455 = vmatpush2.msra.mxu0 0.0
    %456 = vmatprep.subr.mxu0 0.0
    %457 = vmatpush2.msra.mxu0 0.0
    %458 = vmatprep.mubr.f32.mxu0 0.0
    %459 = vmatmul.mubr.f32.gmra.mxu0 %v392
    %v460 = vpop.f32.mrf.mxu0
    %v461 = vadd.f32 0.0, %v460
    %v462 = vpop.f32.mrf.mxu0
    %463 = vdwg.mxu0
    %v465 = vrot.slane %v461, 4
    %v467 = vadd.f32 %v159, %v465
    %v468 = vxor.u32 %v467, 2147483648
    %v469 = vmul.f32 %v468, 1.442695
    %v470 = vpow.pop %v469
    %v471 = vadd.f32 %v470, 1.0
    %v472 = vrcp.pop %v471
    %v473 = vmul.f32 1.0, %v472
    %v474 = vtanh.pop %v467
    %v476 = vrot.slane %v375, 6
    %v478 = vmul.f32 %v473, %v476
    %480 = vrot.lane.b32.xlu0 %v474, 64
    %v481 = vpop.permute.xlu0 %480
    %v483 = vmul.f32 %v473, %v481
    %485 = vrot.lane.b32.xlu0 %v483, 96
    %v486 = vpop.permute.xlu0 %485
    %v488 = vadd.f32 %v478, %v486
    %v489 = vtanh.pop %v488
    %491 = vrot.lane.b32.xlu0 %v489, 64
    %v492 = vpop.permute.xlu0 %491
    %v494 = vmul.f32 %v473, %v492
    %v495 = vxor.u32 %v494, 2147483648
    %v496 = vmul.f32 %v495, 1.442695
    %v497 = vpow.pop %v496
    %v498 = vadd.f32 %v497, 1.0
    %v499 = vrcp.pop %v498
    %v500 = vmul.f32 1.0, %v499
    %v502 = vrot.slane %v494, 4
    %503 = vrot.lane.b32.xlu0 %v502, 64
    %v504 = vpop.permute.xlu0 %503
    %v505 = vsel %vm171, %v504, 0
    %507 = vmatprep.subr.mxu0 0.0
    %508 = vmatpush1.msra.mxu0 0.0
    %509 = vmatprep.subr.mxu0 0.0
    %510 = vmatpush1.msra.mxu0 0.0
    %511 = vmatprep.subr.mxu0 0.0
    %512 = vmatpush1.msra.mxu0 0.0
    %513 = vmatprep.subr.mxu0 0.0
    %514 = vmatpush1.msra.mxu0 0.0
    %515 = vmatprep.subr.mxu0 0.0
    %516 = vmatpush1.msra.mxu0 0.0
    %517 = vmatprep.subr.mxu0 0.0
    %518 = vmatpush1.msra.mxu0 0.0
    %519 = vmatprep.subr.mxu0 0.0
    %520 = vmatpush1.msra.mxu0 0.0
    %521 = vmatprep.subr.mxu0 0.0
    %522 = vmatpush1.msra.mxu0 0.0
    %523 = vmatprep.subr.mxu0 0.0
    %524 = vmatpush1.msra.mxu0 0.0
    %525 = vmatprep.subr.mxu0 0.0
    %526 = vmatpush1.msra.mxu0 0.0
    %527 = vmatprep.subr.mxu0 0.0
    %528 = vmatpush1.msra.mxu0 0.0
    %529 = vmatprep.subr.mxu0 0.0
    %530 = vmatpush1.msra.mxu0 0.0
    %531 = vmatprep.subr.mxu0 0.0
    %532 = vmatpush1.msra.mxu0 %v170
    %533 = vmatprep.subr.mxu0 0.0
    %534 = vmatpush1.msra.mxu0 %v169
    %535 = vmatprep.subr.mxu0 0.0
    %536 = vmatpush1.msra.mxu0 %v168
    %537 = vmatprep.subr.mxu0 0.0
    %538 = vmatpush1.msra.mxu0 %v167
    %539 = vmatprep.subr.mxu0 0.0
    %540 = vmatpush2.msra.mxu0 0.0
    %541 = vmatprep.subr.mxu0 0.0
    %542 = vmatpush2.msra.mxu0 0.0
    %543 = vmatprep.subr.mxu0 0.0
    %544 = vmatpush2.msra.mxu0 0.0
    %545 = vmatprep.subr.mxu0 0.0
    %546 = vmatpush2.msra.mxu0 0.0
    %547 = vmatprep.subr.mxu0 0.0
    %548 = vmatpush2.msra.mxu0 0.0
    %549 = vmatprep.subr.mxu0 0.0
    %550 = vmatpush2.msra.mxu0 0.0
    %551 = vmatprep.subr.mxu0 0.0
    %552 = vmatpush2.msra.mxu0 0.0
    %553 = vmatprep.subr.mxu0 0.0
    %554 = vmatpush2.msra.mxu0 0.0
    %555 = vmatprep.subr.mxu0 0.0
    %556 = vmatpush2.msra.mxu0 0.0
    %557 = vmatprep.subr.mxu0 0.0
    %558 = vmatpush2.msra.mxu0 0.0
    %559 = vmatprep.subr.mxu0 0.0
    %560 = vmatpush2.msra.mxu0 0.0
    %561 = vmatprep.subr.mxu0 0.0
    %562 = vmatpush2.msra.mxu0 0.0
    %563 = vmatprep.subr.mxu0 0.0
    %564 = vmatpush2.msra.mxu0 0.0
    %565 = vmatprep.subr.mxu0 0.0
    %566 = vmatpush2.msra.mxu0 0.0
    %567 = vmatprep.subr.mxu0 0.0
    %568 = vmatpush2.msra.mxu0 0.0
    %569 = vmatprep.subr.mxu0 0.0
    %570 = vmatpush2.msra.mxu0 0.0
    %571 = vmatprep.mubr.f32.mxu0 0.0
    %572 = vmatmul.mubr.f32.gmra.mxu0 %v505
    %v573 = vpop.f32.mrf.mxu0
    %v574 = vadd.f32 0.0, %v573
    %v575 = vpop.f32.mrf.mxu0
    %576 = vdwg.mxu0
    %v578 = vrot.slane %v574, 2
    %v580 = vadd.f32 %v159, %v578
    %v581 = vxor.u32 %v580, 2147483648
    %v582 = vmul.f32 %v581, 1.442695
    %v583 = vpow.pop %v582
    %v584 = vadd.f32 %v583, 1.0
    %v585 = vrcp.pop %v584
    %v586 = vmul.f32 1.0, %v585
    %v587 = vtanh.pop %v580
    %v589 = vrot.slane %v488, 6
    %v591 = vmul.f32 %v586, %v589
    %593 = vrot.lane.b32.xlu0 %v587, 64
    %v594 = vpop.permute.xlu0 %593
    %v596 = vmul.f32 %v586, %v594
    %598 = vrot.lane.b32.xlu0 %v596, 96
    %v599 = vpop.permute.xlu0 %598
    %v601 = vadd.f32 %v591, %v599
    %v602 = vtanh.pop %v601
    %604 = vrot.lane.b32.xlu0 %v602, 64
    %v605 = vpop.permute.xlu0 %604
    %v607 = vmul.f32 %v586, %v605
    %v608 = vxor.u32 %v607, 2147483648
    %v609 = vmul.f32 %v608, 1.442695
    %v610 = vpow.pop %v609
    %v611 = vadd.f32 %v610, 1.0
    %v612 = vrcp.pop %v611
    %v613 = vmul.f32 1.0, %v612
    %v615 = vrot.slane %v607, 6
    %616 = vrot.lane.b32.xlu0 %v615, 64
    %v617 = vpop.permute.xlu0 %616
    %v618 = vsel %vm171, %v617, 0
    %620 = vmatprep.subr.mxu0 0.0
    %621 = vmatpush1.msra.mxu0 0.0
    %622 = vmatprep.subr.mxu0 0.0
    %623 = vmatpush1.msra.mxu0 0.0
    %624 = vmatprep.subr.mxu0 0.0
    %625 = vmatpush1.msra.mxu0 0.0
    %626 = vmatprep.subr.mxu0 0.0
    %627 = vmatpush1.msra.mxu0 0.0
    %628 = vmatprep.subr.mxu0 0.0
    %629 = vmatpush1.msra.mxu0 0.0
    %630 = vmatprep.subr.mxu0 0.0
    %631 = vmatpush1.msra.mxu0 0.0
    %632 = vmatprep.subr.mxu0 0.0
    %633 = vmatpush1.msra.mxu0 0.0
    %634 = vmatprep.subr.mxu0 0.0
    %635 = vmatpush1.msra.mxu0 0.0
    %636 = vmatprep.subr.mxu0 0.0
    %637 = vmatpush1.msra.mxu0 0.0
    %638 = vmatprep.subr.mxu0 0.0
    %639 = vmatpush1.msra.mxu0 0.0
    %640 = vmatprep.subr.mxu0 0.0
    %641 = vmatpush1.msra.mxu0 0.0
    %642 = vmatprep.subr.mxu0 0.0
    %643 = vmatpush1.msra.mxu0 0.0
    %644 = vmatprep.subr.mxu0 0.0
    %645 = vmatpush1.msra.mxu0 %v170
    %646 = vmatprep.subr.mxu0 0.0
    %647 = vmatpush1.msra.mxu0 %v169
    %648 = vmatprep.subr.mxu0 0.0
    %649 = vmatpush1.msra.mxu0 %v168
    %650 = vmatprep.subr.mxu0 0.0
    %651 = vmatpush1.msra.mxu0 %v167
    %652 = vmatprep.subr.mxu0 0.0
    %653 = vmatpush2.msra.mxu0 0.0
    %654 = vmatprep.subr.mxu0 0.0
    %655 = vmatpush2.msra.mxu0 0.0
    %656 = vmatprep.subr.mxu0 0.0
    %657 = vmatpush2.msra.mxu0 0.0
    %658 = vmatprep.subr.mxu0 0.0
    %659 = vmatpush2.msra.mxu0 0.0
    %660 = vmatprep.subr.mxu0 0.0
    %661 = vmatpush2.msra.mxu0 0.0
    %662 = vmatprep.subr.mxu0 0.0
    %663 = vmatpush2.msra.mxu0 0.0
    %664 = vmatprep.subr.mxu0 0.0
    %665 = vmatpush2.msra.mxu0 0.0
    %666 = vmatprep.subr.mxu0 0.0
    %667 = vmatpush2.msra.mxu0 0.0
    %668 = vmatprep.subr.mxu0 0.0
    %669 = vmatpush2.msra.mxu0 0.0
    %670 = vmatprep.subr.mxu0 0.0
    %671 = vmatpush2.msra.mxu0 0.0
    %672 = vmatprep.subr.mxu0 0.0
    %673 = vmatpush2.msra.mxu0 0.0
    %674 = vmatprep.subr.mxu0 0.0
    %675 = vmatpush2.msra.mxu0 0.0
    %676 = vmatprep.subr.mxu0 0.0
    %677 = vmatpush2.msra.mxu0 0.0
    %678 = vmatprep.subr.mxu0 0.0
    %679 = vmatpush2.msra.mxu0 0.0
    %680 = vmatprep.subr.mxu0 0.0
    %681 = vmatpush2.msra.mxu0 0.0
    %682 = vmatprep.subr.mxu0 0.0
    %683 = vmatpush2.msra.mxu0 0.0
    %684 = vmatprep.mubr.f32.mxu0 0.0
    %685 = vmatmul.mubr.f32.gmra.mxu0 %v618
    %v686 = vpop.f32.mrf.mxu0
    %v687 = vadd.f32 0.0, %v686
    %v688 = vpop.f32.mrf.mxu0
    %689 = vdwg.mxu0
    %v690 = vadd.f32 %v164, %v687
    %v691 = vxor.u32 %v690, 2147483648
    %v692 = vmul.f32 %v691, 1.442695
    %v693 = vpow.pop %v692
    %v694 = vadd.f32 %v693, 1.0
    %v695 = vrcp.pop %v694
    %v696 = vmul.f32 1.0, %v695
    %v697 = vtanh.pop %v690
    %v699 = vrot.slane %v601, 6
    %v701 = vmul.f32 %v696, %v699
    %703 = vrot.lane.b32.xlu0 %v697, 64
    %v704 = vpop.permute.xlu0 %703
    %v706 = vmul.f32 %v696, %v704
    %708 = vrot.lane.b32.xlu0 %v706, 96
    %v709 = vpop.permute.xlu0 %708
    %v711 = vadd.f32 %v701, %v709
    %v712 = vtanh.pop %v711
    %714 = vrot.lane.b32.xlu0 %v712, 64
    %v715 = vpop.permute.xlu0 %714
    %v717 = vmul.f32 %v696, %v715
    %v718 = vxor.u32 %v717, 2147483648
    %v719 = vmul.f32 %v718, 1.442695
    %v720 = vpow.pop %v719
    %v721 = vadd.f32 %v720, 1.0
    %v722 = vrcp.pop %v721
    %v723 = vmul.f32 1.0, %v722
    %725 = vrot.lane.b32.xlu0 %v717, 64
    %v726 = vpop.permute.xlu0 %725
    %v727 = vsel %vm171, %v726, 0
    %729 = vmatprep.subr.mxu0 0.0
    %730 = vmatpush1.msra.mxu0 0.0
    %731 = vmatprep.subr.mxu0 0.0
    %732 = vmatpush1.msra.mxu0 0.0
    %733 = vmatprep.subr.mxu0 0.0
    %734 = vmatpush1.msra.mxu0 0.0
    %735 = vmatprep.subr.mxu0 0.0
    %736 = vmatpush1.msra.mxu0 0.0
    %737 = vmatprep.subr.mxu0 0.0
    %738 = vmatpush1.msra.mxu0 0.0
    %739 = vmatprep.subr.mxu0 0.0
    %740 = vmatpush1.msra.mxu0 0.0
    %741 = vmatprep.subr.mxu0 0.0
    %742 = vmatpush1.msra.mxu0 0.0
    %743 = vmatprep.subr.mxu0 0.0
    %744 = vmatpush1.msra.mxu0 0.0
    %745 = vmatprep.subr.mxu0 0.0
    %746 = vmatpush1.msra.mxu0 0.0
    %747 = vmatprep.subr.mxu0 0.0
    %748 = vmatpush1.msra.mxu0 0.0
    %749 = vmatprep.subr.mxu0 0.0
    %750 = vmatpush1.msra.mxu0 0.0
    %751 = vmatprep.subr.mxu0 0.0
    %752 = vmatpush1.msra.mxu0 0.0
    %753 = vmatprep.subr.mxu0 0.0
    %754 = vmatpush1.msra.mxu0 %v170
    %755 = vmatprep.subr.mxu0 0.0
    %756 = vmatpush1.msra.mxu0 %v169
    %757 = vmatprep.subr.mxu0 0.0
    %758 = vmatpush1.msra.mxu0 %v168
    %759 = vmatprep.subr.mxu0 0.0
    %760 = vmatpush1.msra.mxu0 %v167
    %761 = vmatprep.subr.mxu0 0.0
    %762 = vmatpush2.msra.mxu0 0.0
    %763 = vmatprep.subr.mxu0 0.0
    %764 = vmatpush2.msra.mxu0 0.0
    %765 = vmatprep.subr.mxu0 0.0
    %766 = vmatpush2.msra.mxu0 0.0
    %767 = vmatprep.subr.mxu0 0.0
    %768 = vmatpush2.msra.mxu0 0.0
    %769 = vmatprep.subr.mxu0 0.0
    %770 = vmatpush2.msra.mxu0 0.0
    %771 = vmatprep.subr.mxu0 0.0
    %772 = vmatpush2.msra.mxu0 0.0
    %773 = vmatprep.subr.mxu0 0.0
    %774 = vmatpush2.msra.mxu0 0.0
    %775 = vmatprep.subr.mxu0 0.0
    %776 = vmatpush2.msra.mxu0 0.0
    %777 = vmatprep.subr.mxu0 0.0
    %778 = vmatpush2.msra.mxu0 0.0
    %779 = vmatprep.subr.mxu0 0.0
    %780 = vmatpush2.msra.mxu0 0.0
    %781 = vmatprep.subr.mxu0 0.0
    %782 = vmatpush2.msra.mxu0 0.0
    %783 = vmatprep.subr.mxu0 0.0
    %784 = vmatpush2.msra.mxu0 0.0
    %785 = vmatprep.subr.mxu0 0.0
    %786 = vmatpush2.msra.mxu0 0.0
    %787 = vmatprep.subr.mxu0 0.0
    %788 = vmatpush2.msra.mxu0 0.0
    %789 = vmatprep.subr.mxu0 0.0
    %790 = vmatpush2.msra.mxu0 0.0
    %791 = vmatprep.subr.mxu0 0.0
    %792 = vmatpush2.msra.mxu0 0.0
    %793 = vmatprep.mubr.f32.mxu0 0.0
    %794 = vmatmul.mubr.f32.gmra.mxu0 %v727
    %v795 = vpop.f32.mrf.mxu0
    %v796 = vadd.f32 0.0, %v795
    %v797 = vpop.f32.mrf.mxu0
    %798 = vdwg.mxu0
    %v800 = vrot.slane %v796, 6
    %v802 = vadd.f32 %v164, %v800
    %v803 = vxor.u32 %v802, 2147483648
    %v804 = vmul.f32 %v803, 1.442695
    %v805 = vpow.pop %v804
    %v806 = vadd.f32 %v805, 1.0
    %v807 = vrcp.pop %v806
    %v808 = vmul.f32 1.0, %v807
    %v809 = vtanh.pop %v802
    %v811 = vrot.slane %v711, 6
    %v813 = vmul.f32 %v808, %v811
    %815 = vrot.lane.b32.xlu0 %v809, 64
    %v816 = vpop.permute.xlu0 %815
    %v818 = vmul.f32 %v808, %v816
    %820 = vrot.lane.b32.xlu0 %v818, 96
    %v821 = vpop.permute.xlu0 %820
    %v823 = vadd.f32 %v813, %v821
    %v824 = vtanh.pop %v823
    %826 = vrot.lane.b32.xlu0 %v824, 64
    %v827 = vpop.permute.xlu0 %826
    %v829 = vmul.f32 %v808, %v827
    %v830 = vxor.u32 %v829, 2147483648
    %v831 = vmul.f32 %v830, 1.442695
    %v832 = vpow.pop %v831
    %v833 = vadd.f32 %v832, 1.0
    %v834 = vrcp.pop %v833
    %v835 = vmul.f32 1.0, %v834
    %v837 = vrot.slane %v829, 2
    %838 = vrot.lane.b32.xlu0 %v837, 64
    %v839 = vpop.permute.xlu0 %838
    %v840 = vsel %vm171, %v839, 0
    %842 = vmatprep.subr.mxu0 0.0
    %843 = vmatpush1.msra.mxu0 0.0
    %844 = vmatprep.subr.mxu0 0.0
    %845 = vmatpush1.msra.mxu0 0.0
    %846 = vmatprep.subr.mxu0 0.0
    %847 = vmatpush1.msra.mxu0 0.0
    %848 = vmatprep.subr.mxu0 0.0
    %849 = vmatpush1.msra.mxu0 0.0
    %850 = vmatprep.subr.mxu0 0.0
    %851 = vmatpush1.msra.mxu0 0.0
    %852 = vmatprep.subr.mxu0 0.0
    %853 = vmatpush1.msra.mxu0 0.0
    %854 = vmatprep.subr.mxu0 0.0
    %855 = vmatpush1.msra.mxu0 0.0
    %856 = vmatprep.subr.mxu0 0.0
    %857 = vmatpush1.msra.mxu0 0.0
    %858 = vmatprep.subr.mxu0 0.0
    %859 = vmatpush1.msra.mxu0 0.0
    %860 = vmatprep.subr.mxu0 0.0
    %861 = vmatpush1.msra.mxu0 0.0
    %862 = vmatprep.subr.mxu0 0.0
    %863 = vmatpush1.msra.mxu0 0.0
    %864 = vmatprep.subr.mxu0 0.0
    %865 = vmatpush1.msra.mxu0 0.0
    %866 = vmatprep.subr.mxu0 0.0
    %867 = vmatpush1.msra.mxu0 %v170
    %868 = vmatprep.subr.mxu0 0.0
    %869 = vmatpush1.msra.mxu0 %v169
    %870 = vmatprep.subr.mxu0 0.0
    %871 = vmatpush1.msra.mxu0 %v168
    %872 = vmatprep.subr.mxu0 0.0
    %873 = vmatpush1.msra.mxu0 %v167
    %874 = vmatprep.subr.mxu0 0.0
    %875 = vmatpush2.msra.mxu0 0.0
    %876 = vmatprep.subr.mxu0 0.0
    %877 = vmatpush2.msra.mxu0 0.0
    %878 = vmatprep.subr.mxu0 0.0
    %879 = vmatpush2.msra.mxu0 0.0
    %880 = vmatprep.subr.mxu0 0.0
    %881 = vmatpush2.msra.mxu0 0.0
    %882 = vmatprep.subr.mxu0 0.0
    %883 = vmatpush2.msra.mxu0 0.0
    %884 = vmatprep.subr.mxu0 0.0
    %885 = vmatpush2.msra.mxu0 0.0
    %886 = vmatprep.subr.mxu0 0.0
    %887 = vmatpush2.msra.mxu0 0.0
    %888 = vmatprep.subr.mxu0 0.0
    %889 = vmatpush2.msra.mxu0 0.0
    %890 = vmatprep.subr.mxu0 0.0
    %891 = vmatpush2.msra.mxu0 0.0
    %892 = vmatprep.subr.mxu0 0.0
    %893 = vmatpush2.msra.mxu0 0.0
    %894 = vmatprep.subr.mxu0 0.0
    %895 = vmatpush2.msra.mxu0 0.0
    %896 = vmatprep.subr.mxu0 0.0
    %897 = vmatpush2.msra.mxu0 0.0
    %898 = vmatprep.subr.mxu0 0.0
    %899 = vmatpush2.msra.mxu0 0.0
    %900 = vmatprep.subr.mxu0 0.0
    %901 = vmatpush2.msra.mxu0 0.0
    %902 = vmatprep.subr.mxu0 0.0
    %903 = vmatpush2.msra.mxu0 0.0
    %904 = vmatprep.subr.mxu0 0.0
    %905 = vmatpush2.msra.mxu0 0.0
    %906 = vmatprep.mubr.f32.mxu0 0.0
    %907 = vmatmul.mubr.f32.gmra.mxu0 %v840
    %v908 = vpop.f32.mrf.mxu0
    %v909 = vadd.f32 0.0, %v908
    %v910 = vpop.f32.mrf.mxu0
    %911 = vdwg.mxu0
    %v913 = vrot.slane %v909, 4
    %v915 = vadd.f32 %v164, %v913
    %v916 = vxor.u32 %v915, 2147483648
    %v917 = vmul.f32 %v916, 1.442695
    %v918 = vpow.pop %v917
    %v919 = vadd.f32 %v918, 1.0
    %v920 = vrcp.pop %v919
    %v921 = vmul.f32 1.0, %v920
    %v922 = vtanh.pop %v915
    %v924 = vrot.slane %v823, 6
    %v926 = vmul.f32 %v921, %v924
    %928 = vrot.lane.b32.xlu0 %v922, 64
    %v929 = vpop.permute.xlu0 %928
    %v931 = vmul.f32 %v921, %v929
    %933 = vrot.lane.b32.xlu0 %v931, 96
    %v934 = vpop.permute.xlu0 %933
    %v936 = vadd.f32 %v926, %v934
    %v937 = vtanh.pop %v936
    %939 = vrot.lane.b32.xlu0 %v937, 64
    %v940 = vpop.permute.xlu0 %939
    %v942 = vmul.f32 %v921, %v940
    %v943 = vxor.u32 %v942, 2147483648
    %v944 = vmul.f32 %v943, 1.442695
    %v945 = vpow.pop %v944
    %v946 = vadd.f32 %v945, 1.0
    %v947 = vrcp.pop %v946
    %v948 = vmul.f32 1.0, %v947
    %v950 = vrot.slane %v942, 4
    %951 = vrot.lane.b32.xlu0 %v950, 64
    %v952 = vpop.permute.xlu0 %951
    %v953 = vsel %vm171, %v952, 0
    %955 = vmatprep.subr.mxu0 0.0
    %956 = vmatpush1.msra.mxu0 0.0
    %957 = vmatprep.subr.mxu0 0.0
    %958 = vmatpush1.msra.mxu0 0.0
    %959 = vmatprep.subr.mxu0 0.0
    %960 = vmatpush1.msra.mxu0 0.0
    %961 = vmatprep.subr.mxu0 0.0
    %962 = vmatpush1.msra.mxu0 0.0
    %963 = vmatprep.subr.mxu0 0.0
    %964 = vmatpush1.msra.mxu0 0.0
    %965 = vmatprep.subr.mxu0 0.0
    %966 = vmatpush1.msra.mxu0 0.0
    %967 = vmatprep.subr.mxu0 0.0
    %968 = vmatpush1.msra.mxu0 0.0
    %969 = vmatprep.subr.mxu0 0.0
    %970 = vmatpush1.msra.mxu0 0.0
    %971 = vmatprep.subr.mxu0 0.0
    %972 = vmatpush1.msra.mxu0 0.0
    %973 = vmatprep.subr.mxu0 0.0
    %974 = vmatpush1.msra.mxu0 0.0
    %975 = vmatprep.subr.mxu0 0.0
    %976 = vmatpush1.msra.mxu0 0.0
    %977 = vmatprep.subr.mxu0 0.0
    %978 = vmatpush1.msra.mxu0 0.0
    %979 = vmatprep.subr.mxu0 0.0
    %980 = vmatpush1.msra.mxu0 %v170
    %981 = vmatprep.subr.mxu0 0.0
    %982 = vmatpush1.msra.mxu0 %v169
    %983 = vmatprep.subr.mxu0 0.0
    %984 = vmatpush1.msra.mxu0 %v168
    %985 = vmatprep.subr.mxu0 0.0
    %986 = vmatpush1.msra.mxu0 %v167
    %987 = vmatprep.subr.mxu0 0.0
    %988 = vmatpush2.msra.mxu0 0.0
    %989 = vmatprep.subr.mxu0 0.0
    %990 = vmatpush2.msra.mxu0 0.0
    %991 = vmatprep.subr.mxu0 0.0
    %992 = vmatpush2.msra.mxu0 0.0
    %993 = vmatprep.subr.mxu0 0.0
    %994 = vmatpush2.msra.mxu0 0.0
    %995 = vmatprep.subr.mxu0 0.0
    %996 = vmatpush2.msra.mxu0 0.0
    %997 = vmatprep.subr.mxu0 0.0
    %998 = vmatpush2.msra.mxu0 0.0
    %999 = vmatprep.subr.mxu0 0.0
    %1000 = vmatpush2.msra.mxu0 0.0
    %1001 = vmatprep.subr.mxu0 0.0
    %1002 = vmatpush2.msra.mxu0 0.0
    %1003 = vmatprep.subr.mxu0 0.0
    %1004 = vmatpush2.msra.mxu0 0.0
    %1005 = vmatprep.subr.mxu0 0.0
    %1006 = vmatpush2.msra.mxu0 0.0
    %1007 = vmatprep.subr.mxu0 0.0
    %1008 = vmatpush2.msra.mxu0 0.0
    %1009 = vmatprep.subr.mxu0 0.0
    %1010 = vmatpush2.msra.mxu0 0.0
    %1011 = vmatprep.subr.mxu0 0.0
    %1012 = vmatpush2.msra.mxu0 0.0
    %1013 = vmatprep.subr.mxu0 0.0
    %1014 = vmatpush2.msra.mxu0 0.0
    %1015 = vmatprep.subr.mxu0 0.0
    %1016 = vmatpush2.msra.mxu0 0.0
    %1017 = vmatprep.subr.mxu0 0.0
    %1018 = vmatpush2.msra.mxu0 0.0
    %1019 = vmatprep.mubr.f32.mxu0 0.0
    %1020 = vmatmul.mubr.f32.gmra.mxu0 %v953
    %v1021 = vpop.f32.mrf.mxu0
    %v1022 = vadd.f32 0.0, %v1021
    %v1023 = vpop.f32.mrf.mxu0
    %1024 = vdwg.mxu0
    %v1026 = vrot.slane %v1022, 2
    %v1028 = vadd.f32 %v164, %v1026
    %v1029 = vxor.u32 %v1028, 2147483648
    %v1030 = vmul.f32 %v1029, 1.442695
    %v1031 = vpow.pop %v1030
    %v1032 = vadd.f32 %v1031, 1.0
    %v1033 = vrcp.pop %v1032
    %v1034 = vmul.f32 1.0, %v1033
    %v1035 = vtanh.pop %v1028
    %v1037 = vrot.slane %v936, 6
    %v1039 = vmul.f32 %v1034, %v1037
    %1041 = vrot.lane.b32.xlu0 %v1035, 64
    %v1042 = vpop.permute.xlu0 %1041
    %v1044 = vmul.f32 %v1034, %v1042
    %1046 = vrot.lane.b32.xlu0 %v1044, 96
    %v1047 = vpop.permute.xlu0 %1046
    %v1049 = vadd.f32 %v1039, %v1047
    %v1050 = vtanh.pop %v1049
    %1052 = vrot.lane.b32.xlu0 %v1050, 64
    %v1053 = vpop.permute.xlu0 %1052
    %v1055 = vmul.f32 %v1034, %v1053
    %v1056 = vxor.u32 %v1055, 2147483648
    %v1057 = vmul.f32 %v1056, 1.442695
    %v1058 = vpow.pop %v1057
    %v1059 = vadd.f32 %v1058, 1.0
    %v1060 = vrcp.pop %v1059
    %v1061 = vmul.f32 1.0, %v1060
    %v1062 = vld [vmem:[%s4] sm:$0xff]
    %v1063 = vld [vmem:[%s4 + $0x8] sm:$0xff]
    %v1064 = vld [vmem:[%s4 + $0x10] sm:$0xff]
    %v1065 = vld [vmem:[%s4 + $0x18] sm:$0xff]
    %v1066 = vld [vmem:[%s6] sm:$0x1]
    %v1068 = vlaneseq
    %v1069 = vshrl.u32 %v1068, 7
    %v1070 = vsub.s32 0, %v1069
    %v1071 = vrot.slane %v1066, %v1070
    %1074 = vrot.lane.b32.xlu0 %v275, 64
    %v1075 = vpop.permute.xlu0 %1074
    %v1076 = vsel %vm171, %v1075, 0
    %1078 = vmatprep.subr.mxu0 0.0
    %1079 = vmatpush1.msra.mxu0 0.0
    %1080 = vmatprep.subr.mxu0 0.0
    %1081 = vmatpush1.msra.mxu0 0.0
    %1082 = vmatprep.subr.mxu0 0.0
    %1083 = vmatpush1.msra.mxu0 0.0
    %1084 = vmatprep.subr.mxu0 0.0
    %1085 = vmatpush1.msra.mxu0 0.0
    %1086 = vmatprep.subr.mxu0 0.0
    %1087 = vmatpush1.msra.mxu0 0.0
    %1088 = vmatprep.subr.mxu0 0.0
    %1089 = vmatpush1.msra.mxu0 0.0
    %1090 = vmatprep.subr.mxu0 0.0
    %1091 = vmatpush1.msra.mxu0 0.0
    %1092 = vmatprep.subr.mxu0 0.0
    %1093 = vmatpush1.msra.mxu0 0.0
    %1094 = vmatprep.subr.mxu0 0.0
    %1095 = vmatpush1.msra.mxu0 0.0
    %1096 = vmatprep.subr.mxu0 0.0
    %1097 = vmatpush1.msra.mxu0 0.0
    %1098 = vmatprep.subr.mxu0 0.0
    %1099 = vmatpush1.msra.mxu0 0.0
    %1100 = vmatprep.subr.mxu0 0.0
    %1101 = vmatpush1.msra.mxu0 0.0
    %1102 = vmatprep.subr.mxu0 0.0
    %1103 = vmatpush1.msra.mxu0 %v1065
    %1104 = vmatprep.subr.mxu0 0.0
    %1105 = vmatpush1.msra.mxu0 %v1064
    %1106 = vmatprep.subr.mxu0 0.0
    %1107 = vmatpush1.msra.mxu0 %v1063
    %1108 = vmatprep.subr.mxu0 0.0
    %1109 = vmatpush1.msra.mxu0 %v1062
    %1110 = vmatprep.subr.mxu0 0.0
    %1111 = vmatpush2.msra.mxu0 0.0
    %1112 = vmatprep.subr.mxu0 0.0
    %1113 = vmatpush2.msra.mxu0 0.0
    %1114 = vmatprep.subr.mxu0 0.0
    %1115 = vmatpush2.msra.mxu0 0.0
    %1116 = vmatprep.subr.mxu0 0.0
    %1117 = vmatpush2.msra.mxu0 0.0
    %1118 = vmatprep.subr.mxu0 0.0
    %1119 = vmatpush2.msra.mxu0 0.0
    %1120 = vmatprep.subr.mxu0 0.0
    %1121 = vmatpush2.msra.mxu0 0.0
    %1122 = vmatprep.subr.mxu0 0.0
    %1123 = vmatpush2.msra.mxu0 0.0
    %1124 = vmatprep.subr.mxu0 0.0
    %1125 = vmatpush2.msra.mxu0 0.0
    %1126 = vmatprep.subr.mxu0 0.0
    %1127 = vmatpush2.msra.mxu0 0.0
    %1128 = vmatprep.subr.mxu0 0.0
    %1129 = vmatpush2.msra.mxu0 0.0
    %1130 = vmatprep.subr.mxu0 0.0
    %1131 = vmatpush2.msra.mxu0 0.0
    %1132 = vmatprep.subr.mxu0 0.0
    %1133 = vmatpush2.msra.mxu0 0.0
    %1134 = vmatprep.subr.mxu0 0.0
    %1135 = vmatpush2.msra.mxu0 0.0
    %1136 = vmatprep.subr.mxu0 0.0
    %1137 = vmatpush2.msra.mxu0 0.0
    %1138 = vmatprep.subr.mxu0 0.0
    %1139 = vmatpush2.msra.mxu0 0.0
    %1140 = vmatprep.subr.mxu0 0.0
    %1141 = vmatpush2.msra.mxu0 0.0
    %1142 = vmatprep.mubr.f32.mxu0 0.0
    %1143 = vmatmul.mubr.f32.gmra.mxu0 %v1076
    %v1144 = vpop.f32.mrf.mxu0
    %v1145 = vadd.f32 %v1071, %v1144
    %v1146 = vpop.f32.mrf.mxu0
    %1147 = vdwg.mxu0
    %v1149 = vrot.slane %v387, 2
    %1150 = vrot.lane.b32.xlu0 %v1149, 64
    %v1151 = vpop.permute.xlu0 %1150
    %v1152 = vsel %vm171, %v1151, 0
    %1154 = vmatprep.subr.mxu0 0.0
    %1155 = vmatpush1.msra.mxu0 0.0
    %1156 = vmatprep.subr.mxu0 0.0
    %1157 = vmatpush1.msra.mxu0 0.0
    %1158 = vmatprep.subr.mxu0 0.0
    %1159 = vmatpush1.msra.mxu0 0.0
    %1160 = vmatprep.subr.mxu0 0.0
    %1161 = vmatpush1.msra.mxu0 0.0
    %1162 = vmatprep.subr.mxu0 0.0
    %1163 = vmatpush1.msra.mxu0 0.0
    %1164 = vmatprep.subr.mxu0 0.0
    %1165 = vmatpush1.msra.mxu0 0.0
    %1166 = vmatprep.subr.mxu0 0.0
    %1167 = vmatpush1.msra.mxu0 0.0
    %1168 = vmatprep.subr.mxu0 0.0
    %1169 = vmatpush1.msra.mxu0 0.0
    %1170 = vmatprep.subr.mxu0 0.0
    %1171 = vmatpush1.msra.mxu0 0.0
    %1172 = vmatprep.subr.mxu0 0.0
    %1173 = vmatpush1.msra.mxu0 0.0
    %1174 = vmatprep.subr.mxu0 0.0
    %1175 = vmatpush1.msra.mxu0 0.0
    %1176 = vmatprep.subr.mxu0 0.0
    %1177 = vmatpush1.msra.mxu0 0.0
    %1178 = vmatprep.subr.mxu0 0.0
    %1179 = vmatpush1.msra.mxu0 %v1065
    %1180 = vmatprep.subr.mxu0 0.0
    %1181 = vmatpush1.msra.mxu0 %v1064
    %1182 = vmatprep.subr.mxu0 0.0
    %1183 = vmatpush1.msra.mxu0 %v1063
    %1184 = vmatprep.subr.mxu0 0.0
    %1185 = vmatpush1.msra.mxu0 %v1062
    %1186 = vmatprep.subr.mxu0 0.0
    %1187 = vmatpush2.msra.mxu0 0.0
    %1188 = vmatprep.subr.mxu0 0.0
    %1189 = vmatpush2.msra.mxu0 0.0
    %1190 = vmatprep.subr.mxu0 0.0
    %1191 = vmatpush2.msra.mxu0 0.0
    %1192 = vmatprep.subr.mxu0 0.0
    %1193 = vmatpush2.msra.mxu0 0.0
    %1194 = vmatprep.subr.mxu0 0.0
    %1195 = vmatpush2.msra.mxu0 0.0
    %1196 = vmatprep.subr.mxu0 0.0
    %1197 = vmatpush2.msra.mxu0 0.0
    %1198 = vmatprep.subr.mxu0 0.0
    %1199 = vmatpush2.msra.mxu0 0.0
    %1200 = vmatprep.subr.mxu0 0.0
    %1201 = vmatpush2.msra.mxu0 0.0
    %1202 = vmatprep.subr.mxu0 0.0
    %1203 = vmatpush2.msra.mxu0 0.0
    %1204 = vmatprep.subr.mxu0 0.0
    %1205 = vmatpush2.msra.mxu0 0.0
    %1206 = vmatprep.subr.mxu0 0.0
    %1207 = vmatpush2.msra.mxu0 0.0
    %1208 = vmatprep.subr.mxu0 0.0
    %1209 = vmatpush2.msra.mxu0 0.0
    %1210 = vmatprep.subr.mxu0 0.0
    %1211 = vmatpush2.msra.mxu0 0.0
    %1212 = vmatprep.subr.mxu0 0.0
    %1213 = vmatpush2.msra.mxu0 0.0
    %1214 = vmatprep.subr.mxu0 0.0
    %1215 = vmatpush2.msra.mxu0 0.0
    %1216 = vmatprep.subr.mxu0 0.0
    %1217 = vmatpush2.msra.mxu0 0.0
    %1218 = vmatprep.mubr.f32.mxu0 0.0
    %1219 = vmatmul.mubr.f32.gmra.mxu0 %v1152
    %v1220 = vpop.f32.mrf.mxu0
    %v1221 = vadd.f32 %v1071, %v1220
    %v1222 = vpop.f32.mrf.mxu0
    %1223 = vdwg.mxu0
    %v1225 = vrot.slane %v500, 4
    %1226 = vrot.lane.b32.xlu0 %v1225, 64
    %v1227 = vpop.permute.xlu0 %1226
    %v1228 = vsel %vm171, %v1227, 0
    %1230 = vmatprep.subr.mxu0 0.0
    %1231 = vmatpush1.msra.mxu0 0.0
    %1232 = vmatprep.subr.mxu0 0.0
    %1233 = vmatpush1.msra.mxu0 0.0
    %1234 = vmatprep.subr.mxu0 0.0
    %1235 = vmatpush1.msra.mxu0 0.0
    %1236 = vmatprep.subr.mxu0 0.0
    %1237 = vmatpush1.msra.mxu0 0.0
    %1238 = vmatprep.subr.mxu0 0.0
    %1239 = vmatpush1.msra.mxu0 0.0
    %1240 = vmatprep.subr.mxu0 0.0
    %1241 = vmatpush1.msra.mxu0 0.0
    %1242 = vmatprep.subr.mxu0 0.0
    %1243 = vmatpush1.msra.mxu0 0.0
    %1244 = vmatprep.subr.mxu0 0.0
    %1245 = vmatpush1.msra.mxu0 0.0
    %1246 = vmatprep.subr.mxu0 0.0
    %1247 = vmatpush1.msra.mxu0 0.0
    %1248 = vmatprep.subr.mxu0 0.0
    %1249 = vmatpush1.msra.mxu0 0.0
    %1250 = vmatprep.subr.mxu0 0.0
    %1251 = vmatpush1.msra.mxu0 0.0
    %1252 = vmatprep.subr.mxu0 0.0
    %1253 = vmatpush1.msra.mxu0 0.0
    %1254 = vmatprep.subr.mxu0 0.0
    %1255 = vmatpush1.msra.mxu0 %v1065
    %1256 = vmatprep.subr.mxu0 0.0
    %1257 = vmatpush1.msra.mxu0 %v1064
    %1258 = vmatprep.subr.mxu0 0.0
    %1259 = vmatpush1.msra.mxu0 %v1063
    %1260 = vmatprep.subr.mxu0 0.0
    %1261 = vmatpush1.msra.mxu0 %v1062
    %1262 = vmatprep.subr.mxu0 0.0
    %1263 = vmatpush2.msra.mxu0 0.0
    %1264 = vmatprep.subr.mxu0 0.0
    %1265 = vmatpush2.msra.mxu0 0.0
    %1266 = vmatprep.subr.mxu0 0.0
    %1267 = vmatpush2.msra.mxu0 0.0
    %1268 = vmatprep.subr.mxu0 0.0
    %1269 = vmatpush2.msra.mxu0 0.0
    %1270 = vmatprep.subr.mxu0 0.0
    %1271 = vmatpush2.msra.mxu0 0.0
    %1272 = vmatprep.subr.mxu0 0.0
    %1273 = vmatpush2.msra.mxu0 0.0
    %1274 = vmatprep.subr.mxu0 0.0
    %1275 = vmatpush2.msra.mxu0 0.0
    %1276 = vmatprep.subr.mxu0 0.0
    %1277 = vmatpush2.msra.mxu0 0.0
    %1278 = vmatprep.subr.mxu0 0.0
    %1279 = vmatpush2.msra.mxu0 0.0
    %1280 = vmatprep.subr.mxu0 0.0
    %1281 = vmatpush2.msra.mxu0 0.0
    %1282 = vmatprep.subr.mxu0 0.0
    %1283 = vmatpush2.msra.mxu0 0.0
    %1284 = vmatprep.subr.mxu0 0.0
    %1285 = vmatpush2.msra.mxu0 0.0
    %1286 = vmatprep.subr.mxu0 0.0
    %1287 = vmatpush2.msra.mxu0 0.0
    %1288 = vmatprep.subr.mxu0 0.0
    %1289 = vmatpush2.msra.mxu0 0.0
    %1290 = vmatprep.subr.mxu0 0.0
    %1291 = vmatpush2.msra.mxu0 0.0
    %1292 = vmatprep.subr.mxu0 0.0
    %1293 = vmatpush2.msra.mxu0 0.0
    %1294 = vmatprep.mubr.f32.mxu0 0.0
    %1295 = vmatmul.mubr.f32.gmra.mxu0 %v1228
    %v1296 = vpop.f32.mrf.mxu0
    %v1297 = vadd.f32 %v1071, %v1296
    %v1298 = vpop.f32.mrf.mxu0
    %1299 = vdwg.mxu0
    %v1301 = vrot.slane %v613, 6
    %1302 = vrot.lane.b32.xlu0 %v1301, 64
    %v1303 = vpop.permute.xlu0 %1302
    %v1304 = vsel %vm171, %v1303, 0
    %1306 = vmatprep.subr.mxu0 0.0
    %1307 = vmatpush1.msra.mxu0 0.0
    %1308 = vmatprep.subr.mxu0 0.0
    %1309 = vmatpush1.msra.mxu0 0.0
    %1310 = vmatprep.subr.mxu0 0.0
    %1311 = vmatpush1.msra.mxu0 0.0
    %1312 = vmatprep.subr.mxu0 0.0
    %1313 = vmatpush1.msra.mxu0 0.0
    %1314 = vmatprep.subr.mxu0 0.0
    %1315 = vmatpush1.msra.mxu0 0.0
    %1316 = vmatprep.subr.mxu0 0.0
    %1317 = vmatpush1.msra.mxu0 0.0
    %1318 = vmatprep.subr.mxu0 0.0
    %1319 = vmatpush1.msra.mxu0 0.0
    %1320 = vmatprep.subr.mxu0 0.0
    %1321 = vmatpush1.msra.mxu0 0.0
    %1322 = vmatprep.subr.mxu0 0.0
    %1323 = vmatpush1.msra.mxu0 0.0
    %1324 = vmatprep.subr.mxu0 0.0
    %1325 = vmatpush1.msra.mxu0 0.0
    %1326 = vmatprep.subr.mxu0 0.0
    %1327 = vmatpush1.msra.mxu0 0.0
    %1328 = vmatprep.subr.mxu0 0.0
    %1329 = vmatpush1.msra.mxu0 0.0
    %1330 = vmatprep.subr.mxu0 0.0
    %1331 = vmatpush1.msra.mxu0 %v1065
    %1332 = vmatprep.subr.mxu0 0.0
    %1333 = vmatpush1.msra.mxu0 %v1064
    %1334 = vmatprep.subr.mxu0 0.0
    %1335 = vmatpush1.msra.mxu0 %v1063
    %1336 = vmatprep.subr.mxu0 0.0
    %1337 = vmatpush1.msra.mxu0 %v1062
    %1338 = vmatprep.subr.mxu0 0.0
    %1339 = vmatpush2.msra.mxu0 0.0
    %1340 = vmatprep.subr.mxu0 0.0
    %1341 = vmatpush2.msra.mxu0 0.0
    %1342 = vmatprep.subr.mxu0 0.0
    %1343 = vmatpush2.msra.mxu0 0.0
    %1344 = vmatprep.subr.mxu0 0.0
    %1345 = vmatpush2.msra.mxu0 0.0
    %1346 = vmatprep.subr.mxu0 0.0
    %1347 = vmatpush2.msra.mxu0 0.0
    %1348 = vmatprep.subr.mxu0 0.0
    %1349 = vmatpush2.msra.mxu0 0.0
    %1350 = vmatprep.subr.mxu0 0.0
    %1351 = vmatpush2.msra.mxu0 0.0
    %1352 = vmatprep.subr.mxu0 0.0
    %1353 = vmatpush2.msra.mxu0 0.0
    %1354 = vmatprep.subr.mxu0 0.0
    %1355 = vmatpush2.msra.mxu0 0.0
    %1356 = vmatprep.subr.mxu0 0.0
    %1357 = vmatpush2.msra.mxu0 0.0
    %1358 = vmatprep.subr.mxu0 0.0
    %1359 = vmatpush2.msra.mxu0 0.0
    %1360 = vmatprep.subr.mxu0 0.0
    %1361 = vmatpush2.msra.mxu0 0.0
    %1362 = vmatprep.subr.mxu0 0.0
    %1363 = vmatpush2.msra.mxu0 0.0
    %1364 = vmatprep.subr.mxu0 0.0
    %1365 = vmatpush2.msra.mxu0 0.0
    %1366 = vmatprep.subr.mxu0 0.0
    %1367 = vmatpush2.msra.mxu0 0.0
    %1368 = vmatprep.subr.mxu0 0.0
    %1369 = vmatpush2.msra.mxu0 0.0
    %1370 = vmatprep.mubr.f32.mxu0 0.0
    %1371 = vmatmul.mubr.f32.gmra.mxu0 %v1304
    %v1372 = vpop.f32.mrf.mxu0
    %v1373 = vadd.f32 %v1071, %v1372
    %v1374 = vpop.f32.mrf.mxu0
    %1375 = vdwg.mxu0
    %1377 = vrot.lane.b32.xlu0 %v723, 64
    %v1378 = vpop.permute.xlu0 %1377
    %v1379 = vsel %vm171, %v1378, 0
    %1381 = vmatprep.subr.mxu0 0.0
    %1382 = vmatpush1.msra.mxu0 0.0
    %1383 = vmatprep.subr.mxu0 0.0
    %1384 = vmatpush1.msra.mxu0 0.0
    %1385 = vmatprep.subr.mxu0 0.0
    %1386 = vmatpush1.msra.mxu0 0.0
    %1387 = vmatprep.subr.mxu0 0.0
    %1388 = vmatpush1.msra.mxu0 0.0
    %1389 = vmatprep.subr.mxu0 0.0
    %1390 = vmatpush1.msra.mxu0 0.0
    %1391 = vmatprep.subr.mxu0 0.0
    %1392 = vmatpush1.msra.mxu0 0.0
    %1393 = vmatprep.subr.mxu0 0.0
    %1394 = vmatpush1.msra.mxu0 0.0
    %1395 = vmatprep.subr.mxu0 0.0
    %1396 = vmatpush1.msra.mxu0 0.0
    %1397 = vmatprep.subr.mxu0 0.0
    %1398 = vmatpush1.msra.mxu0 0.0
    %1399 = vmatprep.subr.mxu0 0.0
    %1400 = vmatpush1.msra.mxu0 0.0
    %1401 = vmatprep.subr.mxu0 0.0
    %1402 = vmatpush1.msra.mxu0 0.0
    %1403 = vmatprep.subr.mxu0 0.0
    %1404 = vmatpush1.msra.mxu0 0.0
    %1405 = vmatprep.subr.mxu0 0.0
    %1406 = vmatpush1.msra.mxu0 %v1065
    %1407 = vmatprep.subr.mxu0 0.0
    %1408 = vmatpush1.msra.mxu0 %v1064
    %1409 = vmatprep.subr.mxu0 0.0
    %1410 = vmatpush1.msra.mxu0 %v1063
    %1411 = vmatprep.subr.mxu0 0.0
    %1412 = vmatpush1.msra.mxu0 %v1062
    %1413 = vmatprep.subr.mxu0 0.0
    %1414 = vmatpush2.msra.mxu0 0.0
    %1415 = vmatprep.subr.mxu0 0.0
    %1416 = vmatpush2.msra.mxu0 0.0
    %1417 = vmatprep.subr.mxu0 0.0
    %1418 = vmatpush2.msra.mxu0 0.0
    %1419 = vmatprep.subr.mxu0 0.0
    %1420 = vmatpush2.msra.mxu0 0.0
    %1421 = vmatprep.subr.mxu0 0.0
    %1422 = vmatpush2.msra.mxu0 0.0
    %1423 = vmatprep.subr.mxu0 0.0
    %1424 = vmatpush2.msra.mxu0 0.0
    %1425 = vmatprep.subr.mxu0 0.0
    %1426 = vmatpush2.msra.mxu0 0.0
    %1427 = vmatprep.subr.mxu0 0.0
    %1428 = vmatpush2.msra.mxu0 0.0
    %1429 = vmatprep.subr.mxu0 0.0
    %1430 = vmatpush2.msra.mxu0 0.0
    %1431 = vmatprep.subr.mxu0 0.0
    %1432 = vmatpush2.msra.mxu0 0.0
    %1433 = vmatprep.subr.mxu0 0.0
    %1434 = vmatpush2.msra.mxu0 0.0
    %1435 = vmatprep.subr.mxu0 0.0
    %1436 = vmatpush2.msra.mxu0 0.0
    %1437 = vmatprep.subr.mxu0 0.0
    %1438 = vmatpush2.msra.mxu0 0.0
    %1439 = vmatprep.subr.mxu0 0.0
    %1440 = vmatpush2.msra.mxu0 0.0
    %1441 = vmatprep.subr.mxu0 0.0
    %1442 = vmatpush2.msra.mxu0 0.0
    %1443 = vmatprep.subr.mxu0 0.0
    %1444 = vmatpush2.msra.mxu0 0.0
    %1445 = vmatprep.mubr.f32.mxu0 0.0
    %1446 = vmatmul.mubr.f32.gmra.mxu0 %v1379
    %v1447 = vpop.f32.mrf.mxu0
    %v1448 = vadd.f32 %v1071, %v1447
    %v1449 = vpop.f32.mrf.mxu0
    %1450 = vdwg.mxu0
    %v1452 = vrot.slane %v835, 2
    %1453 = vrot.lane.b32.xlu0 %v1452, 64
    %v1454 = vpop.permute.xlu0 %1453
    %v1455 = vsel %vm171, %v1454, 0
    %1457 = vmatprep.subr.mxu0 0.0
    %1458 = vmatpush1.msra.mxu0 0.0
    %1459 = vmatprep.subr.mxu0 0.0
    %1460 = vmatpush1.msra.mxu0 0.0
    %1461 = vmatprep.subr.mxu0 0.0
    %1462 = vmatpush1.msra.mxu0 0.0
    %1463 = vmatprep.subr.mxu0 0.0
    %1464 = vmatpush1.msra.mxu0 0.0
    %1465 = vmatprep.subr.mxu0 0.0
    %1466 = vmatpush1.msra.mxu0 0.0
    %1467 = vmatprep.subr.mxu0 0.0
    %1468 = vmatpush1.msra.mxu0 0.0
    %1469 = vmatprep.subr.mxu0 0.0
    %1470 = vmatpush1.msra.mxu0 0.0
    %1471 = vmatprep.subr.mxu0 0.0
    %1472 = vmatpush1.msra.mxu0 0.0
    %1473 = vmatprep.subr.mxu0 0.0
    %1474 = vmatpush1.msra.mxu0 0.0
    %1475 = vmatprep.subr.mxu0 0.0
    %1476 = vmatpush1.msra.mxu0 0.0
    %1477 = vmatprep.subr.mxu0 0.0
    %1478 = vmatpush1.msra.mxu0 0.0
    %1479 = vmatprep.subr.mxu0 0.0
    %1480 = vmatpush1.msra.mxu0 0.0
    %1481 = vmatprep.subr.mxu0 0.0
    %1482 = vmatpush1.msra.mxu0 %v1065
    %1483 = vmatprep.subr.mxu0 0.0
    %1484 = vmatpush1.msra.mxu0 %v1064
    %1485 = vmatprep.subr.mxu0 0.0
    %1486 = vmatpush1.msra.mxu0 %v1063
    %1487 = vmatprep.subr.mxu0 0.0
    %1488 = vmatpush1.msra.mxu0 %v1062
    %1489 = vmatprep.subr.mxu0 0.0
    %1490 = vmatpush2.msra.mxu0 0.0
    %1491 = vmatprep.subr.mxu0 0.0
    %1492 = vmatpush2.msra.mxu0 0.0
    %1493 = vmatprep.subr.mxu0 0.0
    %1494 = vmatpush2.msra.mxu0 0.0
    %1495 = vmatprep.subr.mxu0 0.0
    %1496 = vmatpush2.msra.mxu0 0.0
    %1497 = vmatprep.subr.mxu0 0.0
    %1498 = vmatpush2.msra.mxu0 0.0
    %1499 = vmatprep.subr.mxu0 0.0
    %1500 = vmatpush2.msra.mxu0 0.0
    %1501 = vmatprep.subr.mxu0 0.0
    %1502 = vmatpush2.msra.mxu0 0.0
    %1503 = vmatprep.subr.mxu0 0.0
    %1504 = vmatpush2.msra.mxu0 0.0
    %1505 = vmatprep.subr.mxu0 0.0
    %1506 = vmatpush2.msra.mxu0 0.0
    %1507 = vmatprep.subr.mxu0 0.0
    %1508 = vmatpush2.msra.mxu0 0.0
    %1509 = vmatprep.subr.mxu0 0.0
    %1510 = vmatpush2.msra.mxu0 0.0
    %1511 = vmatprep.subr.mxu0 0.0
    %1512 = vmatpush2.msra.mxu0 0.0
    %1513 = vmatprep.subr.mxu0 0.0
    %1514 = vmatpush2.msra.mxu0 0.0
    %1515 = vmatprep.subr.mxu0 0.0
    %1516 = vmatpush2.msra.mxu0 0.0
    %1517 = vmatprep.subr.mxu0 0.0
    %1518 = vmatpush2.msra.mxu0 0.0
    %1519 = vmatprep.subr.mxu0 0.0
    %1520 = vmatpush2.msra.mxu0 0.0
    %1521 = vmatprep.mubr.f32.mxu0 0.0
    %1522 = vmatmul.mubr.f32.gmra.mxu0 %v1455
    %v1523 = vpop.f32.mrf.mxu0
    %v1524 = vadd.f32 %v1071, %v1523
    %v1525 = vpop.f32.mrf.mxu0
    %1526 = vdwg.mxu0
    %v1528 = vrot.slane %v948, 4
    %1529 = vrot.lane.b32.xlu0 %v1528, 64
    %v1530 = vpop.permute.xlu0 %1529
    %v1531 = vsel %vm171, %v1530, 0
    %1533 = vmatprep.subr.mxu0 0.0
    %1534 = vmatpush1.msra.mxu0 0.0
    %1535 = vmatprep.subr.mxu0 0.0
    %1536 = vmatpush1.msra.mxu0 0.0
    %1537 = vmatprep.subr.mxu0 0.0
    %1538 = vmatpush1.msra.mxu0 0.0
    %1539 = vmatprep.subr.mxu0 0.0
    %1540 = vmatpush1.msra.mxu0 0.0
    %1541 = vmatprep.subr.mxu0 0.0
    %1542 = vmatpush1.msra.mxu0 0.0
    %1543 = vmatprep.subr.mxu0 0.0
    %1544 = vmatpush1.msra.mxu0 0.0
    %1545 = vmatprep.subr.mxu0 0.0
    %1546 = vmatpush1.msra.mxu0 0.0
    %1547 = vmatprep.subr.mxu0 0.0
    %1548 = vmatpush1.msra.mxu0 0.0
    %1549 = vmatprep.subr.mxu0 0.0
    %1550 = vmatpush1.msra.mxu0 0.0
    %1551 = vmatprep.subr.mxu0 0.0
    %1552 = vmatpush1.msra.mxu0 0.0
    %1553 = vmatprep.subr.mxu0 0.0
    %1554 = vmatpush1.msra.mxu0 0.0
    %1555 = vmatprep.subr.mxu0 0.0
    %1556 = vmatpush1.msra.mxu0 0.0
    %1557 = vmatprep.subr.mxu0 0.0
    %1558 = vmatpush1.msra.mxu0 %v1065
    %1559 = vmatprep.subr.mxu0 0.0
    %1560 = vmatpush1.msra.mxu0 %v1064
    %1561 = vmatprep.subr.mxu0 0.0
    %1562 = vmatpush1.msra.mxu0 %v1063
    %1563 = vmatprep.subr.mxu0 0.0
    %1564 = vmatpush1.msra.mxu0 %v1062
    %1565 = vmatprep.subr.mxu0 0.0
    %1566 = vmatpush2.msra.mxu0 0.0
    %1567 = vmatprep.subr.mxu0 0.0
    %1568 = vmatpush2.msra.mxu0 0.0
    %1569 = vmatprep.subr.mxu0 0.0
    %1570 = vmatpush2.msra.mxu0 0.0
    %1571 = vmatprep.subr.mxu0 0.0
    %1572 = vmatpush2.msra.mxu0 0.0
    %1573 = vmatprep.subr.mxu0 0.0
    %1574 = vmatpush2.msra.mxu0 0.0
    %1575 = vmatprep.subr.mxu0 0.0
    %1576 = vmatpush2.msra.mxu0 0.0
    %1577 = vmatprep.subr.mxu0 0.0
    %1578 = vmatpush2.msra.mxu0 0.0
    %1579 = vmatprep.subr.mxu0 0.0
    %1580 = vmatpush2.msra.mxu0 0.0
    %1581 = vmatprep.subr.mxu0 0.0
    %1582 = vmatpush2.msra.mxu0 0.0
    %1583 = vmatprep.subr.mxu0 0.0
    %1584 = vmatpush2.msra.mxu0 0.0
    %1585 = vmatprep.subr.mxu0 0.0
    %1586 = vmatpush2.msra.mxu0 0.0
    %1587 = vmatprep.subr.mxu0 0.0
    %1588 = vmatpush2.msra.mxu0 0.0
    %1589 = vmatprep.subr.mxu0 0.0
    %1590 = vmatpush2.msra.mxu0 0.0
    %1591 = vmatprep.subr.mxu0 0.0
    %1592 = vmatpush2.msra.mxu0 0.0
    %1593 = vmatprep.subr.mxu0 0.0
    %1594 = vmatpush2.msra.mxu0 0.0
    %1595 = vmatprep.subr.mxu0 0.0
    %1596 = vmatpush2.msra.mxu0 0.0
    %1597 = vmatprep.mubr.f32.mxu0 0.0
    %1598 = vmatmul.mubr.f32.gmra.mxu0 %v1531
    %v1599 = vpop.f32.mrf.mxu0
    %v1600 = vadd.f32 %v1071, %v1599
    %v1601 = vpop.f32.mrf.mxu0
    %1602 = vdwg.mxu0
    %v1604 = vrot.slane %v1061, 6
    %1605 = vrot.lane.b32.xlu0 %v1604, 64
    %v1606 = vpop.permute.xlu0 %1605
    %v1607 = vsel %vm171, %v1606, 0
    %1609 = vmatprep.subr.mxu0 0.0
    %1610 = vmatpush1.msra.mxu0 0.0
    %1611 = vmatprep.subr.mxu0 0.0
    %1612 = vmatpush1.msra.mxu0 0.0
    %1613 = vmatprep.subr.mxu0 0.0
    %1614 = vmatpush1.msra.mxu0 0.0
    %1615 = vmatprep.subr.mxu0 0.0
    %1616 = vmatpush1.msra.mxu0 0.0
    %1617 = vmatprep.subr.mxu0 0.0
    %1618 = vmatpush1.msra.mxu0 0.0
    %1619 = vmatprep.subr.mxu0 0.0
    %1620 = vmatpush1.msra.mxu0 0.0
    %1621 = vmatprep.subr.mxu0 0.0
    %1622 = vmatpush1.msra.mxu0 0.0
    %1623 = vmatprep.subr.mxu0 0.0
    %1624 = vmatpush1.msra.mxu0 0.0
    %1625 = vmatprep.subr.mxu0 0.0
    %1626 = vmatpush1.msra.mxu0 0.0
    %1627 = vmatprep.subr.mxu0 0.0
    %1628 = vmatpush1.msra.mxu0 0.0
    %1629 = vmatprep.subr.mxu0 0.0
    %1630 = vmatpush1.msra.mxu0 0.0
    %1631 = vmatprep.subr.mxu0 0.0
    %1632 = vmatpush1.msra.mxu0 0.0
    %1633 = vmatprep.subr.mxu0 0.0
    %1634 = vmatpush1.msra.mxu0 %v1065
    %1635 = vmatprep.subr.mxu0 0.0
    %1636 = vmatpush1.msra.mxu0 %v1064
    %1637 = vmatprep.subr.mxu0 0.0
    %1638 = vmatpush1.msra.mxu0 %v1063
    %1639 = vmatprep.subr.mxu0 0.0
    %1640 = vmatpush1.msra.mxu0 %v1062
    %1641 = vmatprep.subr.mxu0 0.0
    %1642 = vmatpush2.msra.mxu0 0.0
    %1643 = vmatprep.subr.mxu0 0.0
    %1644 = vmatpush2.msra.mxu0 0.0
    %1645 = vmatprep.subr.mxu0 0.0
    %1646 = vmatpush2.msra.mxu0 0.0
    %1647 = vmatprep.subr.mxu0 0.0
    %1648 = vmatpush2.msra.mxu0 0.0
    %1649 = vmatprep.subr.mxu0 0.0
    %1650 = vmatpush2.msra.mxu0 0.0
    %1651 = vmatprep.subr.mxu0 0.0
    %1652 = vmatpush2.msra.mxu0 0.0
    %1653 = vmatprep.subr.mxu0 0.0
    %1654 = vmatpush2.msra.mxu0 0.0
    %1655 = vmatprep.subr.mxu0 0.0
    %1656 = vmatpush2.msra.mxu0 0.0
    %1657 = vmatprep.subr.mxu0 0.0
    %1658 = vmatpush2.msra.mxu0 0.0
    %1659 = vmatprep.subr.mxu0 0.0
    %1660 = vmatpush2.msra.mxu0 0.0
    %1661 = vmatprep.subr.mxu0 0.0
    %1662 = vmatpush2.msra.mxu0 0.0
    %1663 = vmatprep.subr.mxu0 0.0
    %1664 = vmatpush2.msra.mxu0 0.0
    %1665 = vmatprep.subr.mxu0 0.0
    %1666 = vmatpush2.msra.mxu0 0.0
    %1667 = vmatprep.subr.mxu0 0.0
    %1668 = vmatpush2.msra.mxu0 0.0
    %1669 = vmatprep.subr.mxu0 0.0
    %1670 = vmatpush2.msra.mxu0 0.0
    %1671 = vmatprep.subr.mxu0 0.0
    %1672 = vmatpush2.msra.mxu0 0.0
    %1673 = vmatprep.mubr.f32.mxu0 0.0
    %1674 = vmatmul.mubr.f32.gmra.mxu0 %v1607
    %v1675 = vpop.f32.mrf.mxu0
    %v1676 = vadd.f32 %v1071, %v1675
    %v1677 = vpop.f32.mrf.mxu0
    %1678 = vdwg.mxu0
    %v1679 = vld [vmem:[%s5] sm:$0xff]
    %v1680 = vld [vmem:[%s5 + $0x8] sm:$0xff]
    %v1681 = vld [vmem:[%s5 + $0x10] sm:$0xff]
    %v1682 = vld [vmem:[%s5 + $0x18] sm:$0xff]
    %1683 = vmatprep.subr.mxu0 0.0
    %1684 = vmatpush1.msra.mxu0 0.0
    %1685 = vmatprep.subr.mxu0 0.0
    %1686 = vmatpush1.msra.mxu0 0.0
    %1687 = vmatprep.subr.mxu0 0.0
    %1688 = vmatpush1.msra.mxu0 0.0
    %1689 = vmatprep.subr.mxu0 0.0
    %1690 = vmatpush1.msra.mxu0 0.0
    %1691 = vmatprep.subr.mxu0 0.0
    %1692 = vmatpush1.msra.mxu0 0.0
    %1693 = vmatprep.subr.mxu0 0.0
    %1694 = vmatpush1.msra.mxu0 0.0
    %1695 = vmatprep.subr.mxu0 0.0
    %1696 = vmatpush1.msra.mxu0 0.0
    %1697 = vmatprep.subr.mxu0 0.0
    %1698 = vmatpush1.msra.mxu0 0.0
    %1699 = vmatprep.subr.mxu0 0.0
    %1700 = vmatpush1.msra.mxu0 0.0
    %1701 = vmatprep.subr.mxu0 0.0
    %1702 = vmatpush1.msra.mxu0 0.0
    %1703 = vmatprep.subr.mxu0 0.0
    %1704 = vmatpush1.msra.mxu0 0.0
    %1705 = vmatprep.subr.mxu0 0.0
    %1706 = vmatpush1.msra.mxu0 0.0
    %1707 = vmatprep.subr.mxu0 0.0
    %1708 = vmatpush1.msra.mxu0 %v1682
    %1709 = vmatprep.subr.mxu0 0.0
    %1710 = vmatpush1.msra.mxu0 %v1681
    %1711 = vmatprep.subr.mxu0 0.0
    %1712 = vmatpush1.msra.mxu0 %v1680
    %1713 = vmatprep.subr.mxu0 0.0
    %1714 = vmatpush1.msra.mxu0 %v1679
    %1715 = vmatprep.subr.mxu0 0.0
    %1716 = vmatpush2.msra.mxu0 0.0
    %1717 = vmatprep.subr.mxu0 0.0
    %1718 = vmatpush2.msra.mxu0 0.0
    %1719 = vmatprep.subr.mxu0 0.0
    %1720 = vmatpush2.msra.mxu0 0.0
    %1721 = vmatprep.subr.mxu0 0.0
    %1722 = vmatpush2.msra.mxu0 0.0
    %1723 = vmatprep.subr.mxu0 0.0
    %1724 = vmatpush2.msra.mxu0 0.0
    %1725 = vmatprep.subr.mxu0 0.0
    %1726 = vmatpush2.msra.mxu0 0.0
    %1727 = vmatprep.subr.mxu0 0.0
    %1728 = vmatpush2.msra.mxu0 0.0
    %1729 = vmatprep.subr.mxu0 0.0
    %1730 = vmatpush2.msra.mxu0 0.0
    %1731 = vmatprep.subr.mxu0 0.0
    %1732 = vmatpush2.msra.mxu0 0.0
    %1733 = vmatprep.subr.mxu0 0.0
    %1734 = vmatpush2.msra.mxu0 0.0
    %1735 = vmatprep.subr.mxu0 0.0
    %1736 = vmatpush2.msra.mxu0 0.0
    %1737 = vmatprep.subr.mxu0 0.0
    %1738 = vmatpush2.msra.mxu0 0.0
    %1739 = vmatprep.subr.mxu0 0.0
    %1740 = vmatpush2.msra.mxu0 0.0
    %1741 = vmatprep.subr.mxu0 0.0
    %1742 = vmatpush2.msra.mxu0 0.0
    %1743 = vmatprep.subr.mxu0 0.0
    %1744 = vmatpush2.msra.mxu0 0.0
    %1745 = vmatprep.subr.mxu0 0.0
    %1746 = vmatpush2.msra.mxu0 0.0
    %1747 = vmatprep.mubr.f32.mxu0 0.0
    %1748 = vmatmul.mubr.f32.gmra.mxu0 %v173
    %v1749 = vpop.f32.mrf.mxu0
    %v1750 = vadd.f32 0.0, %v1749
    %v1751 = vpop.f32.mrf.mxu0
    %1752 = vdwg.mxu0
    %v1753 = vadd.f32 %v1145, %v1750
    %v1754 = vxor.u32 %v1753, 2147483648
    %v1755 = vmul.f32 %v1754, 1.442695
    %v1756 = vpow.pop %v1755
    %v1757 = vadd.f32 %v1756, 1.0
    %v1758 = vrcp.pop %v1757
    %v1759 = vmul.f32 1.0, %v1758
    %v1760 = vtanh.pop %v1753
    %v1761 = vmul.f32 %v1759, 0.0
    %1763 = vrot.lane.b32.xlu0 %v1760, 64
    %v1764 = vpop.permute.xlu0 %1763
    %v1766 = vmul.f32 %v1759, %v1764
    %1768 = vrot.lane.b32.xlu0 %v1766, 96
    %v1769 = vpop.permute.xlu0 %1768
    %v1771 = vadd.f32 %v1761, %v1769
    %v1772 = vtanh.pop %v1771
    %1774 = vrot.lane.b32.xlu0 %v1772, 64
    %v1775 = vpop.permute.xlu0 %1774
    %v1777 = vmul.f32 %v1759, %v1775
    %v1778 = vxor.u32 %v1777, 2147483648
    %v1779 = vmul.f32 %v1778, 1.442695
    %v1780 = vpow.pop %v1779
    %v1781 = vadd.f32 %v1780, 1.0
    %v1782 = vrcp.pop %v1781
    %v1783 = vmul.f32 1.0, %v1782
    %1785 = vrot.lane.b32.xlu0 %v1777, 64
    %v1786 = vpop.permute.xlu0 %1785
    %v1787 = vsel %vm171, %v1786, 0
    %1789 = vmatprep.subr.mxu0 0.0
    %1790 = vmatpush1.msra.mxu0 0.0
    %1791 = vmatprep.subr.mxu0 0.0
    %1792 = vmatpush1.msra.mxu0 0.0
    %1793 = vmatprep.subr.mxu0 0.0
    %1794 = vmatpush1.msra.mxu0 0.0
    %1795 = vmatprep.subr.mxu0 0.0
    %1796 = vmatpush1.msra.mxu0 0.0
    %1797 = vmatprep.subr.mxu0 0.0
    %1798 = vmatpush1.msra.mxu0 0.0
    %1799 = vmatprep.subr.mxu0 0.0
    %1800 = vmatpush1.msra.mxu0 0.0
    %1801 = vmatprep.subr.mxu0 0.0
    %1802 = vmatpush1.msra.mxu0 0.0
    %1803 = vmatprep.subr.mxu0 0.0
    %1804 = vmatpush1.msra.mxu0 0.0
    %1805 = vmatprep.subr.mxu0 0.0
    %1806 = vmatpush1.msra.mxu0 0.0
    %1807 = vmatprep.subr.mxu0 0.0
    %1808 = vmatpush1.msra.mxu0 0.0
    %1809 = vmatprep.subr.mxu0 0.0
    %1810 = vmatpush1.msra.mxu0 0.0
    %1811 = vmatprep.subr.mxu0 0.0
    %1812 = vmatpush1.msra.mxu0 0.0
    %1813 = vmatprep.subr.mxu0 0.0
    %1814 = vmatpush1.msra.mxu0 %v1682
    %1815 = vmatprep.subr.mxu0 0.0
    %1816 = vmatpush1.msra.mxu0 %v1681
    %1817 = vmatprep.subr.mxu0 0.0
    %1818 = vmatpush1.msra.mxu0 %v1680
    %1819 = vmatprep.subr.mxu0 0.0
    %1820 = vmatpush1.msra.mxu0 %v1679
    %1821 = vmatprep.subr.mxu0 0.0
    %1822 = vmatpush2.msra.mxu0 0.0
    %1823 = vmatprep.subr.mxu0 0.0
    %1824 = vmatpush2.msra.mxu0 0.0
    %1825 = vmatprep.subr.mxu0 0.0
    %1826 = vmatpush2.msra.mxu0 0.0
    %1827 = vmatprep.subr.mxu0 0.0
    %1828 = vmatpush2.msra.mxu0 0.0
    %1829 = vmatprep.subr.mxu0 0.0
    %1830 = vmatpush2.msra.mxu0 0.0
    %1831 = vmatprep.subr.mxu0 0.0
    %1832 = vmatpush2.msra.mxu0 0.0
    %1833 = vmatprep.subr.mxu0 0.0
    %1834 = vmatpush2.msra.mxu0 0.0
    %1835 = vmatprep.subr.mxu0 0.0
    %1836 = vmatpush2.msra.mxu0 0.0
    %1837 = vmatprep.subr.mxu0 0.0
    %1838 = vmatpush2.msra.mxu0 0.0
    %1839 = vmatprep.subr.mxu0 0.0
    %1840 = vmatpush2.msra.mxu0 0.0
    %1841 = vmatprep.subr.mxu0 0.0
    %1842 = vmatpush2.msra.mxu0 0.0
    %1843 = vmatprep.subr.mxu0 0.0
    %1844 = vmatpush2.msra.mxu0 0.0
    %1845 = vmatprep.subr.mxu0 0.0
    %1846 = vmatpush2.msra.mxu0 0.0
    %1847 = vmatprep.subr.mxu0 0.0
    %1848 = vmatpush2.msra.mxu0 0.0
    %1849 = vmatprep.subr.mxu0 0.0
    %1850 = vmatpush2.msra.mxu0 0.0
    %1851 = vmatprep.subr.mxu0 0.0
    %1852 = vmatpush2.msra.mxu0 0.0
    %1853 = vmatprep.mubr.f32.mxu0 0.0
    %1854 = vmatmul.mubr.f32.gmra.mxu0 %v1787
    %v1855 = vpop.f32.mrf.mxu0
    %v1856 = vadd.f32 0.0, %v1855
    %v1857 = vpop.f32.mrf.mxu0
    %1858 = vdwg.mxu0
    %v1859 = vadd.f32 %v1221, %v1856
    %v1860 = vxor.u32 %v1859, 2147483648
    %v1861 = vmul.f32 %v1860, 1.442695
    %v1862 = vpow.pop %v1861
    %v1863 = vadd.f32 %v1862, 1.0
    %v1864 = vrcp.pop %v1863
    %v1865 = vmul.f32 1.0, %v1864
    %v1866 = vtanh.pop %v1859
    %v1867 = vmul.f32 %v1865, %v1771
    %1869 = vrot.lane.b32.xlu0 %v1866, 64
    %v1870 = vpop.permute.xlu0 %1869
    %v1872 = vmul.f32 %v1865, %v1870
    %1874 = vrot.lane.b32.xlu0 %v1872, 96
    %v1875 = vpop.permute.xlu0 %1874
    %v1877 = vadd.f32 %v1867, %v1875
    %v1878 = vtanh.pop %v1877
    %1880 = vrot.lane.b32.xlu0 %v1878, 64
    %v1881 = vpop.permute.xlu0 %1880
    %v1883 = vmul.f32 %v1865, %v1881
    %v1884 = vxor.u32 %v1883, 2147483648
    %v1885 = vmul.f32 %v1884, 1.442695
    %v1886 = vpow.pop %v1885
    %v1887 = vadd.f32 %v1886, 1.0
    %v1888 = vrcp.pop %v1887
    %v1889 = vmul.f32 1.0, %v1888
    %1891 = vrot.lane.b32.xlu0 %v1883, 64
    %v1892 = vpop.permute.xlu0 %1891
    %v1893 = vsel %vm171, %v1892, 0
    %1895 = vmatprep.subr.mxu0 0.0
    %1896 = vmatpush1.msra.mxu0 0.0
    %1897 = vmatprep.subr.mxu0 0.0
    %1898 = vmatpush1.msra.mxu0 0.0
    %1899 = vmatprep.subr.mxu0 0.0
    %1900 = vmatpush1.msra.mxu0 0.0
    %1901 = vmatprep.subr.mxu0 0.0
    %1902 = vmatpush1.msra.mxu0 0.0
    %1903 = vmatprep.subr.mxu0 0.0
    %1904 = vmatpush1.msra.mxu0 0.0
    %1905 = vmatprep.subr.mxu0 0.0
    %1906 = vmatpush1.msra.mxu0 0.0
    %1907 = vmatprep.subr.mxu0 0.0
    %1908 = vmatpush1.msra.mxu0 0.0
    %1909 = vmatprep.subr.mxu0 0.0
    %1910 = vmatpush1.msra.mxu0 0.0
    %1911 = vmatprep.subr.mxu0 0.0
    %1912 = vmatpush1.msra.mxu0 0.0
    %1913 = vmatprep.subr.mxu0 0.0
    %1914 = vmatpush1.msra.mxu0 0.0
    %1915 = vmatprep.subr.mxu0 0.0
    %1916 = vmatpush1.msra.mxu0 0.0
    %1917 = vmatprep.subr.mxu0 0.0
    %1918 = vmatpush1.msra.mxu0 0.0
    %1919 = vmatprep.subr.mxu0 0.0
    %1920 = vmatpush1.msra.mxu0 %v1682
    %1921 = vmatprep.subr.mxu0 0.0
    %1922 = vmatpush1.msra.mxu0 %v1681
    %1923 = vmatprep.subr.mxu0 0.0
    %1924 = vmatpush1.msra.mxu0 %v1680
    %1925 = vmatprep.subr.mxu0 0.0
    %1926 = vmatpush1.msra.mxu0 %v1679
    %1927 = vmatprep.subr.mxu0 0.0
    %1928 = vmatpush2.msra.mxu0 0.0
    %1929 = vmatprep.subr.mxu0 0.0
    %1930 = vmatpush2.msra.mxu0 0.0
    %1931 = vmatprep.subr.mxu0 0.0
    %1932 = vmatpush2.msra.mxu0 0.0
    %1933 = vmatprep.subr.mxu0 0.0
    %1934 = vmatpush2.msra.mxu0 0.0
    %1935 = vmatprep.subr.mxu0 0.0
    %1936 = vmatpush2.msra.mxu0 0.0
    %1937 = vmatprep.subr.mxu0 0.0
    %1938 = vmatpush2.msra.mxu0 0.0
    %1939 = vmatprep.subr.mxu0 0.0
    %1940 = vmatpush2.msra.mxu0 0.0
    %1941 = vmatprep.subr.mxu0 0.0
    %1942 = vmatpush2.msra.mxu0 0.0
    %1943 = vmatprep.subr.mxu0 0.0
    %1944 = vmatpush2.msra.mxu0 0.0
    %1945 = vmatprep.subr.mxu0 0.0
    %1946 = vmatpush2.msra.mxu0 0.0
    %1947 = vmatprep.subr.mxu0 0.0
    %1948 = vmatpush2.msra.mxu0 0.0
    %1949 = vmatprep.subr.mxu0 0.0
    %1950 = vmatpush2.msra.mxu0 0.0
    %1951 = vmatprep.subr.mxu0 0.0
    %1952 = vmatpush2.msra.mxu0 0.0
    %1953 = vmatprep.subr.mxu0 0.0
    %1954 = vmatpush2.msra.mxu0 0.0
    %1955 = vmatprep.subr.mxu0 0.0
    %1956 = vmatpush2.msra.mxu0 0.0
    %1957 = vmatprep.subr.mxu0 0.0
    %1958 = vmatpush2.msra.mxu0 0.0
    %1959 = vmatprep.mubr.f32.mxu0 0.0
    %1960 = vmatmul.mubr.f32.gmra.mxu0 %v1893
    %v1961 = vpop.f32.mrf.mxu0
    %v1962 = vadd.f32 0.0, %v1961
    %v1963 = vpop.f32.mrf.mxu0
    %1964 = vdwg.mxu0
    %v1965 = vadd.f32 %v1297, %v1962
    %v1966 = vxor.u32 %v1965, 2147483648
    %v1967 = vmul.f32 %v1966, 1.442695
    %v1968 = vpow.pop %v1967
    %v1969 = vadd.f32 %v1968, 1.0
    %v1970 = vrcp.pop %v1969
    %v1971 = vmul.f32 1.0, %v1970
    %v1972 = vtanh.pop %v1965
    %v1973 = vmul.f32 %v1971, %v1877
    %1975 = vrot.lane.b32.xlu0 %v1972, 64
    %v1976 = vpop.permute.xlu0 %1975
    %v1978 = vmul.f32 %v1971, %v1976
    %1980 = vrot.lane.b32.xlu0 %v1978, 96
    %v1981 = vpop.permute.xlu0 %1980
    %v1983 = vadd.f32 %v1973, %v1981
    %v1984 = vtanh.pop %v1983
    %1986 = vrot.lane.b32.xlu0 %v1984, 64
    %v1987 = vpop.permute.xlu0 %1986
    %v1989 = vmul.f32 %v1971, %v1987
    %v1990 = vxor.u32 %v1989, 2147483648
    %v1991 = vmul.f32 %v1990, 1.442695
    %v1992 = vpow.pop %v1991
    %v1993 = vadd.f32 %v1992, 1.0
    %v1994 = vrcp.pop %v1993
    %v1995 = vmul.f32 1.0, %v1994
    %1997 = vrot.lane.b32.xlu0 %v1989, 64
    %v1998 = vpop.permute.xlu0 %1997
    %v1999 = vsel %vm171, %v1998, 0
    %2001 = vmatprep.subr.mxu0 0.0
    %2002 = vmatpush1.msra.mxu0 0.0
    %2003 = vmatprep.subr.mxu0 0.0
    %2004 = vmatpush1.msra.mxu0 0.0
    %2005 = vmatprep.subr.mxu0 0.0
    %2006 = vmatpush1.msra.mxu0 0.0
    %2007 = vmatprep.subr.mxu0 0.0
    %2008 = vmatpush1.msra.mxu0 0.0
    %2009 = vmatprep.subr.mxu0 0.0
    %2010 = vmatpush1.msra.mxu0 0.0
    %2011 = vmatprep.subr.mxu0 0.0
    %2012 = vmatpush1.msra.mxu0 0.0
    %2013 = vmatprep.subr.mxu0 0.0
    %2014 = vmatpush1.msra.mxu0 0.0
    %2015 = vmatprep.subr.mxu0 0.0
    %2016 = vmatpush1.msra.mxu0 0.0
    %2017 = vmatprep.subr.mxu0 0.0
    %2018 = vmatpush1.msra.mxu0 0.0
    %2019 = vmatprep.subr.mxu0 0.0
    %2020 = vmatpush1.msra.mxu0 0.0
    %2021 = vmatprep.subr.mxu0 0.0
    %2022 = vmatpush1.msra.mxu0 0.0
    %2023 = vmatprep.subr.mxu0 0.0
    %2024 = vmatpush1.msra.mxu0 0.0
    %2025 = vmatprep.subr.mxu0 0.0
    %2026 = vmatpush1.msra.mxu0 %v1682
    %2027 = vmatprep.subr.mxu0 0.0
    %2028 = vmatpush1.msra.mxu0 %v1681
    %2029 = vmatprep.subr.mxu0 0.0
    %2030 = vmatpush1.msra.mxu0 %v1680
    %2031 = vmatprep.subr.mxu0 0.0
    %2032 = vmatpush1.msra.mxu0 %v1679
    %2033 = vmatprep.subr.mxu0 0.0
    %2034 = vmatpush2.msra.mxu0 0.0
    %2035 = vmatprep.subr.mxu0 0.0
    %2036 = vmatpush2.msra.mxu0 0.0
    %2037 = vmatprep.subr.mxu0 0.0
    %2038 = vmatpush2.msra.mxu0 0.0
    %2039 = vmatprep.subr.mxu0 0.0
    %2040 = vmatpush2.msra.mxu0 0.0
    %2041 = vmatprep.subr.mxu0 0.0
    %2042 = vmatpush2.msra.mxu0 0.0
    %2043 = vmatprep.subr.mxu0 0.0
    %2044 = vmatpush2.msra.mxu0 0.0
    %2045 = vmatprep.subr.mxu0 0.0
    %2046 = vmatpush2.msra.mxu0 0.0
    %2047 = vmatprep.subr.mxu0 0.0
    %2048 = vmatpush2.msra.mxu0 0.0
    %2049 = vmatprep.subr.mxu0 0.0
    %2050 = vmatpush2.msra.mxu0 0.0
    %2051 = vmatprep.subr.mxu0 0.0
    %2052 = vmatpush2.msra.mxu0 0.0
    %2053 = vmatprep.subr.mxu0 0.0
    %2054 = vmatpush2.msra.mxu0 0.0
    %2055 = vmatprep.subr.mxu0 0.0
    %2056 = vmatpush2.msra.mxu0 0.0
    %2057 = vmatprep.subr.mxu0 0.0
    %2058 = vmatpush2.msra.mxu0 0.0
    %2059 = vmatprep.subr.mxu0 0.0
    %2060 = vmatpush2.msra.mxu0 0.0
    %2061 = vmatprep.subr.mxu0 0.0
    %2062 = vmatpush2.msra.mxu0 0.0
    %2063 = vmatprep.subr.mxu0 0.0
    %2064 = vmatpush2.msra.mxu0 0.0
    %2065 = vmatprep.mubr.f32.mxu0 0.0
    %2066 = vmatmul.mubr.f32.gmra.mxu0 %v1999
    %v2067 = vpop.f32.mrf.mxu0
    %v2068 = vadd.f32 0.0, %v2067
    %v2069 = vpop.f32.mrf.mxu0
    %2070 = vdwg.mxu0
    %v2071 = vadd.f32 %v1373, %v2068
    %v2072 = vxor.u32 %v2071, 2147483648
    %v2073 = vmul.f32 %v2072, 1.442695
    %v2074 = vpow.pop %v2073
    %v2075 = vadd.f32 %v2074, 1.0
    %v2076 = vrcp.pop %v2075
    %v2077 = vmul.f32 1.0, %v2076
    %v2078 = vtanh.pop %v2071
    %v2079 = vmul.f32 %v2077, %v1983
    %2081 = vrot.lane.b32.xlu0 %v2078, 64
    %v2082 = vpop.permute.xlu0 %2081
    %v2084 = vmul.f32 %v2077, %v2082
    %2086 = vrot.lane.b32.xlu0 %v2084, 96
    %v2087 = vpop.permute.xlu0 %2086
    %v2089 = vadd.f32 %v2079, %v2087
    %v2090 = vtanh.pop %v2089
    %2092 = vrot.lane.b32.xlu0 %v2090, 64
    %v2093 = vpop.permute.xlu0 %2092
    %v2095 = vmul.f32 %v2077, %v2093
    %v2096 = vxor.u32 %v2095, 2147483648
    %v2097 = vmul.f32 %v2096, 1.442695
    %v2098 = vpow.pop %v2097
    %v2099 = vadd.f32 %v2098, 1.0
    %v2100 = vrcp.pop %v2099
    %v2101 = vmul.f32 1.0, %v2100
    %2103 = vrot.lane.b32.xlu0 %v2095, 64
    %v2104 = vpop.permute.xlu0 %2103
    %v2105 = vsel %vm171, %v2104, 0
    %2107 = vmatprep.subr.mxu0 0.0
    %2108 = vmatpush1.msra.mxu0 0.0
    %2109 = vmatprep.subr.mxu0 0.0
    %2110 = vmatpush1.msra.mxu0 0.0
    %2111 = vmatprep.subr.mxu0 0.0
    %2112 = vmatpush1.msra.mxu0 0.0
    %2113 = vmatprep.subr.mxu0 0.0
    %2114 = vmatpush1.msra.mxu0 0.0
    %2115 = vmatprep.subr.mxu0 0.0
    %2116 = vmatpush1.msra.mxu0 0.0
    %2117 = vmatprep.subr.mxu0 0.0
    %2118 = vmatpush1.msra.mxu0 0.0
    %2119 = vmatprep.subr.mxu0 0.0
    %2120 = vmatpush1.msra.mxu0 0.0
    %2121 = vmatprep.subr.mxu0 0.0
    %2122 = vmatpush1.msra.mxu0 0.0
    %2123 = vmatprep.subr.mxu0 0.0
    %2124 = vmatpush1.msra.mxu0 0.0
    %2125 = vmatprep.subr.mxu0 0.0
    %2126 = vmatpush1.msra.mxu0 0.0
    %2127 = vmatprep.subr.mxu0 0.0
    %2128 = vmatpush1.msra.mxu0 0.0
    %2129 = vmatprep.subr.mxu0 0.0
    %2130 = vmatpush1.msra.mxu0 0.0
    %2131 = vmatprep.subr.mxu0 0.0
    %2132 = vmatpush1.msra.mxu0 %v1682
    %2133 = vmatprep.subr.mxu0 0.0
    %2134 = vmatpush1.msra.mxu0 %v1681
    %2135 = vmatprep.subr.mxu0 0.0
    %2136 = vmatpush1.msra.mxu0 %v1680
    %2137 = vmatprep.subr.mxu0 0.0
    %2138 = vmatpush1.msra.mxu0 %v1679
    %2139 = vmatprep.subr.mxu0 0.0
    %2140 = vmatpush2.msra.mxu0 0.0
    %2141 = vmatprep.subr.mxu0 0.0
    %2142 = vmatpush2.msra.mxu0 0.0
    %2143 = vmatprep.subr.mxu0 0.0
    %2144 = vmatpush2.msra.mxu0 0.0
    %2145 = vmatprep.subr.mxu0 0.0
    %2146 = vmatpush2.msra.mxu0 0.0
    %2147 = vmatprep.subr.mxu0 0.0
    %2148 = vmatpush2.msra.mxu0 0.0
    %2149 = vmatprep.subr.mxu0 0.0
    %2150 = vmatpush2.msra.mxu0 0.0
    %2151 = vmatprep.subr.mxu0 0.0
    %2152 = vmatpush2.msra.mxu0 0.0
    %2153 = vmatprep.subr.mxu0 0.0
    %2154 = vmatpush2.msra.mxu0 0.0
    %2155 = vmatprep.subr.mxu0 0.0
    %2156 = vmatpush2.msra.mxu0 0.0
    %2157 = vmatprep.subr.mxu0 0.0
    %2158 = vmatpush2.msra.mxu0 0.0
    %2159 = vmatprep.subr.mxu0 0.0
    %2160 = vmatpush2.msra.mxu0 0.0
    %2161 = vmatprep.subr.mxu0 0.0
    %2162 = vmatpush2.msra.mxu0 0.0
    %2163 = vmatprep.subr.mxu0 0.0
    %2164 = vmatpush2.msra.mxu0 0.0
    %2165 = vmatprep.subr.mxu0 0.0
    %2166 = vmatpush2.msra.mxu0 0.0
    %2167 = vmatprep.subr.mxu0 0.0
    %2168 = vmatpush2.msra.mxu0 0.0
    %2169 = vmatprep.subr.mxu0 0.0
    %2170 = vmatpush2.msra.mxu0 0.0
    %2171 = vmatprep.mubr.f32.mxu0 0.0
    %2172 = vmatmul.mubr.f32.gmra.mxu0 %v2105
    %v2173 = vpop.f32.mrf.mxu0
    %v2174 = vadd.f32 0.0, %v2173
    %v2175 = vpop.f32.mrf.mxu0
    %2176 = vdwg.mxu0
    %v2177 = vadd.f32 %v1448, %v2174
    %v2178 = vxor.u32 %v2177, 2147483648
    %v2179 = vmul.f32 %v2178, 1.442695
    %v2180 = vpow.pop %v2179
    %v2181 = vadd.f32 %v2180, 1.0
    %v2182 = vrcp.pop %v2181
    %v2183 = vmul.f32 1.0, %v2182
    %v2184 = vtanh.pop %v2177
    %v2185 = vmul.f32 %v2183, %v2089
    %2187 = vrot.lane.b32.xlu0 %v2184, 64
    %v2188 = vpop.permute.xlu0 %2187
    %v2190 = vmul.f32 %v2183, %v2188
    %2192 = vrot.lane.b32.xlu0 %v2190, 96
    %v2193 = vpop.permute.xlu0 %2192
    %v2195 = vadd.f32 %v2185, %v2193
    %v2196 = vtanh.pop %v2195
    %2198 = vrot.lane.b32.xlu0 %v2196, 64
    %v2199 = vpop.permute.xlu0 %2198
    %v2201 = vmul.f32 %v2183, %v2199
    %v2202 = vxor.u32 %v2201, 2147483648
    %v2203 = vmul.f32 %v2202, 1.442695
    %v2204 = vpow.pop %v2203
    %v2205 = vadd.f32 %v2204, 1.0
    %v2206 = vrcp.pop %v2205
    %v2207 = vmul.f32 1.0, %v2206
    %2209 = vrot.lane.b32.xlu0 %v2201, 64
    %v2210 = vpop.permute.xlu0 %2209
    %v2211 = vsel %vm171, %v2210, 0
    %2213 = vmatprep.subr.mxu0 0.0
    %2214 = vmatpush1.msra.mxu0 0.0
    %2215 = vmatprep.subr.mxu0 0.0
    %2216 = vmatpush1.msra.mxu0 0.0
    %2217 = vmatprep.subr.mxu0 0.0
    %2218 = vmatpush1.msra.mxu0 0.0
    %2219 = vmatprep.subr.mxu0 0.0
    %2220 = vmatpush1.msra.mxu0 0.0
    %2221 = vmatprep.subr.mxu0 0.0
    %2222 = vmatpush1.msra.mxu0 0.0
    %2223 = vmatprep.subr.mxu0 0.0
    %2224 = vmatpush1.msra.mxu0 0.0
    %2225 = vmatprep.subr.mxu0 0.0
    %2226 = vmatpush1.msra.mxu0 0.0
    %2227 = vmatprep.subr.mxu0 0.0
    %2228 = vmatpush1.msra.mxu0 0.0
    %2229 = vmatprep.subr.mxu0 0.0
    %2230 = vmatpush1.msra.mxu0 0.0
    %2231 = vmatprep.subr.mxu0 0.0
    %2232 = vmatpush1.msra.mxu0 0.0
    %2233 = vmatprep.subr.mxu0 0.0
    %2234 = vmatpush1.msra.mxu0 0.0
    %2235 = vmatprep.subr.mxu0 0.0
    %2236 = vmatpush1.msra.mxu0 0.0
    %2237 = vmatprep.subr.mxu0 0.0
    %2238 = vmatpush1.msra.mxu0 %v1682
    %2239 = vmatprep.subr.mxu0 0.0
    %2240 = vmatpush1.msra.mxu0 %v1681
    %2241 = vmatprep.subr.mxu0 0.0
    %2242 = vmatpush1.msra.mxu0 %v1680
    %2243 = vmatprep.subr.mxu0 0.0
    %2244 = vmatpush1.msra.mxu0 %v1679
    %2245 = vmatprep.subr.mxu0 0.0
    %2246 = vmatpush2.msra.mxu0 0.0
    %2247 = vmatprep.subr.mxu0 0.0
    %2248 = vmatpush2.msra.mxu0 0.0
    %2249 = vmatprep.subr.mxu0 0.0
    %2250 = vmatpush2.msra.mxu0 0.0
    %2251 = vmatprep.subr.mxu0 0.0
    %2252 = vmatpush2.msra.mxu0 0.0
    %2253 = vmatprep.subr.mxu0 0.0
    %2254 = vmatpush2.msra.mxu0 0.0
    %2255 = vmatprep.subr.mxu0 0.0
    %2256 = vmatpush2.msra.mxu0 0.0
    %2257 = vmatprep.subr.mxu0 0.0
    %2258 = vmatpush2.msra.mxu0 0.0
    %2259 = vmatprep.subr.mxu0 0.0
    %2260 = vmatpush2.msra.mxu0 0.0
    %2261 = vmatprep.subr.mxu0 0.0
    %2262 = vmatpush2.msra.mxu0 0.0
    %2263 = vmatprep.subr.mxu0 0.0
    %2264 = vmatpush2.msra.mxu0 0.0
    %2265 = vmatprep.subr.mxu0 0.0
    %2266 = vmatpush2.msra.mxu0 0.0
    %2267 = vmatprep.subr.mxu0 0.0
    %2268 = vmatpush2.msra.mxu0 0.0
    %2269 = vmatprep.subr.mxu0 0.0
    %2270 = vmatpush2.msra.mxu0 0.0
    %2271 = vmatprep.subr.mxu0 0.0
    %2272 = vmatpush2.msra.mxu0 0.0
    %2273 = vmatprep.subr.mxu0 0.0
    %2274 = vmatpush2.msra.mxu0 0.0
    %2275 = vmatprep.subr.mxu0 0.0
    %2276 = vmatpush2.msra.mxu0 0.0
    %2277 = vmatprep.mubr.f32.mxu0 0.0
    %2278 = vmatmul.mubr.f32.gmra.mxu0 %v2211
    %v2279 = vpop.f32.mrf.mxu0
    %v2280 = vadd.f32 0.0, %v2279
    %v2281 = vpop.f32.mrf.mxu0
    %2282 = vdwg.mxu0
    %v2283 = vadd.f32 %v1524, %v2280
    %v2284 = vxor.u32 %v2283, 2147483648
    %v2285 = vmul.f32 %v2284, 1.442695
    %v2286 = vpow.pop %v2285
    %v2287 = vadd.f32 %v2286, 1.0
    %v2288 = vrcp.pop %v2287
    %v2289 = vmul.f32 1.0, %v2288
    %v2290 = vtanh.pop %v2283
    %v2291 = vmul.f32 %v2289, %v2195
    %2293 = vrot.lane.b32.xlu0 %v2290, 64
    %v2294 = vpop.permute.xlu0 %2293
    %v2296 = vmul.f32 %v2289, %v2294
    %2298 = vrot.lane.b32.xlu0 %v2296, 96
    %v2299 = vpop.permute.xlu0 %2298
    %v2301 = vadd.f32 %v2291, %v2299
    %v2302 = vtanh.pop %v2301
    %2304 = vrot.lane.b32.xlu0 %v2302, 64
    %v2305 = vpop.permute.xlu0 %2304
    %v2307 = vmul.f32 %v2289, %v2305
    %v2308 = vxor.u32 %v2307, 2147483648
    %v2309 = vmul.f32 %v2308, 1.442695
    %v2310 = vpow.pop %v2309
    %v2311 = vadd.f32 %v2310, 1.0
    %v2312 = vrcp.pop %v2311
    %v2313 = vmul.f32 1.0, %v2312
    %2315 = vrot.lane.b32.xlu0 %v2307, 64
    %v2316 = vpop.permute.xlu0 %2315
    %v2317 = vsel %vm171, %v2316, 0
    %2319 = vmatprep.subr.mxu0 0.0
    %2320 = vmatpush1.msra.mxu0 0.0
    %2321 = vmatprep.subr.mxu0 0.0
    %2322 = vmatpush1.msra.mxu0 0.0
    %2323 = vmatprep.subr.mxu0 0.0
    %2324 = vmatpush1.msra.mxu0 0.0
    %2325 = vmatprep.subr.mxu0 0.0
    %2326 = vmatpush1.msra.mxu0 0.0
    %2327 = vmatprep.subr.mxu0 0.0
    %2328 = vmatpush1.msra.mxu0 0.0
    %2329 = vmatprep.subr.mxu0 0.0
    %2330 = vmatpush1.msra.mxu0 0.0
    %2331 = vmatprep.subr.mxu0 0.0
    %2332 = vmatpush1.msra.mxu0 0.0
    %2333 = vmatprep.subr.mxu0 0.0
    %2334 = vmatpush1.msra.mxu0 0.0
    %2335 = vmatprep.subr.mxu0 0.0
    %2336 = vmatpush1.msra.mxu0 0.0
    %2337 = vmatprep.subr.mxu0 0.0
    %2338 = vmatpush1.msra.mxu0 0.0
    %2339 = vmatprep.subr.mxu0 0.0
    %2340 = vmatpush1.msra.mxu0 0.0
    %2341 = vmatprep.subr.mxu0 0.0
    %2342 = vmatpush1.msra.mxu0 0.0
    %2343 = vmatprep.subr.mxu0 0.0
    %2344 = vmatpush1.msra.mxu0 %v1682
    %2345 = vmatprep.subr.mxu0 0.0
    %2346 = vmatpush1.msra.mxu0 %v1681
    %2347 = vmatprep.subr.mxu0 0.0
    %2348 = vmatpush1.msra.mxu0 %v1680
    %2349 = vmatprep.subr.mxu0 0.0
    %2350 = vmatpush1.msra.mxu0 %v1679
    %2351 = vmatprep.subr.mxu0 0.0
    %2352 = vmatpush2.msra.mxu0 0.0
    %2353 = vmatprep.subr.mxu0 0.0
    %2354 = vmatpush2.msra.mxu0 0.0
    %2355 = vmatprep.subr.mxu0 0.0
    %2356 = vmatpush2.msra.mxu0 0.0
    %2357 = vmatprep.subr.mxu0 0.0
    %2358 = vmatpush2.msra.mxu0 0.0
    %2359 = vmatprep.subr.mxu0 0.0
    %2360 = vmatpush2.msra.mxu0 0.0
    %2361 = vmatprep.subr.mxu0 0.0
    %2362 = vmatpush2.msra.mxu0 0.0
    %2363 = vmatprep.subr.mxu0 0.0
    %2364 = vmatpush2.msra.mxu0 0.0
    %2365 = vmatprep.subr.mxu0 0.0
    %2366 = vmatpush2.msra.mxu0 0.0
    %2367 = vmatprep.subr.mxu0 0.0
    %2368 = vmatpush2.msra.mxu0 0.0
    %2369 = vmatprep.subr.mxu0 0.0
    %2370 = vmatpush2.msra.mxu0 0.0
    %2371 = vmatprep.subr.mxu0 0.0
    %2372 = vmatpush2.msra.mxu0 0.0
    %2373 = vmatprep.subr.mxu0 0.0
    %2374 = vmatpush2.msra.mxu0 0.0
    %2375 = vmatprep.subr.mxu0 0.0
    %2376 = vmatpush2.msra.mxu0 0.0
    %2377 = vmatprep.subr.mxu0 0.0
    %2378 = vmatpush2.msra.mxu0 0.0
    %2379 = vmatprep.subr.mxu0 0.0
    %2380 = vmatpush2.msra.mxu0 0.0
    %2381 = vmatprep.subr.mxu0 0.0
    %2382 = vmatpush2.msra.mxu0 0.0
    %2383 = vmatprep.mubr.f32.mxu0 0.0
    %2384 = vmatmul.mubr.f32.gmra.mxu0 %v2317
    %v2385 = vpop.f32.mrf.mxu0
    %v2386 = vadd.f32 0.0, %v2385
    %v2387 = vpop.f32.mrf.mxu0
    %2388 = vdwg.mxu0
    %v2389 = vadd.f32 %v1600, %v2386
    %v2390 = vxor.u32 %v2389, 2147483648
    %v2391 = vmul.f32 %v2390, 1.442695
    %v2392 = vpow.pop %v2391
    %v2393 = vadd.f32 %v2392, 1.0
    %v2394 = vrcp.pop %v2393
    %v2395 = vmul.f32 1.0, %v2394
    %v2396 = vtanh.pop %v2389
    %v2397 = vmul.f32 %v2395, %v2301
    %2399 = vrot.lane.b32.xlu0 %v2396, 64
    %v2400 = vpop.permute.xlu0 %2399
    %v2402 = vmul.f32 %v2395, %v2400
    %2404 = vrot.lane.b32.xlu0 %v2402, 96
    %v2405 = vpop.permute.xlu0 %2404
    %v2407 = vadd.f32 %v2397, %v2405
    %v2408 = vtanh.pop %v2407
    %2410 = vrot.lane.b32.xlu0 %v2408, 64
    %v2411 = vpop.permute.xlu0 %2410
    %v2413 = vmul.f32 %v2395, %v2411
    %v2414 = vxor.u32 %v2413, 2147483648
    %v2415 = vmul.f32 %v2414, 1.442695
    %v2416 = vpow.pop %v2415
    %v2417 = vadd.f32 %v2416, 1.0
    %v2418 = vrcp.pop %v2417
    %v2419 = vmul.f32 1.0, %v2418
    %2421 = vrot.lane.b32.xlu0 %v2413, 64
    %v2422 = vpop.permute.xlu0 %2421
    %v2423 = vsel %vm171, %v2422, 0
    %2425 = vmatprep.subr.mxu0 0.0
    %2426 = vmatpush1.msra.mxu0 0.0
    %2427 = vmatprep.subr.mxu0 0.0
    %2428 = vmatpush1.msra.mxu0 0.0
    %2429 = vmatprep.subr.mxu0 0.0
    %2430 = vmatpush1.msra.mxu0 0.0
    %2431 = vmatprep.subr.mxu0 0.0
    %2432 = vmatpush1.msra.mxu0 0.0
    %2433 = vmatprep.subr.mxu0 0.0
    %2434 = vmatpush1.msra.mxu0 0.0
    %2435 = vmatprep.subr.mxu0 0.0
    %2436 = vmatpush1.msra.mxu0 0.0
    %2437 = vmatprep.subr.mxu0 0.0
    %2438 = vmatpush1.msra.mxu0 0.0
    %2439 = vmatprep.subr.mxu0 0.0
    %2440 = vmatpush1.msra.mxu0 0.0
    %2441 = vmatprep.subr.mxu0 0.0
    %2442 = vmatpush1.msra.mxu0 0.0
    %2443 = vmatprep.subr.mxu0 0.0
    %2444 = vmatpush1.msra.mxu0 0.0
    %2445 = vmatprep.subr.mxu0 0.0
    %2446 = vmatpush1.msra.mxu0 0.0
    %2447 = vmatprep.subr.mxu0 0.0
    %2448 = vmatpush1.msra.mxu0 0.0
    %2449 = vmatprep.subr.mxu0 0.0
    %2450 = vmatpush1.msra.mxu0 %v1682
    %2451 = vmatprep.subr.mxu0 0.0
    %2452 = vmatpush1.msra.mxu0 %v1681
    %2453 = vmatprep.subr.mxu0 0.0
    %2454 = vmatpush1.msra.mxu0 %v1680
    %2455 = vmatprep.subr.mxu0 0.0
    %2456 = vmatpush1.msra.mxu0 %v1679
    %2457 = vmatprep.subr.mxu0 0.0
    %2458 = vmatpush2.msra.mxu0 0.0
    %2459 = vmatprep.subr.mxu0 0.0
    %2460 = vmatpush2.msra.mxu0 0.0
    %2461 = vmatprep.subr.mxu0 0.0
    %2462 = vmatpush2.msra.mxu0 0.0
    %2463 = vmatprep.subr.mxu0 0.0
    %2464 = vmatpush2.msra.mxu0 0.0
    %2465 = vmatprep.subr.mxu0 0.0
    %2466 = vmatpush2.msra.mxu0 0.0
    %2467 = vmatprep.subr.mxu0 0.0
    %2468 = vmatpush2.msra.mxu0 0.0
    %2469 = vmatprep.subr.mxu0 0.0
    %2470 = vmatpush2.msra.mxu0 0.0
    %2471 = vmatprep.subr.mxu0 0.0
    %2472 = vmatpush2.msra.mxu0 0.0
    %2473 = vmatprep.subr.mxu0 0.0
    %2474 = vmatpush2.msra.mxu0 0.0
    %2475 = vmatprep.subr.mxu0 0.0
    %2476 = vmatpush2.msra.mxu0 0.0
    %2477 = vmatprep.subr.mxu0 0.0
    %2478 = vmatpush2.msra.mxu0 0.0
    %2479 = vmatprep.subr.mxu0 0.0
    %2480 = vmatpush2.msra.mxu0 0.0
    %2481 = vmatprep.subr.mxu0 0.0
    %2482 = vmatpush2.msra.mxu0 0.0
    %2483 = vmatprep.subr.mxu0 0.0
    %2484 = vmatpush2.msra.mxu0 0.0
    %2485 = vmatprep.subr.mxu0 0.0
    %2486 = vmatpush2.msra.mxu0 0.0
    %2487 = vmatprep.subr.mxu0 0.0
    %2488 = vmatpush2.msra.mxu0 0.0
    %2489 = vmatprep.mubr.f32.mxu0 0.0
    %2490 = vmatmul.mubr.f32.gmra.mxu0 %v2423
    %v2491 = vpop.f32.mrf.mxu0
    %v2492 = vadd.f32 0.0, %v2491
    %v2493 = vpop.f32.mrf.mxu0
    %2494 = vdwg.mxu0
    %v2495 = vadd.f32 %v1676, %v2492
    %v2496 = vxor.u32 %v2495, 2147483648
    %v2497 = vmul.f32 %v2496, 1.442695
    %v2498 = vpow.pop %v2497
    %v2499 = vadd.f32 %v2498, 1.0
    %v2500 = vrcp.pop %v2499
    %v2501 = vmul.f32 1.0, %v2500
    %v2502 = vtanh.pop %v2495
    %v2503 = vmul.f32 %v2501, %v2407
    %2505 = vrot.lane.b32.xlu0 %v2502, 64
    %v2506 = vpop.permute.xlu0 %2505
    %v2508 = vmul.f32 %v2501, %v2506
    %2510 = vrot.lane.b32.xlu0 %v2508, 96
    %v2511 = vpop.permute.xlu0 %2510
    %v2513 = vadd.f32 %v2503, %v2511
    %v2514 = vtanh.pop %v2513
    %2516 = vrot.lane.b32.xlu0 %v2514, 64
    %v2517 = vpop.permute.xlu0 %2516
    %v2519 = vmul.f32 %v2501, %v2517
    %v2520 = vxor.u32 %v2519, 2147483648
    %v2521 = vmul.f32 %v2520, 1.442695
    %v2522 = vpow.pop %v2521
    %v2523 = vadd.f32 %v2522, 1.0
    %v2524 = vrcp.pop %v2523
    %v2525 = vmul.f32 1.0, %v2524
    %v2526 = vld [vmem:[%s7] sm:$0xff]
    %v2527 = vld [vmem:[%s7 + $0x8] sm:$0xff]
    %v2528 = vld [vmem:[%s7 + $0x10] sm:$0xff]
    %v2529 = vld [vmem:[%s7 + $0x18] sm:$0xff]
    %v2530 = vld [vmem:[%s9] sm:$0x1]
    %v2532 = vlaneseq
    %v2533 = vshrl.u32 %v2532, 7
    %v2534 = vsub.s32 0, %v2533
    %v2535 = vrot.slane %v2530, %v2534
    %2538 = vrot.lane.b32.xlu0 %v1783, 64
    %v2539 = vpop.permute.xlu0 %2538
    %v2540 = vsel %vm171, %v2539, 0
    %2542 = vmatprep.subr.mxu0 0.0
    %2543 = vmatpush1.msra.mxu0 0.0
    %2544 = vmatprep.subr.mxu0 0.0
    %2545 = vmatpush1.msra.mxu0 0.0
    %2546 = vmatprep.subr.mxu0 0.0
    %2547 = vmatpush1.msra.mxu0 0.0
    %2548 = vmatprep.subr.mxu0 0.0
    %2549 = vmatpush1.msra.mxu0 0.0
    %2550 = vmatprep.subr.mxu0 0.0
    %2551 = vmatpush1.msra.mxu0 0.0
    %2552 = vmatprep.subr.mxu0 0.0
    %2553 = vmatpush1.msra.mxu0 0.0
    %2554 = vmatprep.subr.mxu0 0.0
    %2555 = vmatpush1.msra.mxu0 0.0
    %2556 = vmatprep.subr.mxu0 0.0
    %2557 = vmatpush1.msra.mxu0 0.0
    %2558 = vmatprep.subr.mxu0 0.0
    %2559 = vmatpush1.msra.mxu0 0.0
    %2560 = vmatprep.subr.mxu0 0.0
    %2561 = vmatpush1.msra.mxu0 0.0
    %2562 = vmatprep.subr.mxu0 0.0
    %2563 = vmatpush1.msra.mxu0 0.0
    %2564 = vmatprep.subr.mxu0 0.0
    %2565 = vmatpush1.msra.mxu0 0.0
    %2566 = vmatprep.subr.mxu0 0.0
    %2567 = vmatpush1.msra.mxu0 %v2529
    %2568 = vmatprep.subr.mxu0 0.0
    %2569 = vmatpush1.msra.mxu0 %v2528
    %2570 = vmatprep.subr.mxu0 0.0
    %2571 = vmatpush1.msra.mxu0 %v2527
    %2572 = vmatprep.subr.mxu0 0.0
    %2573 = vmatpush1.msra.mxu0 %v2526
    %2574 = vmatprep.subr.mxu0 0.0
    %2575 = vmatpush2.msra.mxu0 0.0
    %2576 = vmatprep.subr.mxu0 0.0
    %2577 = vmatpush2.msra.mxu0 0.0
    %2578 = vmatprep.subr.mxu0 0.0
    %2579 = vmatpush2.msra.mxu0 0.0
    %2580 = vmatprep.subr.mxu0 0.0
    %2581 = vmatpush2.msra.mxu0 0.0
    %2582 = vmatprep.subr.mxu0 0.0
    %2583 = vmatpush2.msra.mxu0 0.0
    %2584 = vmatprep.subr.mxu0 0.0
    %2585 = vmatpush2.msra.mxu0 0.0
    %2586 = vmatprep.subr.mxu0 0.0
    %2587 = vmatpush2.msra.mxu0 0.0
    %2588 = vmatprep.subr.mxu0 0.0
    %2589 = vmatpush2.msra.mxu0 0.0
    %2590 = vmatprep.subr.mxu0 0.0
    %2591 = vmatpush2.msra.mxu0 0.0
    %2592 = vmatprep.subr.mxu0 0.0
    %2593 = vmatpush2.msra.mxu0 0.0
    %2594 = vmatprep.subr.mxu0 0.0
    %2595 = vmatpush2.msra.mxu0 0.0
    %2596 = vmatprep.subr.mxu0 0.0
    %2597 = vmatpush2.msra.mxu0 0.0
    %2598 = vmatprep.subr.mxu0 0.0
    %2599 = vmatpush2.msra.mxu0 0.0
    %2600 = vmatprep.subr.mxu0 0.0
    %2601 = vmatpush2.msra.mxu0 0.0
    %2602 = vmatprep.subr.mxu0 0.0
    %2603 = vmatpush2.msra.mxu0 0.0
    %2604 = vmatprep.subr.mxu0 0.0
    %2605 = vmatpush2.msra.mxu0 0.0
    %2606 = vmatprep.mubr.f32.mxu0 0.0
    %2607 = vmatmul.mubr.f32.gmra.mxu0 %v2540
    %v2608 = vpop.f32.mrf.mxu0
    %v2609 = vadd.f32 %v2535, %v2608
    %v2610 = vpop.f32.mrf.mxu0
    %2611 = vdwg.mxu0
    %2613 = vrot.lane.b32.xlu0 %v1889, 64
    %v2614 = vpop.permute.xlu0 %2613
    %v2615 = vsel %vm171, %v2614, 0
    %2617 = vmatprep.subr.mxu0 0.0
    %2618 = vmatpush1.msra.mxu0 0.0
    %2619 = vmatprep.subr.mxu0 0.0
    %2620 = vmatpush1.msra.mxu0 0.0
    %2621 = vmatprep.subr.mxu0 0.0
    %2622 = vmatpush1.msra.mxu0 0.0
    %2623 = vmatprep.subr.mxu0 0.0
    %2624 = vmatpush1.msra.mxu0 0.0
    %2625 = vmatprep.subr.mxu0 0.0
    %2626 = vmatpush1.msra.mxu0 0.0
    %2627 = vmatprep.subr.mxu0 0.0
    %2628 = vmatpush1.msra.mxu0 0.0
    %2629 = vmatprep.subr.mxu0 0.0
    %2630 = vmatpush1.msra.mxu0 0.0
    %2631 = vmatprep.subr.mxu0 0.0
    %2632 = vmatpush1.msra.mxu0 0.0
    %2633 = vmatprep.subr.mxu0 0.0
    %2634 = vmatpush1.msra.mxu0 0.0
    %2635 = vmatprep.subr.mxu0 0.0
    %2636 = vmatpush1.msra.mxu0 0.0
    %2637 = vmatprep.subr.mxu0 0.0
    %2638 = vmatpush1.msra.mxu0 0.0
    %2639 = vmatprep.subr.mxu0 0.0
    %2640 = vmatpush1.msra.mxu0 0.0
    %2641 = vmatprep.subr.mxu0 0.0
    %2642 = vmatpush1.msra.mxu0 %v2529
    %2643 = vmatprep.subr.mxu0 0.0
    %2644 = vmatpush1.msra.mxu0 %v2528
    %2645 = vmatprep.subr.mxu0 0.0
    %2646 = vmatpush1.msra.mxu0 %v2527
    %2647 = vmatprep.subr.mxu0 0.0
    %2648 = vmatpush1.msra.mxu0 %v2526
    %2649 = vmatprep.subr.mxu0 0.0
    %2650 = vmatpush2.msra.mxu0 0.0
    %2651 = vmatprep.subr.mxu0 0.0
    %2652 = vmatpush2.msra.mxu0 0.0
    %2653 = vmatprep.subr.mxu0 0.0
    %2654 = vmatpush2.msra.mxu0 0.0
    %2655 = vmatprep.subr.mxu0 0.0
    %2656 = vmatpush2.msra.mxu0 0.0
    %2657 = vmatprep.subr.mxu0 0.0
    %2658 = vmatpush2.msra.mxu0 0.0
    %2659 = vmatprep.subr.mxu0 0.0
    %2660 = vmatpush2.msra.mxu0 0.0
    %2661 = vmatprep.subr.mxu0 0.0
    %2662 = vmatpush2.msra.mxu0 0.0
    %2663 = vmatprep.subr.mxu0 0.0
    %2664 = vmatpush2.msra.mxu0 0.0
    %2665 = vmatprep.subr.mxu0 0.0
    %2666 = vmatpush2.msra.mxu0 0.0
    %2667 = vmatprep.subr.mxu0 0.0
    %2668 = vmatpush2.msra.mxu0 0.0
    %2669 = vmatprep.subr.mxu0 0.0
    %2670 = vmatpush2.msra.mxu0 0.0
    %2671 = vmatprep.subr.mxu0 0.0
    %2672 = vmatpush2.msra.mxu0 0.0
    %2673 = vmatprep.subr.mxu0 0.0
    %2674 = vmatpush2.msra.mxu0 0.0
    %2675 = vmatprep.subr.mxu0 0.0
    %2676 = vmatpush2.msra.mxu0 0.0
    %2677 = vmatprep.subr.mxu0 0.0
    %2678 = vmatpush2.msra.mxu0 0.0
    %2679 = vmatprep.subr.mxu0 0.0
    %2680 = vmatpush2.msra.mxu0 0.0
    %2681 = vmatprep.mubr.f32.mxu0 0.0
    %2682 = vmatmul.mubr.f32.gmra.mxu0 %v2615
    %v2683 = vpop.f32.mrf.mxu0
    %v2684 = vadd.f32 %v2535, %v2683
    %v2685 = vpop.f32.mrf.mxu0
    %2686 = vdwg.mxu0
    %2688 = vrot.lane.b32.xlu0 %v1995, 64
    %v2689 = vpop.permute.xlu0 %2688
    %v2690 = vsel %vm171, %v2689, 0
    %2692 = vmatprep.subr.mxu0 0.0
    %2693 = vmatpush1.msra.mxu0 0.0
    %2694 = vmatprep.subr.mxu0 0.0
    %2695 = vmatpush1.msra.mxu0 0.0
    %2696 = vmatprep.subr.mxu0 0.0
    %2697 = vmatpush1.msra.mxu0 0.0
    %2698 = vmatprep.subr.mxu0 0.0
    %2699 = vmatpush1.msra.mxu0 0.0
    %2700 = vmatprep.subr.mxu0 0.0
    %2701 = vmatpush1.msra.mxu0 0.0
    %2702 = vmatprep.subr.mxu0 0.0
    %2703 = vmatpush1.msra.mxu0 0.0
    %2704 = vmatprep.subr.mxu0 0.0
    %2705 = vmatpush1.msra.mxu0 0.0
    %2706 = vmatprep.subr.mxu0 0.0
    %2707 = vmatpush1.msra.mxu0 0.0
    %2708 = vmatprep.subr.mxu0 0.0
    %2709 = vmatpush1.msra.mxu0 0.0
    %2710 = vmatprep.subr.mxu0 0.0
    %2711 = vmatpush1.msra.mxu0 0.0
    %2712 = vmatprep.subr.mxu0 0.0
    %2713 = vmatpush1.msra.mxu0 0.0
    %2714 = vmatprep.subr.mxu0 0.0
    %2715 = vmatpush1.msra.mxu0 0.0
    %2716 = vmatprep.subr.mxu0 0.0
    %2717 = vmatpush1.msra.mxu0 %v2529
    %2718 = vmatprep.subr.mxu0 0.0
    %2719 = vmatpush1.msra.mxu0 %v2528
    %2720 = vmatprep.subr.mxu0 0.0
    %2721 = vmatpush1.msra.mxu0 %v2527
    %2722 = vmatprep.subr.mxu0 0.0
    %2723 = vmatpush1.msra.mxu0 %v2526
    %2724 = vmatprep.subr.mxu0 0.0
    %2725 = vmatpush2.msra.mxu0 0.0
    %2726 = vmatprep.subr.mxu0 0.0
    %2727 = vmatpush2.msra.mxu0 0.0
    %2728 = vmatprep.subr.mxu0 0.0
    %2729 = vmatpush2.msra.mxu0 0.0
    %2730 = vmatprep.subr.mxu0 0.0
    %2731 = vmatpush2.msra.mxu0 0.0
    %2732 = vmatprep.subr.mxu0 0.0
    %2733 = vmatpush2.msra.mxu0 0.0
    %2734 = vmatprep.subr.mxu0 0.0
    %2735 = vmatpush2.msra.mxu0 0.0
    %2736 = vmatprep.subr.mxu0 0.0
    %2737 = vmatpush2.msra.mxu0 0.0
    %2738 = vmatprep.subr.mxu0 0.0
    %2739 = vmatpush2.msra.mxu0 0.0
    %2740 = vmatprep.subr.mxu0 0.0
    %2741 = vmatpush2.msra.mxu0 0.0
    %2742 = vmatprep.subr.mxu0 0.0
    %2743 = vmatpush2.msra.mxu0 0.0
    %2744 = vmatprep.subr.mxu0 0.0
    %2745 = vmatpush2.msra.mxu0 0.0
    %2746 = vmatprep.subr.mxu0 0.0
    %2747 = vmatpush2.msra.mxu0 0.0
    %2748 = vmatprep.subr.mxu0 0.0
    %2749 = vmatpush2.msra.mxu0 0.0
    %2750 = vmatprep.subr.mxu0 0.0
    %2751 = vmatpush2.msra.mxu0 0.0
    %2752 = vmatprep.subr.mxu0 0.0
    %2753 = vmatpush2.msra.mxu0 0.0
    %2754 = vmatprep.subr.mxu0 0.0
    %2755 = vmatpush2.msra.mxu0 0.0
    %2756 = vmatprep.mubr.f32.mxu0 0.0
    %2757 = vmatmul.mubr.f32.gmra.mxu0 %v2690
    %v2758 = vpop.f32.mrf.mxu0
    %v2759 = vadd.f32 %v2535, %v2758
    %v2760 = vpop.f32.mrf.mxu0
    %2761 = vdwg.mxu0
    %2763 = vrot.lane.b32.xlu0 %v2101, 64
    %v2764 = vpop.permute.xlu0 %2763
    %v2765 = vsel %vm171, %v2764, 0
    %2767 = vmatprep.subr.mxu0 0.0
    %2768 = vmatpush1.msra.mxu0 0.0
    %2769 = vmatprep.subr.mxu0 0.0
    %2770 = vmatpush1.msra.mxu0 0.0
    %2771 = vmatprep.subr.mxu0 0.0
    %2772 = vmatpush1.msra.mxu0 0.0
    %2773 = vmatprep.subr.mxu0 0.0
    %2774 = vmatpush1.msra.mxu0 0.0
    %2775 = vmatprep.subr.mxu0 0.0
    %2776 = vmatpush1.msra.mxu0 0.0
    %2777 = vmatprep.subr.mxu0 0.0
    %2778 = vmatpush1.msra.mxu0 0.0
    %2779 = vmatprep.subr.mxu0 0.0
    %2780 = vmatpush1.msra.mxu0 0.0
    %2781 = vmatprep.subr.mxu0 0.0
    %2782 = vmatpush1.msra.mxu0 0.0
    %2783 = vmatprep.subr.mxu0 0.0
    %2784 = vmatpush1.msra.mxu0 0.0
    %2785 = vmatprep.subr.mxu0 0.0
    %2786 = vmatpush1.msra.mxu0 0.0
    %2787 = vmatprep.subr.mxu0 0.0
    %2788 = vmatpush1.msra.mxu0 0.0
    %2789 = vmatprep.subr.mxu0 0.0
    %2790 = vmatpush1.msra.mxu0 0.0
    %2791 = vmatprep.subr.mxu0 0.0
    %2792 = vmatpush1.msra.mxu0 %v2529
    %2793 = vmatprep.subr.mxu0 0.0
    %2794 = vmatpush1.msra.mxu0 %v2528
    %2795 = vmatprep.subr.mxu0 0.0
    %2796 = vmatpush1.msra.mxu0 %v2527
    %2797 = vmatprep.subr.mxu0 0.0
    %2798 = vmatpush1.msra.mxu0 %v2526
    %2799 = vmatprep.subr.mxu0 0.0
    %2800 = vmatpush2.msra.mxu0 0.0
    %2801 = vmatprep.subr.mxu0 0.0
    %2802 = vmatpush2.msra.mxu0 0.0
    %2803 = vmatprep.subr.mxu0 0.0
    %2804 = vmatpush2.msra.mxu0 0.0
    %2805 = vmatprep.subr.mxu0 0.0
    %2806 = vmatpush2.msra.mxu0 0.0
    %2807 = vmatprep.subr.mxu0 0.0
    %2808 = vmatpush2.msra.mxu0 0.0
    %2809 = vmatprep.subr.mxu0 0.0
    %2810 = vmatpush2.msra.mxu0 0.0
    %2811 = vmatprep.subr.mxu0 0.0
    %2812 = vmatpush2.msra.mxu0 0.0
    %2813 = vmatprep.subr.mxu0 0.0
    %2814 = vmatpush2.msra.mxu0 0.0
    %2815 = vmatprep.subr.mxu0 0.0
    %2816 = vmatpush2.msra.mxu0 0.0
    %2817 = vmatprep.subr.mxu0 0.0
    %2818 = vmatpush2.msra.mxu0 0.0
    %2819 = vmatprep.subr.mxu0 0.0
    %2820 = vmatpush2.msra.mxu0 0.0
    %2821 = vmatprep.subr.mxu0 0.0
    %2822 = vmatpush2.msra.mxu0 0.0
    %2823 = vmatprep.subr.mxu0 0.0
    %2824 = vmatpush2.msra.mxu0 0.0
    %2825 = vmatprep.subr.mxu0 0.0
    %2826 = vmatpush2.msra.mxu0 0.0
    %2827 = vmatprep.subr.mxu0 0.0
    %2828 = vmatpush2.msra.mxu0 0.0
    %2829 = vmatprep.subr.mxu0 0.0
    %2830 = vmatpush2.msra.mxu0 0.0
    %2831 = vmatprep.mubr.f32.mxu0 0.0
    %2832 = vmatmul.mubr.f32.gmra.mxu0 %v2765
    %v2833 = vpop.f32.mrf.mxu0
    %v2834 = vadd.f32 %v2535, %v2833
    %v2835 = vpop.f32.mrf.mxu0
    %2836 = vdwg.mxu0
    %2838 = vrot.lane.b32.xlu0 %v2207, 64
    %v2839 = vpop.permute.xlu0 %2838
    %v2840 = vsel %vm171, %v2839, 0
    %2842 = vmatprep.subr.mxu0 0.0
    %2843 = vmatpush1.msra.mxu0 0.0
    %2844 = vmatprep.subr.mxu0 0.0
    %2845 = vmatpush1.msra.mxu0 0.0
    %2846 = vmatprep.subr.mxu0 0.0
    %2847 = vmatpush1.msra.mxu0 0.0
    %2848 = vmatprep.subr.mxu0 0.0
    %2849 = vmatpush1.msra.mxu0 0.0
    %2850 = vmatprep.subr.mxu0 0.0
    %2851 = vmatpush1.msra.mxu0 0.0
    %2852 = vmatprep.subr.mxu0 0.0
    %2853 = vmatpush1.msra.mxu0 0.0
    %2854 = vmatprep.subr.mxu0 0.0
    %2855 = vmatpush1.msra.mxu0 0.0
    %2856 = vmatprep.subr.mxu0 0.0
    %2857 = vmatpush1.msra.mxu0 0.0
    %2858 = vmatprep.subr.mxu0 0.0
    %2859 = vmatpush1.msra.mxu0 0.0
    %2860 = vmatprep.subr.mxu0 0.0
    %2861 = vmatpush1.msra.mxu0 0.0
    %2862 = vmatprep.subr.mxu0 0.0
    %2863 = vmatpush1.msra.mxu0 0.0
    %2864 = vmatprep.subr.mxu0 0.0
    %2865 = vmatpush1.msra.mxu0 0.0
    %2866 = vmatprep.subr.mxu0 0.0
    %2867 = vmatpush1.msra.mxu0 %v2529
    %2868 = vmatprep.subr.mxu0 0.0
    %2869 = vmatpush1.msra.mxu0 %v2528
    %2870 = vmatprep.subr.mxu0 0.0
    %2871 = vmatpush1.msra.mxu0 %v2527
    %2872 = vmatprep.subr.mxu0 0.0
    %2873 = vmatpush1.msra.mxu0 %v2526
    %2874 = vmatprep.subr.mxu0 0.0
    %2875 = vmatpush2.msra.mxu0 0.0
    %2876 = vmatprep.subr.mxu0 0.0
    %2877 = vmatpush2.msra.mxu0 0.0
    %2878 = vmatprep.subr.mxu0 0.0
    %2879 = vmatpush2.msra.mxu0 0.0
    %2880 = vmatprep.subr.mxu0 0.0
    %2881 = vmatpush2.msra.mxu0 0.0
    %2882 = vmatprep.subr.mxu0 0.0
    %2883 = vmatpush2.msra.mxu0 0.0
    %2884 = vmatprep.subr.mxu0 0.0
    %2885 = vmatpush2.msra.mxu0 0.0
    %2886 = vmatprep.subr.mxu0 0.0
    %2887 = vmatpush2.msra.mxu0 0.0
    %2888 = vmatprep.subr.mxu0 0.0
    %2889 = vmatpush2.msra.mxu0 0.0
    %2890 = vmatprep.subr.mxu0 0.0
    %2891 = vmatpush2.msra.mxu0 0.0
    %2892 = vmatprep.subr.mxu0 0.0
    %2893 = vmatpush2.msra.mxu0 0.0
    %2894 = vmatprep.subr.mxu0 0.0
    %2895 = vmatpush2.msra.mxu0 0.0
    %2896 = vmatprep.subr.mxu0 0.0
    %2897 = vmatpush2.msra.mxu0 0.0
    %2898 = vmatprep.subr.mxu0 0.0
    %2899 = vmatpush2.msra.mxu0 0.0
    %2900 = vmatprep.subr.mxu0 0.0
    %2901 = vmatpush2.msra.mxu0 0.0
    %2902 = vmatprep.subr.mxu0 0.0
    %2903 = vmatpush2.msra.mxu0 0.0
    %2904 = vmatprep.subr.mxu0 0.0
    %2905 = vmatpush2.msra.mxu0 0.0
    %2906 = vmatprep.mubr.f32.mxu0 0.0
    %2907 = vmatmul.mubr.f32.gmra.mxu0 %v2840
    %v2908 = vpop.f32.mrf.mxu0
    %v2909 = vadd.f32 %v2535, %v2908
    %v2910 = vpop.f32.mrf.mxu0
    %2911 = vdwg.mxu0
    %2913 = vrot.lane.b32.xlu0 %v2313, 64
    %v2914 = vpop.permute.xlu0 %2913
    %v2915 = vsel %vm171, %v2914, 0
    %2917 = vmatprep.subr.mxu0 0.0
    %2918 = vmatpush1.msra.mxu0 0.0
    %2919 = vmatprep.subr.mxu0 0.0
    %2920 = vmatpush1.msra.mxu0 0.0
    %2921 = vmatprep.subr.mxu0 0.0
    %2922 = vmatpush1.msra.mxu0 0.0
    %2923 = vmatprep.subr.mxu0 0.0
    %2924 = vmatpush1.msra.mxu0 0.0
    %2925 = vmatprep.subr.mxu0 0.0
    %2926 = vmatpush1.msra.mxu0 0.0
    %2927 = vmatprep.subr.mxu0 0.0
    %2928 = vmatpush1.msra.mxu0 0.0
    %2929 = vmatprep.subr.mxu0 0.0
    %2930 = vmatpush1.msra.mxu0 0.0
    %2931 = vmatprep.subr.mxu0 0.0
    %2932 = vmatpush1.msra.mxu0 0.0
    %2933 = vmatprep.subr.mxu0 0.0
    %2934 = vmatpush1.msra.mxu0 0.0
    %2935 = vmatprep.subr.mxu0 0.0
    %2936 = vmatpush1.msra.mxu0 0.0
    %2937 = vmatprep.subr.mxu0 0.0
    %2938 = vmatpush1.msra.mxu0 0.0
    %2939 = vmatprep.subr.mxu0 0.0
    %2940 = vmatpush1.msra.mxu0 0.0
    %2941 = vmatprep.subr.mxu0 0.0
    %2942 = vmatpush1.msra.mxu0 %v2529
    %2943 = vmatprep.subr.mxu0 0.0
    %2944 = vmatpush1.msra.mxu0 %v2528
    %2945 = vmatprep.subr.mxu0 0.0
    %2946 = vmatpush1.msra.mxu0 %v2527
    %2947 = vmatprep.subr.mxu0 0.0
    %2948 = vmatpush1.msra.mxu0 %v2526
    %2949 = vmatprep.subr.mxu0 0.0
    %2950 = vmatpush2.msra.mxu0 0.0
    %2951 = vmatprep.subr.mxu0 0.0
    %2952 = vmatpush2.msra.mxu0 0.0
    %2953 = vmatprep.subr.mxu0 0.0
    %2954 = vmatpush2.msra.mxu0 0.0
    %2955 = vmatprep.subr.mxu0 0.0
    %2956 = vmatpush2.msra.mxu0 0.0
    %2957 = vmatprep.subr.mxu0 0.0
    %2958 = vmatpush2.msra.mxu0 0.0
    %2959 = vmatprep.subr.mxu0 0.0
    %2960 = vmatpush2.msra.mxu0 0.0
    %2961 = vmatprep.subr.mxu0 0.0
    %2962 = vmatpush2.msra.mxu0 0.0
    %2963 = vmatprep.subr.mxu0 0.0
    %2964 = vmatpush2.msra.mxu0 0.0
    %2965 = vmatprep.subr.mxu0 0.0
    %2966 = vmatpush2.msra.mxu0 0.0
    %2967 = vmatprep.subr.mxu0 0.0
    %2968 = vmatpush2.msra.mxu0 0.0
    %2969 = vmatprep.subr.mxu0 0.0
    %2970 = vmatpush2.msra.mxu0 0.0
    %2971 = vmatprep.subr.mxu0 0.0
    %2972 = vmatpush2.msra.mxu0 0.0
    %2973 = vmatprep.subr.mxu0 0.0
    %2974 = vmatpush2.msra.mxu0 0.0
    %2975 = vmatprep.subr.mxu0 0.0
    %2976 = vmatpush2.msra.mxu0 0.0
    %2977 = vmatprep.subr.mxu0 0.0
    %2978 = vmatpush2.msra.mxu0 0.0
    %2979 = vmatprep.subr.mxu0 0.0
    %2980 = vmatpush2.msra.mxu0 0.0
    %2981 = vmatprep.mubr.f32.mxu0 0.0
    %2982 = vmatmul.mubr.f32.gmra.mxu0 %v2915
    %v2983 = vpop.f32.mrf.mxu0
    %v2984 = vadd.f32 %v2535, %v2983
    %v2985 = vpop.f32.mrf.mxu0
    %2986 = vdwg.mxu0
    %2988 = vrot.lane.b32.xlu0 %v2419, 64
    %v2989 = vpop.permute.xlu0 %2988
    %v2990 = vsel %vm171, %v2989, 0
    %2992 = vmatprep.subr.mxu0 0.0
    %2993 = vmatpush1.msra.mxu0 0.0
    %2994 = vmatprep.subr.mxu0 0.0
    %2995 = vmatpush1.msra.mxu0 0.0
    %2996 = vmatprep.subr.mxu0 0.0
    %2997 = vmatpush1.msra.mxu0 0.0
    %2998 = vmatprep.subr.mxu0 0.0
    %2999 = vmatpush1.msra.mxu0 0.0
    %3000 = vmatprep.subr.mxu0 0.0
    %3001 = vmatpush1.msra.mxu0 0.0
    %3002 = vmatprep.subr.mxu0 0.0
    %3003 = vmatpush1.msra.mxu0 0.0
    %3004 = vmatprep.subr.mxu0 0.0
    %3005 = vmatpush1.msra.mxu0 0.0
    %3006 = vmatprep.subr.mxu0 0.0
    %3007 = vmatpush1.msra.mxu0 0.0
    %3008 = vmatprep.subr.mxu0 0.0
    %3009 = vmatpush1.msra.mxu0 0.0
    %3010 = vmatprep.subr.mxu0 0.0
    %3011 = vmatpush1.msra.mxu0 0.0
    %3012 = vmatprep.subr.mxu0 0.0
    %3013 = vmatpush1.msra.mxu0 0.0
    %3014 = vmatprep.subr.mxu0 0.0
    %3015 = vmatpush1.msra.mxu0 0.0
    %3016 = vmatprep.subr.mxu0 0.0
    %3017 = vmatpush1.msra.mxu0 %v2529
    %3018 = vmatprep.subr.mxu0 0.0
    %3019 = vmatpush1.msra.mxu0 %v2528
    %3020 = vmatprep.subr.mxu0 0.0
    %3021 = vmatpush1.msra.mxu0 %v2527
    %3022 = vmatprep.subr.mxu0 0.0
    %3023 = vmatpush1.msra.mxu0 %v2526
    %3024 = vmatprep.subr.mxu0 0.0
    %3025 = vmatpush2.msra.mxu0 0.0
    %3026 = vmatprep.subr.mxu0 0.0
    %3027 = vmatpush2.msra.mxu0 0.0
    %3028 = vmatprep.subr.mxu0 0.0
    %3029 = vmatpush2.msra.mxu0 0.0
    %3030 = vmatprep.subr.mxu0 0.0
    %3031 = vmatpush2.msra.mxu0 0.0
    %3032 = vmatprep.subr.mxu0 0.0
    %3033 = vmatpush2.msra.mxu0 0.0
    %3034 = vmatprep.subr.mxu0 0.0
    %3035 = vmatpush2.msra.mxu0 0.0
    %3036 = vmatprep.subr.mxu0 0.0
    %3037 = vmatpush2.msra.mxu0 0.0
    %3038 = vmatprep.subr.mxu0 0.0
    %3039 = vmatpush2.msra.mxu0 0.0
    %3040 = vmatprep.subr.mxu0 0.0
    %3041 = vmatpush2.msra.mxu0 0.0
    %3042 = vmatprep.subr.mxu0 0.0
    %3043 = vmatpush2.msra.mxu0 0.0
    %3044 = vmatprep.subr.mxu0 0.0
    %3045 = vmatpush2.msra.mxu0 0.0
    %3046 = vmatprep.subr.mxu0 0.0
    %3047 = vmatpush2.msra.mxu0 0.0
    %3048 = vmatprep.subr.mxu0 0.0
    %3049 = vmatpush2.msra.mxu0 0.0
    %3050 = vmatprep.subr.mxu0 0.0
    %3051 = vmatpush2.msra.mxu0 0.0
    %3052 = vmatprep.subr.mxu0 0.0
    %3053 = vmatpush2.msra.mxu0 0.0
    %3054 = vmatprep.subr.mxu0 0.0
    %3055 = vmatpush2.msra.mxu0 0.0
    %3056 = vmatprep.mubr.f32.mxu0 0.0
    %3057 = vmatmul.mubr.f32.gmra.mxu0 %v2990
    %v3058 = vpop.f32.mrf.mxu0
    %v3059 = vadd.f32 %v2535, %v3058
    %v3060 = vpop.f32.mrf.mxu0
    %3061 = vdwg.mxu0
    %3063 = vrot.lane.b32.xlu0 %v2525, 64
    %v3064 = vpop.permute.xlu0 %3063
    %v3065 = vsel %vm171, %v3064, 0
    %3067 = vmatprep.subr.mxu0 0.0
    %3068 = vmatpush1.msra.mxu0 0.0
    %3069 = vmatprep.subr.mxu0 0.0
    %3070 = vmatpush1.msra.mxu0 0.0
    %3071 = vmatprep.subr.mxu0 0.0
    %3072 = vmatpush1.msra.mxu0 0.0
    %3073 = vmatprep.subr.mxu0 0.0
    %3074 = vmatpush1.msra.mxu0 0.0
    %3075 = vmatprep.subr.mxu0 0.0
    %3076 = vmatpush1.msra.mxu0 0.0
    %3077 = vmatprep.subr.mxu0 0.0
    %3078 = vmatpush1.msra.mxu0 0.0
    %3079 = vmatprep.subr.mxu0 0.0
    %3080 = vmatpush1.msra.mxu0 0.0
    %3081 = vmatprep.subr.mxu0 0.0
    %3082 = vmatpush1.msra.mxu0 0.0
    %3083 = vmatprep.subr.mxu0 0.0
    %3084 = vmatpush1.msra.mxu0 0.0
    %3085 = vmatprep.subr.mxu0 0.0
    %3086 = vmatpush1.msra.mxu0 0.0
    %3087 = vmatprep.subr.mxu0 0.0
    %3088 = vmatpush1.msra.mxu0 0.0
    %3089 = vmatprep.subr.mxu0 0.0
    %3090 = vmatpush1.msra.mxu0 0.0
    %3091 = vmatprep.subr.mxu0 0.0
    %3092 = vmatpush1.msra.mxu0 %v2529
    %3093 = vmatprep.subr.mxu0 0.0
    %3094 = vmatpush1.msra.mxu0 %v2528
    %3095 = vmatprep.subr.mxu0 0.0
    %3096 = vmatpush1.msra.mxu0 %v2527
    %3097 = vmatprep.subr.mxu0 0.0
    %3098 = vmatpush1.msra.mxu0 %v2526
    %3099 = vmatprep.subr.mxu0 0.0
    %3100 = vmatpush2.msra.mxu0 0.0
    %3101 = vmatprep.subr.mxu0 0.0
    %3102 = vmatpush2.msra.mxu0 0.0
    %3103 = vmatprep.subr.mxu0 0.0
    %3104 = vmatpush2.msra.mxu0 0.0
    %3105 = vmatprep.subr.mxu0 0.0
    %3106 = vmatpush2.msra.mxu0 0.0
    %3107 = vmatprep.subr.mxu0 0.0
    %3108 = vmatpush2.msra.mxu0 0.0
    %3109 = vmatprep.subr.mxu0 0.0
    %3110 = vmatpush2.msra.mxu0 0.0
    %3111 = vmatprep.subr.mxu0 0.0
    %3112 = vmatpush2.msra.mxu0 0.0
    %3113 = vmatprep.subr.mxu0 0.0
    %3114 = vmatpush2.msra.mxu0 0.0
    %3115 = vmatprep.subr.mxu0 0.0
    %3116 = vmatpush2.msra.mxu0 0.0
    %3117 = vmatprep.subr.mxu0 0.0
    %3118 = vmatpush2.msra.mxu0 0.0
    %3119 = vmatprep.subr.mxu0 0.0
    %3120 = vmatpush2.msra.mxu0 0.0
    %3121 = vmatprep.subr.mxu0 0.0
    %3122 = vmatpush2.msra.mxu0 0.0
    %3123 = vmatprep.subr.mxu0 0.0
    %3124 = vmatpush2.msra.mxu0 0.0
    %3125 = vmatprep.subr.mxu0 0.0
    %3126 = vmatpush2.msra.mxu0 0.0
    %3127 = vmatprep.subr.mxu0 0.0
    %3128 = vmatpush2.msra.mxu0 0.0
    %3129 = vmatprep.subr.mxu0 0.0
    %3130 = vmatpush2.msra.mxu0 0.0
    %3131 = vmatprep.mubr.f32.mxu0 0.0
    %3132 = vmatmul.mubr.f32.gmra.mxu0 %v3065
    %v3133 = vpop.f32.mrf.mxu0
    %v3134 = vadd.f32 %v2535, %v3133
    %v3135 = vpop.f32.mrf.mxu0
    %3136 = vdwg.mxu0
    %v3137 = vld [vmem:[%s8] sm:$0xff]
    %v3138 = vld [vmem:[%s8 + $0x8] sm:$0xff]
    %v3139 = vld [vmem:[%s8 + $0x10] sm:$0xff]
    %v3140 = vld [vmem:[%s8 + $0x18] sm:$0xff]
    %3141 = vmatprep.subr.mxu0 0.0
    %3142 = vmatpush1.msra.mxu0 0.0
    %3143 = vmatprep.subr.mxu0 0.0
    %3144 = vmatpush1.msra.mxu0 0.0
    %3145 = vmatprep.subr.mxu0 0.0
    %3146 = vmatpush1.msra.mxu0 0.0
    %3147 = vmatprep.subr.mxu0 0.0
    %3148 = vmatpush1.msra.mxu0 0.0
    %3149 = vmatprep.subr.mxu0 0.0
    %3150 = vmatpush1.msra.mxu0 0.0
    %3151 = vmatprep.subr.mxu0 0.0
    %3152 = vmatpush1.msra.mxu0 0.0
    %3153 = vmatprep.subr.mxu0 0.0
    %3154 = vmatpush1.msra.mxu0 0.0
    %3155 = vmatprep.subr.mxu0 0.0
    %3156 = vmatpush1.msra.mxu0 0.0
    %3157 = vmatprep.subr.mxu0 0.0
    %3158 = vmatpush1.msra.mxu0 0.0
    %3159 = vmatprep.subr.mxu0 0.0
    %3160 = vmatpush1.msra.mxu0 0.0
    %3161 = vmatprep.subr.mxu0 0.0
    %3162 = vmatpush1.msra.mxu0 0.0
    %3163 = vmatprep.subr.mxu0 0.0
    %3164 = vmatpush1.msra.mxu0 0.0
    %3165 = vmatprep.subr.mxu0 0.0
    %3166 = vmatpush1.msra.mxu0 %v3140
    %3167 = vmatprep.subr.mxu0 0.0
    %3168 = vmatpush1.msra.mxu0 %v3139
    %3169 = vmatprep.subr.mxu0 0.0
    %3170 = vmatpush1.msra.mxu0 %v3138
    %3171 = vmatprep.subr.mxu0 0.0
    %3172 = vmatpush1.msra.mxu0 %v3137
    %3173 = vmatprep.subr.mxu0 0.0
    %3174 = vmatpush2.msra.mxu0 0.0
    %3175 = vmatprep.subr.mxu0 0.0
    %3176 = vmatpush2.msra.mxu0 0.0
    %3177 = vmatprep.subr.mxu0 0.0
    %3178 = vmatpush2.msra.mxu0 0.0
    %3179 = vmatprep.subr.mxu0 0.0
    %3180 = vmatpush2.msra.mxu0 0.0
    %3181 = vmatprep.subr.mxu0 0.0
    %3182 = vmatpush2.msra.mxu0 0.0
    %3183 = vmatprep.subr.mxu0 0.0
    %3184 = vmatpush2.msra.mxu0 0.0
    %3185 = vmatprep.subr.mxu0 0.0
    %3186 = vmatpush2.msra.mxu0 0.0
    %3187 = vmatprep.subr.mxu0 0.0
    %3188 = vmatpush2.msra.mxu0 0.0
    %3189 = vmatprep.subr.mxu0 0.0
    %3190 = vmatpush2.msra.mxu0 0.0
    %3191 = vmatprep.subr.mxu0 0.0
    %3192 = vmatpush2.msra.mxu0 0.0
    %3193 = vmatprep.subr.mxu0 0.0
    %3194 = vmatpush2.msra.mxu0 0.0
    %3195 = vmatprep.subr.mxu0 0.0
    %3196 = vmatpush2.msra.mxu0 0.0
    %3197 = vmatprep.subr.mxu0 0.0
    %3198 = vmatpush2.msra.mxu0 0.0
    %3199 = vmatprep.subr.mxu0 0.0
    %3200 = vmatpush2.msra.mxu0 0.0
    %3201 = vmatprep.subr.mxu0 0.0
    %3202 = vmatpush2.msra.mxu0 0.0
    %3203 = vmatprep.subr.mxu0 0.0
    %3204 = vmatpush2.msra.mxu0 0.0
    %3205 = vmatprep.mubr.f32.mxu0 0.0
    %3206 = vmatmul.mubr.f32.gmra.mxu0 %v173
    %v3207 = vpop.f32.mrf.mxu0
    %v3208 = vadd.f32 0.0, %v3207
    %v3209 = vpop.f32.mrf.mxu0
    %3210 = vdwg.mxu0
    %v3211 = vadd.f32 %v2609, %v3208
    %v3212 = vxor.u32 %v3211, 2147483648
    %v3213 = vmul.f32 %v3212, 1.442695
    %v3214 = vpow.pop %v3213
    %v3215 = vadd.f32 %v3214, 1.0
    %v3216 = vrcp.pop %v3215
    %v3217 = vmul.f32 1.0, %v3216
    %v3218 = vtanh.pop %v3211
    %v3219 = vmul.f32 %v3217, 0.0
    %3221 = vrot.lane.b32.xlu0 %v3218, 64
    %v3222 = vpop.permute.xlu0 %3221
    %v3224 = vmul.f32 %v3217, %v3222
    %3226 = vrot.lane.b32.xlu0 %v3224, 96
    %v3227 = vpop.permute.xlu0 %3226
    %v3229 = vadd.f32 %v3219, %v3227
    %v3230 = vtanh.pop %v3229
    %3232 = vrot.lane.b32.xlu0 %v3230, 64
    %v3233 = vpop.permute.xlu0 %3232
    %v3235 = vmul.f32 %v3217, %v3233
    %v3236 = vxor.u32 %v3235, 2147483648
    %v3237 = vmul.f32 %v3236, 1.442695
    %v3238 = vpow.pop %v3237
    %v3239 = vadd.f32 %v3238, 1.0
    %v3240 = vrcp.pop %v3239
    %v3241 = vmul.f32 1.0, %v3240
    %3243 = vrot.lane.b32.xlu0 %v3235, 64
    %v3244 = vpop.permute.xlu0 %3243
    %v3245 = vsel %vm171, %v3244, 0
    %3247 = vmatprep.subr.mxu0 0.0
    %3248 = vmatpush1.msra.mxu0 0.0
    %3249 = vmatprep.subr.mxu0 0.0
    %3250 = vmatpush1.msra.mxu0 0.0
    %3251 = vmatprep.subr.mxu0 0.0
    %3252 = vmatpush1.msra.mxu0 0.0
    %3253 = vmatprep.subr.mxu0 0.0
    %3254 = vmatpush1.msra.mxu0 0.0
    %3255 = vmatprep.subr.mxu0 0.0
    %3256 = vmatpush1.msra.mxu0 0.0
    %3257 = vmatprep.subr.mxu0 0.0
    %3258 = vmatpush1.msra.mxu0 0.0
    %3259 = vmatprep.subr.mxu0 0.0
    %3260 = vmatpush1.msra.mxu0 0.0
    %3261 = vmatprep.subr.mxu0 0.0
    %3262 = vmatpush1.msra.mxu0 0.0
    %3263 = vmatprep.subr.mxu0 0.0
    %3264 = vmatpush1.msra.mxu0 0.0
    %3265 = vmatprep.subr.mxu0 0.0
    %3266 = vmatpush1.msra.mxu0 0.0
    %3267 = vmatprep.subr.mxu0 0.0
    %3268 = vmatpush1.msra.mxu0 0.0
    %3269 = vmatprep.subr.mxu0 0.0
    %3270 = vmatpush1.msra.mxu0 0.0
    %3271 = vmatprep.subr.mxu0 0.0
    %3272 = vmatpush1.msra.mxu0 %v3140
    %3273 = vmatprep.subr.mxu0 0.0
    %3274 = vmatpush1.msra.mxu0 %v3139
    %3275 = vmatprep.subr.mxu0 0.0
    %3276 = vmatpush1.msra.mxu0 %v3138
    %3277 = vmatprep.subr.mxu0 0.0
    %3278 = vmatpush1.msra.mxu0 %v3137
    %3279 = vmatprep.subr.mxu0 0.0
    %3280 = vmatpush2.msra.mxu0 0.0
    %3281 = vmatprep.subr.mxu0 0.0
    %3282 = vmatpush2.msra.mxu0 0.0
    %3283 = vmatprep.subr.mxu0 0.0
    %3284 = vmatpush2.msra.mxu0 0.0
    %3285 = vmatprep.subr.mxu0 0.0
    %3286 = vmatpush2.msra.mxu0 0.0
    %3287 = vmatprep.subr.mxu0 0.0
    %3288 = vmatpush2.msra.mxu0 0.0
    %3289 = vmatprep.subr.mxu0 0.0
    %3290 = vmatpush2.msra.mxu0 0.0
    %3291 = vmatprep.subr.mxu0 0.0
    %3292 = vmatpush2.msra.mxu0 0.0
    %3293 = vmatprep.subr.mxu0 0.0
    %3294 = vmatpush2.msra.mxu0 0.0
    %3295 = vmatprep.subr.mxu0 0.0
    %3296 = vmatpush2.msra.mxu0 0.0
    %3297 = vmatprep.subr.mxu0 0.0
    %3298 = vmatpush2.msra.mxu0 0.0
    %3299 = vmatprep.subr.mxu0 0.0
    %3300 = vmatpush2.msra.mxu0 0.0
    %3301 = vmatprep.subr.mxu0 0.0
    %3302 = vmatpush2.msra.mxu0 0.0
    %3303 = vmatprep.subr.mxu0 0.0
    %3304 = vmatpush2.msra.mxu0 0.0
    %3305 = vmatprep.subr.mxu0 0.0
    %3306 = vmatpush2.msra.mxu0 0.0
    %3307 = vmatprep.subr.mxu0 0.0
    %3308 = vmatpush2.msra.mxu0 0.0
    %3309 = vmatprep.subr.mxu0 0.0
    %3310 = vmatpush2.msra.mxu0 0.0
    %3311 = vmatprep.mubr.f32.mxu0 0.0
    %3312 = vmatmul.mubr.f32.gmra.mxu0 %v3245
    %v3313 = vpop.f32.mrf.mxu0
    %v3314 = vadd.f32 0.0, %v3313
    %v3315 = vpop.f32.mrf.mxu0
    %3316 = vdwg.mxu0
    %v3317 = vadd.f32 %v2684, %v3314
    %v3318 = vxor.u32 %v3317, 2147483648
    %v3319 = vmul.f32 %v3318, 1.442695
    %v3320 = vpow.pop %v3319
    %v3321 = vadd.f32 %v3320, 1.0
    %v3322 = vrcp.pop %v3321
    %v3323 = vmul.f32 1.0, %v3322
    %v3324 = vtanh.pop %v3317
    %v3325 = vmul.f32 %v3323, %v3229
    %3327 = vrot.lane.b32.xlu0 %v3324, 64
    %v3328 = vpop.permute.xlu0 %3327
    %v3330 = vmul.f32 %v3323, %v3328
    %3332 = vrot.lane.b32.xlu0 %v3330, 96
    %v3333 = vpop.permute.xlu0 %3332
    %v3335 = vadd.f32 %v3325, %v3333
    %v3336 = vtanh.pop %v3335
    %3338 = vrot.lane.b32.xlu0 %v3336, 64
    %v3339 = vpop.permute.xlu0 %3338
    %v3341 = vmul.f32 %v3323, %v3339
    %v3342 = vxor.u32 %v3341, 2147483648
    %v3343 = vmul.f32 %v3342, 1.442695
    %v3344 = vpow.pop %v3343
    %v3345 = vadd.f32 %v3344, 1.0
    %v3346 = vrcp.pop %v3345
    %v3347 = vmul.f32 1.0, %v3346
    %3349 = vrot.lane.b32.xlu0 %v3341, 64
    %v3350 = vpop.permute.xlu0 %3349
    %v3351 = vsel %vm171, %v3350, 0
    %3353 = vmatprep.subr.mxu0 0.0
    %3354 = vmatpush1.msra.mxu0 0.0
    %3355 = vmatprep.subr.mxu0 0.0
    %3356 = vmatpush1.msra.mxu0 0.0
    %3357 = vmatprep.subr.mxu0 0.0
    %3358 = vmatpush1.msra.mxu0 0.0
    %3359 = vmatprep.subr.mxu0 0.0
    %3360 = vmatpush1.msra.mxu0 0.0
    %3361 = vmatprep.subr.mxu0 0.0
    %3362 = vmatpush1.msra.mxu0 0.0
    %3363 = vmatprep.subr.mxu0 0.0
    %3364 = vmatpush1.msra.mxu0 0.0
    %3365 = vmatprep.subr.mxu0 0.0
    %3366 = vmatpush1.msra.mxu0 0.0
    %3367 = vmatprep.subr.mxu0 0.0
    %3368 = vmatpush1.msra.mxu0 0.0
    %3369 = vmatprep.subr.mxu0 0.0
    %3370 = vmatpush1.msra.mxu0 0.0
    %3371 = vmatprep.subr.mxu0 0.0
    %3372 = vmatpush1.msra.mxu0 0.0
    %3373 = vmatprep.subr.mxu0 0.0
    %3374 = vmatpush1.msra.mxu0 0.0
    %3375 = vmatprep.subr.mxu0 0.0
    %3376 = vmatpush1.msra.mxu0 0.0
    %3377 = vmatprep.subr.mxu0 0.0
    %3378 = vmatpush1.msra.mxu0 %v3140
    %3379 = vmatprep.subr.mxu0 0.0
    %3380 = vmatpush1.msra.mxu0 %v3139
    %3381 = vmatprep.subr.mxu0 0.0
    %3382 = vmatpush1.msra.mxu0 %v3138
    %3383 = vmatprep.subr.mxu0 0.0
    %3384 = vmatpush1.msra.mxu0 %v3137
    %3385 = vmatprep.subr.mxu0 0.0
    %3386 = vmatpush2.msra.mxu0 0.0
    %3387 = vmatprep.subr.mxu0 0.0
    %3388 = vmatpush2.msra.mxu0 0.0
    %3389 = vmatprep.subr.mxu0 0.0
    %3390 = vmatpush2.msra.mxu0 0.0
    %3391 = vmatprep.subr.mxu0 0.0
    %3392 = vmatpush2.msra.mxu0 0.0
    %3393 = vmatprep.subr.mxu0 0.0
    %3394 = vmatpush2.msra.mxu0 0.0
    %3395 = vmatprep.subr.mxu0 0.0
    %3396 = vmatpush2.msra.mxu0 0.0
    %3397 = vmatprep.subr.mxu0 0.0
    %3398 = vmatpush2.msra.mxu0 0.0
    %3399 = vmatprep.subr.mxu0 0.0
    %3400 = vmatpush2.msra.mxu0 0.0
    %3401 = vmatprep.subr.mxu0 0.0
    %3402 = vmatpush2.msra.mxu0 0.0
    %3403 = vmatprep.subr.mxu0 0.0
    %3404 = vmatpush2.msra.mxu0 0.0
    %3405 = vmatprep.subr.mxu0 0.0
    %3406 = vmatpush2.msra.mxu0 0.0
    %3407 = vmatprep.subr.mxu0 0.0
    %3408 = vmatpush2.msra.mxu0 0.0
    %3409 = vmatprep.subr.mxu0 0.0
    %3410 = vmatpush2.msra.mxu0 0.0
    %3411 = vmatprep.subr.mxu0 0.0
    %3412 = vmatpush2.msra.mxu0 0.0
    %3413 = vmatprep.subr.mxu0 0.0
    %3414 = vmatpush2.msra.mxu0 0.0
    %3415 = vmatprep.subr.mxu0 0.0
    %3416 = vmatpush2.msra.mxu0 0.0
    %3417 = vmatprep.mubr.f32.mxu0 0.0
    %3418 = vmatmul.mubr.f32.gmra.mxu0 %v3351
    %v3419 = vpop.f32.mrf.mxu0
    %v3420 = vadd.f32 0.0, %v3419
    %v3421 = vpop.f32.mrf.mxu0
    %3422 = vdwg.mxu0
    %v3423 = vadd.f32 %v2759, %v3420
    %v3424 = vxor.u32 %v3423, 2147483648
    %v3425 = vmul.f32 %v3424, 1.442695
    %v3426 = vpow.pop %v3425
    %v3427 = vadd.f32 %v3426, 1.0
    %v3428 = vrcp.pop %v3427
    %v3429 = vmul.f32 1.0, %v3428
    %v3430 = vtanh.pop %v3423
    %v3431 = vmul.f32 %v3429, %v3335
    %3433 = vrot.lane.b32.xlu0 %v3430, 64
    %v3434 = vpop.permute.xlu0 %3433
    %v3436 = vmul.f32 %v3429, %v3434
    %3438 = vrot.lane.b32.xlu0 %v3436, 96
    %v3439 = vpop.permute.xlu0 %3438
    %v3441 = vadd.f32 %v3431, %v3439
    %v3442 = vtanh.pop %v3441
    %3444 = vrot.lane.b32.xlu0 %v3442, 64
    %v3445 = vpop.permute.xlu0 %3444
    %v3447 = vmul.f32 %v3429, %v3445
    %v3448 = vxor.u32 %v3447, 2147483648
    %v3449 = vmul.f32 %v3448, 1.442695
    %v3450 = vpow.pop %v3449
    %v3451 = vadd.f32 %v3450, 1.0
    %v3452 = vrcp.pop %v3451
    %v3453 = vmul.f32 1.0, %v3452
    %3455 = vrot.lane.b32.xlu0 %v3447, 64
    %v3456 = vpop.permute.xlu0 %3455
    %v3457 = vsel %vm171, %v3456, 0
    %3459 = vmatprep.subr.mxu0 0.0
    %3460 = vmatpush1.msra.mxu0 0.0
    %3461 = vmatprep.subr.mxu0 0.0
    %3462 = vmatpush1.msra.mxu0 0.0
    %3463 = vmatprep.subr.mxu0 0.0
    %3464 = vmatpush1.msra.mxu0 0.0
    %3465 = vmatprep.subr.mxu0 0.0
    %3466 = vmatpush1.msra.mxu0 0.0
    %3467 = vmatprep.subr.mxu0 0.0
    %3468 = vmatpush1.msra.mxu0 0.0
    %3469 = vmatprep.subr.mxu0 0.0
    %3470 = vmatpush1.msra.mxu0 0.0
    %3471 = vmatprep.subr.mxu0 0.0
    %3472 = vmatpush1.msra.mxu0 0.0
    %3473 = vmatprep.subr.mxu0 0.0
    %3474 = vmatpush1.msra.mxu0 0.0
    %3475 = vmatprep.subr.mxu0 0.0
    %3476 = vmatpush1.msra.mxu0 0.0
    %3477 = vmatprep.subr.mxu0 0.0
    %3478 = vmatpush1.msra.mxu0 0.0
    %3479 = vmatprep.subr.mxu0 0.0
    %3480 = vmatpush1.msra.mxu0 0.0
    %3481 = vmatprep.subr.mxu0 0.0
    %3482 = vmatpush1.msra.mxu0 0.0
    %3483 = vmatprep.subr.mxu0 0.0
    %3484 = vmatpush1.msra.mxu0 %v3140
    %3485 = vmatprep.subr.mxu0 0.0
    %3486 = vmatpush1.msra.mxu0 %v3139
    %3487 = vmatprep.subr.mxu0 0.0
    %3488 = vmatpush1.msra.mxu0 %v3138
    %3489 = vmatprep.subr.mxu0 0.0
    %3490 = vmatpush1.msra.mxu0 %v3137
    %3491 = vmatprep.subr.mxu0 0.0
    %3492 = vmatpush2.msra.mxu0 0.0
    %3493 = vmatprep.subr.mxu0 0.0
    %3494 = vmatpush2.msra.mxu0 0.0
    %3495 = vmatprep.subr.mxu0 0.0
    %3496 = vmatpush2.msra.mxu0 0.0
    %3497 = vmatprep.subr.mxu0 0.0
    %3498 = vmatpush2.msra.mxu0 0.0
    %3499 = vmatprep.subr.mxu0 0.0
    %3500 = vmatpush2.msra.mxu0 0.0
    %3501 = vmatprep.subr.mxu0 0.0
    %3502 = vmatpush2.msra.mxu0 0.0
    %3503 = vmatprep.subr.mxu0 0.0
    %3504 = vmatpush2.msra.mxu0 0.0
    %3505 = vmatprep.subr.mxu0 0.0
    %3506 = vmatpush2.msra.mxu0 0.0
    %3507 = vmatprep.subr.mxu0 0.0
    %3508 = vmatpush2.msra.mxu0 0.0
    %3509 = vmatprep.subr.mxu0 0.0
    %3510 = vmatpush2.msra.mxu0 0.0
    %3511 = vmatprep.subr.mxu0 0.0
    %3512 = vmatpush2.msra.mxu0 0.0
    %3513 = vmatprep.subr.mxu0 0.0
    %3514 = vmatpush2.msra.mxu0 0.0
    %3515 = vmatprep.subr.mxu0 0.0
    %3516 = vmatpush2.msra.mxu0 0.0
    %3517 = vmatprep.subr.mxu0 0.0
    %3518 = vmatpush2.msra.mxu0 0.0
    %3519 = vmatprep.subr.mxu0 0.0
    %3520 = vmatpush2.msra.mxu0 0.0
    %3521 = vmatprep.subr.mxu0 0.0
    %3522 = vmatpush2.msra.mxu0 0.0
    %3523 = vmatprep.mubr.f32.mxu0 0.0
    %3524 = vmatmul.mubr.f32.gmra.mxu0 %v3457
    %v3525 = vpop.f32.mrf.mxu0
    %v3526 = vadd.f32 0.0, %v3525
    %v3527 = vpop.f32.mrf.mxu0
    %3528 = vdwg.mxu0
    %v3529 = vadd.f32 %v2834, %v3526
    %v3530 = vxor.u32 %v3529, 2147483648
    %v3531 = vmul.f32 %v3530, 1.442695
    %v3532 = vpow.pop %v3531
    %v3533 = vadd.f32 %v3532, 1.0
    %v3534 = vrcp.pop %v3533
    %v3535 = vmul.f32 1.0, %v3534
    %v3536 = vtanh.pop %v3529
    %v3537 = vmul.f32 %v3535, %v3441
    %3539 = vrot.lane.b32.xlu0 %v3536, 64
    %v3540 = vpop.permute.xlu0 %3539
    %v3542 = vmul.f32 %v3535, %v3540
    %3544 = vrot.lane.b32.xlu0 %v3542, 96
    %v3545 = vpop.permute.xlu0 %3544
    %v3547 = vadd.f32 %v3537, %v3545
    %v3548 = vtanh.pop %v3547
    %3550 = vrot.lane.b32.xlu0 %v3548, 64
    %v3551 = vpop.permute.xlu0 %3550
    %v3553 = vmul.f32 %v3535, %v3551
    %v3554 = vxor.u32 %v3553, 2147483648
    %v3555 = vmul.f32 %v3554, 1.442695
    %v3556 = vpow.pop %v3555
    %v3557 = vadd.f32 %v3556, 1.0
    %v3558 = vrcp.pop %v3557
    %v3559 = vmul.f32 1.0, %v3558
    %3561 = vrot.lane.b32.xlu0 %v3553, 64
    %v3562 = vpop.permute.xlu0 %3561
    %v3563 = vsel %vm171, %v3562, 0
    %3565 = vmatprep.subr.mxu0 0.0
    %3566 = vmatpush1.msra.mxu0 0.0
    %3567 = vmatprep.subr.mxu0 0.0
    %3568 = vmatpush1.msra.mxu0 0.0
    %3569 = vmatprep.subr.mxu0 0.0
    %3570 = vmatpush1.msra.mxu0 0.0
    %3571 = vmatprep.subr.mxu0 0.0
    %3572 = vmatpush1.msra.mxu0 0.0
    %3573 = vmatprep.subr.mxu0 0.0
    %3574 = vmatpush1.msra.mxu0 0.0
    %3575 = vmatprep.subr.mxu0 0.0
    %3576 = vmatpush1.msra.mxu0 0.0
    %3577 = vmatprep.subr.mxu0 0.0
    %3578 = vmatpush1.msra.mxu0 0.0
    %3579 = vmatprep.subr.mxu0 0.0
    %3580 = vmatpush1.msra.mxu0 0.0
    %3581 = vmatprep.subr.mxu0 0.0
    %3582 = vmatpush1.msra.mxu0 0.0
    %3583 = vmatprep.subr.mxu0 0.0
    %3584 = vmatpush1.msra.mxu0 0.0
    %3585 = vmatprep.subr.mxu0 0.0
    %3586 = vmatpush1.msra.mxu0 0.0
    %3587 = vmatprep.subr.mxu0 0.0
    %3588 = vmatpush1.msra.mxu0 0.0
    %3589 = vmatprep.subr.mxu0 0.0
    %3590 = vmatpush1.msra.mxu0 %v3140
    %3591 = vmatprep.subr.mxu0 0.0
    %3592 = vmatpush1.msra.mxu0 %v3139
    %3593 = vmatprep.subr.mxu0 0.0
    %3594 = vmatpush1.msra.mxu0 %v3138
    %3595 = vmatprep.subr.mxu0 0.0
    %3596 = vmatpush1.msra.mxu0 %v3137
    %3597 = vmatprep.subr.mxu0 0.0
    %3598 = vmatpush2.msra.mxu0 0.0
    %3599 = vmatprep.subr.mxu0 0.0
    %3600 = vmatpush2.msra.mxu0 0.0
    %3601 = vmatprep.subr.mxu0 0.0
    %3602 = vmatpush2.msra.mxu0 0.0
    %3603 = vmatprep.subr.mxu0 0.0
    %3604 = vmatpush2.msra.mxu0 0.0
    %3605 = vmatprep.subr.mxu0 0.0
    %3606 = vmatpush2.msra.mxu0 0.0
    %3607 = vmatprep.subr.mxu0 0.0
    %3608 = vmatpush2.msra.mxu0 0.0
    %3609 = vmatprep.subr.mxu0 0.0
    %3610 = vmatpush2.msra.mxu0 0.0
    %3611 = vmatprep.subr.mxu0 0.0
    %3612 = vmatpush2.msra.mxu0 0.0
    %3613 = vmatprep.subr.mxu0 0.0
    %3614 = vmatpush2.msra.mxu0 0.0
    %3615 = vmatprep.subr.mxu0 0.0
    %3616 = vmatpush2.msra.mxu0 0.0
    %3617 = vmatprep.subr.mxu0 0.0
    %3618 = vmatpush2.msra.mxu0 0.0
    %3619 = vmatprep.subr.mxu0 0.0
    %3620 = vmatpush2.msra.mxu0 0.0
    %3621 = vmatprep.subr.mxu0 0.0
    %3622 = vmatpush2.msra.mxu0 0.0
    %3623 = vmatprep.subr.mxu0 0.0
    %3624 = vmatpush2.msra.mxu0 0.0
    %3625 = vmatprep.subr.mxu0 0.0
    %3626 = vmatpush2.msra.mxu0 0.0
    %3627 = vmatprep.subr.mxu0 0.0
    %3628 = vmatpush2.msra.mxu0 0.0
    %3629 = vmatprep.mubr.f32.mxu0 0.0
    %3630 = vmatmul.mubr.f32.gmra.mxu0 %v3563
    %v3631 = vpop.f32.mrf.mxu0
    %v3632 = vadd.f32 0.0, %v3631
    %v3633 = vpop.f32.mrf.mxu0
    %3634 = vdwg.mxu0
    %v3635 = vadd.f32 %v2909, %v3632
    %v3636 = vxor.u32 %v3635, 2147483648
    %v3637 = vmul.f32 %v3636, 1.442695
    %v3638 = vpow.pop %v3637
    %v3639 = vadd.f32 %v3638, 1.0
    %v3640 = vrcp.pop %v3639
    %v3641 = vmul.f32 1.0, %v3640
    %v3642 = vtanh.pop %v3635
    %v3643 = vmul.f32 %v3641, %v3547
    %3645 = vrot.lane.b32.xlu0 %v3642, 64
    %v3646 = vpop.permute.xlu0 %3645
    %v3648 = vmul.f32 %v3641, %v3646
    %3650 = vrot.lane.b32.xlu0 %v3648, 96
    %v3651 = vpop.permute.xlu0 %3650
    %v3653 = vadd.f32 %v3643, %v3651
    %v3654 = vtanh.pop %v3653
    %3656 = vrot.lane.b32.xlu0 %v3654, 64
    %v3657 = vpop.permute.xlu0 %3656
    %v3659 = vmul.f32 %v3641, %v3657
    %v3660 = vxor.u32 %v3659, 2147483648
    %v3661 = vmul.f32 %v3660, 1.442695
    %v3662 = vpow.pop %v3661
    %v3663 = vadd.f32 %v3662, 1.0
    %v3664 = vrcp.pop %v3663
    %v3665 = vmul.f32 1.0, %v3664
    %3667 = vrot.lane.b32.xlu0 %v3659, 64
    %v3668 = vpop.permute.xlu0 %3667
    %v3669 = vsel %vm171, %v3668, 0
    %3671 = vmatprep.subr.mxu0 0.0
    %3672 = vmatpush1.msra.mxu0 0.0
    %3673 = vmatprep.subr.mxu0 0.0
    %3674 = vmatpush1.msra.mxu0 0.0
    %3675 = vmatprep.subr.mxu0 0.0
    %3676 = vmatpush1.msra.mxu0 0.0
    %3677 = vmatprep.subr.mxu0 0.0
    %3678 = vmatpush1.msra.mxu0 0.0
    %3679 = vmatprep.subr.mxu0 0.0
    %3680 = vmatpush1.msra.mxu0 0.0
    %3681 = vmatprep.subr.mxu0 0.0
    %3682 = vmatpush1.msra.mxu0 0.0
    %3683 = vmatprep.subr.mxu0 0.0
    %3684 = vmatpush1.msra.mxu0 0.0
    %3685 = vmatprep.subr.mxu0 0.0
    %3686 = vmatpush1.msra.mxu0 0.0
    %3687 = vmatprep.subr.mxu0 0.0
    %3688 = vmatpush1.msra.mxu0 0.0
    %3689 = vmatprep.subr.mxu0 0.0
    %3690 = vmatpush1.msra.mxu0 0.0
    %3691 = vmatprep.subr.mxu0 0.0
    %3692 = vmatpush1.msra.mxu0 0.0
    %3693 = vmatprep.subr.mxu0 0.0
    %3694 = vmatpush1.msra.mxu0 0.0
    %3695 = vmatprep.subr.mxu0 0.0
    %3696 = vmatpush1.msra.mxu0 %v3140
    %3697 = vmatprep.subr.mxu0 0.0
    %3698 = vmatpush1.msra.mxu0 %v3139
    %3699 = vmatprep.subr.mxu0 0.0
    %3700 = vmatpush1.msra.mxu0 %v3138
    %3701 = vmatprep.subr.mxu0 0.0
    %3702 = vmatpush1.msra.mxu0 %v3137
    %3703 = vmatprep.subr.mxu0 0.0
    %3704 = vmatpush2.msra.mxu0 0.0
    %3705 = vmatprep.subr.mxu0 0.0
    %3706 = vmatpush2.msra.mxu0 0.0
    %3707 = vmatprep.subr.mxu0 0.0
    %3708 = vmatpush2.msra.mxu0 0.0
    %3709 = vmatprep.subr.mxu0 0.0
    %3710 = vmatpush2.msra.mxu0 0.0
    %3711 = vmatprep.subr.mxu0 0.0
    %3712 = vmatpush2.msra.mxu0 0.0
    %3713 = vmatprep.subr.mxu0 0.0
    %3714 = vmatpush2.msra.mxu0 0.0
    %3715 = vmatprep.subr.mxu0 0.0
    %3716 = vmatpush2.msra.mxu0 0.0
    %3717 = vmatprep.subr.mxu0 0.0
    %3718 = vmatpush2.msra.mxu0 0.0
    %3719 = vmatprep.subr.mxu0 0.0
    %3720 = vmatpush2.msra.mxu0 0.0
    %3721 = vmatprep.subr.mxu0 0.0
    %3722 = vmatpush2.msra.mxu0 0.0
    %3723 = vmatprep.subr.mxu0 0.0
    %3724 = vmatpush2.msra.mxu0 0.0
    %3725 = vmatprep.subr.mxu0 0.0
    %3726 = vmatpush2.msra.mxu0 0.0
    %3727 = vmatprep.subr.mxu0 0.0
    %3728 = vmatpush2.msra.mxu0 0.0
    %3729 = vmatprep.subr.mxu0 0.0
    %3730 = vmatpush2.msra.mxu0 0.0
    %3731 = vmatprep.subr.mxu0 0.0
    %3732 = vmatpush2.msra.mxu0 0.0
    %3733 = vmatprep.subr.mxu0 0.0
    %3734 = vmatpush2.msra.mxu0 0.0
    %3735 = vmatprep.mubr.f32.mxu0 0.0
    %3736 = vmatmul.mubr.f32.gmra.mxu0 %v3669
    %v3737 = vpop.f32.mrf.mxu0
    %v3738 = vadd.f32 0.0, %v3737
    %v3739 = vpop.f32.mrf.mxu0
    %3740 = vdwg.mxu0
    %v3741 = vadd.f32 %v2984, %v3738
    %v3742 = vxor.u32 %v3741, 2147483648
    %v3743 = vmul.f32 %v3742, 1.442695
    %v3744 = vpow.pop %v3743
    %v3745 = vadd.f32 %v3744, 1.0
    %v3746 = vrcp.pop %v3745
    %v3747 = vmul.f32 1.0, %v3746
    %v3748 = vtanh.pop %v3741
    %v3749 = vmul.f32 %v3747, %v3653
    %3751 = vrot.lane.b32.xlu0 %v3748, 64
    %v3752 = vpop.permute.xlu0 %3751
    %v3754 = vmul.f32 %v3747, %v3752
    %3756 = vrot.lane.b32.xlu0 %v3754, 96
    %v3757 = vpop.permute.xlu0 %3756
    %v3759 = vadd.f32 %v3749, %v3757
    %v3760 = vtanh.pop %v3759
    %3762 = vrot.lane.b32.xlu0 %v3760, 64
    %v3763 = vpop.permute.xlu0 %3762
    %v3765 = vmul.f32 %v3747, %v3763
    %v3766 = vxor.u32 %v3765, 2147483648
    %v3767 = vmul.f32 %v3766, 1.442695
    %v3768 = vpow.pop %v3767
    %v3769 = vadd.f32 %v3768, 1.0
    %v3770 = vrcp.pop %v3769
    %v3771 = vmul.f32 1.0, %v3770
    %3773 = vrot.lane.b32.xlu0 %v3765, 64
    %v3774 = vpop.permute.xlu0 %3773
    %v3775 = vsel %vm171, %v3774, 0
    %3777 = vmatprep.subr.mxu0 0.0
    %3778 = vmatpush1.msra.mxu0 0.0
    %3779 = vmatprep.subr.mxu0 0.0
    %3780 = vmatpush1.msra.mxu0 0.0
    %3781 = vmatprep.subr.mxu0 0.0
    %3782 = vmatpush1.msra.mxu0 0.0
    %3783 = vmatprep.subr.mxu0 0.0
    %3784 = vmatpush1.msra.mxu0 0.0
    %3785 = vmatprep.subr.mxu0 0.0
    %3786 = vmatpush1.msra.mxu0 0.0
    %3787 = vmatprep.subr.mxu0 0.0
    %3788 = vmatpush1.msra.mxu0 0.0
    %3789 = vmatprep.subr.mxu0 0.0
    %3790 = vmatpush1.msra.mxu0 0.0
    %3791 = vmatprep.subr.mxu0 0.0
    %3792 = vmatpush1.msra.mxu0 0.0
    %3793 = vmatprep.subr.mxu0 0.0
    %3794 = vmatpush1.msra.mxu0 0.0
    %3795 = vmatprep.subr.mxu0 0.0
    %3796 = vmatpush1.msra.mxu0 0.0
    %3797 = vmatprep.subr.mxu0 0.0
    %3798 = vmatpush1.msra.mxu0 0.0
    %3799 = vmatprep.subr.mxu0 0.0
    %3800 = vmatpush1.msra.mxu0 0.0
    %3801 = vmatprep.subr.mxu0 0.0
    %3802 = vmatpush1.msra.mxu0 %v3140
    %3803 = vmatprep.subr.mxu0 0.0
    %3804 = vmatpush1.msra.mxu0 %v3139
    %3805 = vmatprep.subr.mxu0 0.0
    %3806 = vmatpush1.msra.mxu0 %v3138
    %3807 = vmatprep.subr.mxu0 0.0
    %3808 = vmatpush1.msra.mxu0 %v3137
    %3809 = vmatprep.subr.mxu0 0.0
    %3810 = vmatpush2.msra.mxu0 0.0
    %3811 = vmatprep.subr.mxu0 0.0
    %3812 = vmatpush2.msra.mxu0 0.0
    %3813 = vmatprep.subr.mxu0 0.0
    %3814 = vmatpush2.msra.mxu0 0.0
    %3815 = vmatprep.subr.mxu0 0.0
    %3816 = vmatpush2.msra.mxu0 0.0
    %3817 = vmatprep.subr.mxu0 0.0
    %3818 = vmatpush2.msra.mxu0 0.0
    %3819 = vmatprep.subr.mxu0 0.0
    %3820 = vmatpush2.msra.mxu0 0.0
    %3821 = vmatprep.subr.mxu0 0.0
    %3822 = vmatpush2.msra.mxu0 0.0
    %3823 = vmatprep.subr.mxu0 0.0
    %3824 = vmatpush2.msra.mxu0 0.0
    %3825 = vmatprep.subr.mxu0 0.0
    %3826 = vmatpush2.msra.mxu0 0.0
    %3827 = vmatprep.subr.mxu0 0.0
    %3828 = vmatpush2.msra.mxu0 0.0
    %3829 = vmatprep.subr.mxu0 0.0
    %3830 = vmatpush2.msra.mxu0 0.0
    %3831 = vmatprep.subr.mxu0 0.0
    %3832 = vmatpush2.msra.mxu0 0.0
    %3833 = vmatprep.subr.mxu0 0.0
    %3834 = vmatpush2.msra.mxu0 0.0
    %3835 = vmatprep.subr.mxu0 0.0
    %3836 = vmatpush2.msra.mxu0 0.0
    %3837 = vmatprep.subr.mxu0 0.0
    %3838 = vmatpush2.msra.mxu0 0.0
    %3839 = vmatprep.subr.mxu0 0.0
    %3840 = vmatpush2.msra.mxu0 0.0
    %3841 = vmatprep.mubr.f32.mxu0 0.0
    %3842 = vmatmul.mubr.f32.gmra.mxu0 %v3775
    %v3843 = vpop.f32.mrf.mxu0
    %v3844 = vadd.f32 0.0, %v3843
    %v3845 = vpop.f32.mrf.mxu0
    %3846 = vdwg.mxu0
    %v3847 = vadd.f32 %v3059, %v3844
    %v3848 = vxor.u32 %v3847, 2147483648
    %v3849 = vmul.f32 %v3848, 1.442695
    %v3850 = vpow.pop %v3849
    %v3851 = vadd.f32 %v3850, 1.0
    %v3852 = vrcp.pop %v3851
    %v3853 = vmul.f32 1.0, %v3852
    %v3854 = vtanh.pop %v3847
    %v3855 = vmul.f32 %v3853, %v3759
    %3857 = vrot.lane.b32.xlu0 %v3854, 64
    %v3858 = vpop.permute.xlu0 %3857
    %v3860 = vmul.f32 %v3853, %v3858
    %3862 = vrot.lane.b32.xlu0 %v3860, 96
    %v3863 = vpop.permute.xlu0 %3862
    %v3865 = vadd.f32 %v3855, %v3863
    %v3866 = vtanh.pop %v3865
    %3868 = vrot.lane.b32.xlu0 %v3866, 64
    %v3869 = vpop.permute.xlu0 %3868
    %v3871 = vmul.f32 %v3853, %v3869
    %v3872 = vxor.u32 %v3871, 2147483648
    %v3873 = vmul.f32 %v3872, 1.442695
    %v3874 = vpow.pop %v3873
    %v3875 = vadd.f32 %v3874, 1.0
    %v3876 = vrcp.pop %v3875
    %v3877 = vmul.f32 1.0, %v3876
    %3879 = vrot.lane.b32.xlu0 %v3871, 64
    %v3880 = vpop.permute.xlu0 %3879
    %v3881 = vsel %vm171, %v3880, 0
    %3883 = vmatprep.subr.mxu0 0.0
    %3884 = vmatpush1.msra.mxu0 0.0
    %3885 = vmatprep.subr.mxu0 0.0
    %3886 = vmatpush1.msra.mxu0 0.0
    %3887 = vmatprep.subr.mxu0 0.0
    %3888 = vmatpush1.msra.mxu0 0.0
    %3889 = vmatprep.subr.mxu0 0.0
    %3890 = vmatpush1.msra.mxu0 0.0
    %3891 = vmatprep.subr.mxu0 0.0
    %3892 = vmatpush1.msra.mxu0 0.0
    %3893 = vmatprep.subr.mxu0 0.0
    %3894 = vmatpush1.msra.mxu0 0.0
    %3895 = vmatprep.subr.mxu0 0.0
    %3896 = vmatpush1.msra.mxu0 0.0
    %3897 = vmatprep.subr.mxu0 0.0
    %3898 = vmatpush1.msra.mxu0 0.0
    %3899 = vmatprep.subr.mxu0 0.0
    %3900 = vmatpush1.msra.mxu0 0.0
    %3901 = vmatprep.subr.mxu0 0.0
    %3902 = vmatpush1.msra.mxu0 0.0
    %3903 = vmatprep.subr.mxu0 0.0
    %3904 = vmatpush1.msra.mxu0 0.0
    %3905 = vmatprep.subr.mxu0 0.0
    %3906 = vmatpush1.msra.mxu0 0.0
    %3907 = vmatprep.subr.mxu0 0.0
    %3908 = vmatpush1.msra.mxu0 %v3140
    %3909 = vmatprep.subr.mxu0 0.0
    %3910 = vmatpush1.msra.mxu0 %v3139
    %3911 = vmatprep.subr.mxu0 0.0
    %3912 = vmatpush1.msra.mxu0 %v3138
    %3913 = vmatprep.subr.mxu0 0.0
    %3914 = vmatpush1.msra.mxu0 %v3137
    %3915 = vmatprep.subr.mxu0 0.0
    %3916 = vmatpush2.msra.mxu0 0.0
    %3917 = vmatprep.subr.mxu0 0.0
    %3918 = vmatpush2.msra.mxu0 0.0
    %3919 = vmatprep.subr.mxu0 0.0
    %3920 = vmatpush2.msra.mxu0 0.0
    %3921 = vmatprep.subr.mxu0 0.0
    %3922 = vmatpush2.msra.mxu0 0.0
    %3923 = vmatprep.subr.mxu0 0.0
    %3924 = vmatpush2.msra.mxu0 0.0
    %3925 = vmatprep.subr.mxu0 0.0
    %3926 = vmatpush2.msra.mxu0 0.0
    %3927 = vmatprep.subr.mxu0 0.0
    %3928 = vmatpush2.msra.mxu0 0.0
    %3929 = vmatprep.subr.mxu0 0.0
    %3930 = vmatpush2.msra.mxu0 0.0
    %3931 = vmatprep.subr.mxu0 0.0
    %3932 = vmatpush2.msra.mxu0 0.0
    %3933 = vmatprep.subr.mxu0 0.0
    %3934 = vmatpush2.msra.mxu0 0.0
    %3935 = vmatprep.subr.mxu0 0.0
    %3936 = vmatpush2.msra.mxu0 0.0
    %3937 = vmatprep.subr.mxu0 0.0
    %3938 = vmatpush2.msra.mxu0 0.0
    %3939 = vmatprep.subr.mxu0 0.0
    %3940 = vmatpush2.msra.mxu0 0.0
    %3941 = vmatprep.subr.mxu0 0.0
    %3942 = vmatpush2.msra.mxu0 0.0
    %3943 = vmatprep.subr.mxu0 0.0
    %3944 = vmatpush2.msra.mxu0 0.0
    %3945 = vmatprep.subr.mxu0 0.0
    %3946 = vmatpush2.msra.mxu0 0.0
    %3947 = vmatprep.mubr.f32.mxu0 0.0
    %3948 = vmatmul.mubr.f32.gmra.mxu0 %v3881
    %v3949 = vpop.f32.mrf.mxu0
    %v3950 = vadd.f32 0.0, %v3949
    %v3951 = vpop.f32.mrf.mxu0
    %3952 = vdwg.mxu0
    %v3953 = vadd.f32 %v3134, %v3950
    %v3954 = vxor.u32 %v3953, 2147483648
    %v3955 = vmul.f32 %v3954, 1.442695
    %v3956 = vpow.pop %v3955
    %v3957 = vadd.f32 %v3956, 1.0
    %v3958 = vrcp.pop %v3957
    %v3959 = vmul.f32 1.0, %v3958
    %v3960 = vtanh.pop %v3953
    %v3961 = vmul.f32 %v3959, %v3865
    %3963 = vrot.lane.b32.xlu0 %v3960, 64
    %v3964 = vpop.permute.xlu0 %3963
    %v3966 = vmul.f32 %v3959, %v3964
    %3968 = vrot.lane.b32.xlu0 %v3966, 96
    %v3969 = vpop.permute.xlu0 %3968
    %v3971 = vadd.f32 %v3961, %v3969
    %v3972 = vtanh.pop %v3971
    %3974 = vrot.lane.b32.xlu0 %v3972, 64
    %v3975 = vpop.permute.xlu0 %3974
    %v3977 = vmul.f32 %v3959, %v3975
    %v3978 = vxor.u32 %v3977, 2147483648
    %v3979 = vmul.f32 %v3978, 1.442695
    %v3980 = vpow.pop %v3979
    %v3981 = vadd.f32 %v3980, 1.0
    %v3982 = vrcp.pop %v3981
    %v3983 = vmul.f32 1.0, %v3982
    %3985 = vrot.lane.b32.xlu0 %v3241, 64
    %v3986 = vpop.permute.xlu0 %3985
    %3989 = vrot.lane.b32.xlu0 %v3347, 96
    %v3990 = vpop.permute.xlu0 %3989
    %3993 = vrot.lane.b32.xlu0 %v3559, 32
    %v3994 = vpop.permute.xlu0 %3993
    %3997 = vrot.lane.b32.xlu0 %v3665, 64
    %v3998 = vpop.permute.xlu0 %3997
    %4001 = vrot.lane.b32.xlu0 %v3771, 96
    %v4002 = vpop.permute.xlu0 %4001
    %4005 = vrot.lane.b32.xlu0 %v3983, 32
    %v4006 = vpop.permute.xlu0 %4005
    %v4008 = vsel %vm171, %v3986, %v3990
    %vm4009 = vcmask 523264
    %v4010 = vsel %vm4009, %v4008, %v3453
    %vm4011 = vcmask 785408
    %v4012 = vsel %vm4011, %v4010, %v3994
    %v4013 = vsel %vm171, %v3998, %v4002
    %v4014 = vsel %vm4009, %v4013, %v3877
    %v4015 = vsel %vm4011, %v4014, %v4006
    %v4017 = vlaneseq
    %v4018 = vshrl.u32 %v4017, 7
    %v4019 = vsub.s32 0, %v4018
    %v4020 = vrot.slane %v74, %v4019
    %4022 = vmatprep.subr.mxu0 0.0
    %4023 = vmatpush1.msra.mxu0 %v57
    %4024 = vmatprep.subr.mxu0 0.0
    %4025 = vmatpush1.msra.mxu0 %v56
    %4026 = vmatprep.subr.mxu0 0.0
    %4027 = vmatpush1.msra.mxu0 %v55
    %4028 = vmatprep.subr.mxu0 0.0
    %4029 = vmatpush1.msra.mxu0 %v54
    %4030 = vmatprep.subr.mxu0 0.0
    %4031 = vmatpush1.msra.mxu0 %v53
    %4032 = vmatprep.subr.mxu0 0.0
    %4033 = vmatpush1.msra.mxu0 %v52
    %4034 = vmatprep.subr.mxu0 0.0
    %4035 = vmatpush1.msra.mxu0 %v51
    %4036 = vmatprep.subr.mxu0 0.0
    %4037 = vmatpush1.msra.mxu0 %v50
    %4038 = vmatprep.subr.mxu0 0.0
    %4039 = vmatpush1.msra.mxu0 %v49
    %4040 = vmatprep.subr.mxu0 0.0
    %4041 = vmatpush1.msra.mxu0 %v48
    %4042 = vmatprep.subr.mxu0 0.0
    %4043 = vmatpush1.msra.mxu0 %v47
    %4044 = vmatprep.subr.mxu0 0.0
    %4045 = vmatpush1.msra.mxu0 %v46
    %4046 = vmatprep.subr.mxu0 0.0
    %4047 = vmatpush1.msra.mxu0 %v45
    %4048 = vmatprep.subr.mxu0 0.0
    %4049 = vmatpush1.msra.mxu0 %v44
    %4050 = vmatprep.subr.mxu0 0.0
    %4051 = vmatpush1.msra.mxu0 %v43
    %4052 = vmatprep.subr.mxu0 0.0
    %4053 = vmatpush1.msra.mxu0 %v42
    %4054 = vmatprep.subr.mxu0 0.0
    %4055 = vmatpush2.msra.mxu0 %v73
    %4056 = vmatprep.subr.mxu0 0.0
    %4057 = vmatpush2.msra.mxu0 %v72
    %4058 = vmatprep.subr.mxu0 0.0
    %4059 = vmatpush2.msra.mxu0 %v71
    %4060 = vmatprep.subr.mxu0 0.0
    %4061 = vmatpush2.msra.mxu0 %v70
    %4062 = vmatprep.subr.mxu0 0.0
    %4063 = vmatpush2.msra.mxu0 %v69
    %4064 = vmatprep.subr.mxu0 0.0
    %4065 = vmatpush2.msra.mxu0 %v68
    %4066 = vmatprep.subr.mxu0 0.0
    %4067 = vmatpush2.msra.mxu0 %v67
    %4068 = vmatprep.subr.mxu0 0.0
    %4069 = vmatpush2.msra.mxu0 %v66
    %4070 = vmatprep.subr.mxu0 0.0
    %4071 = vmatpush2.msra.mxu0 %v65
    %4072 = vmatprep.subr.mxu0 0.0
    %4073 = vmatpush2.msra.mxu0 %v64
    %4074 = vmatprep.subr.mxu0 0.0
    %4075 = vmatpush2.msra.mxu0 %v63
    %4076 = vmatprep.subr.mxu0 0.0
    %4077 = vmatpush2.msra.mxu0 %v62
    %4078 = vmatprep.subr.mxu0 0.0
    %4079 = vmatpush2.msra.mxu0 %v61
    %4080 = vmatprep.subr.mxu0 0.0
    %4081 = vmatpush2.msra.mxu0 %v60
    %4082 = vmatprep.subr.mxu0 0.0
    %4083 = vmatpush2.msra.mxu0 %v59
    %4084 = vmatprep.subr.mxu0 0.0
    %4085 = vmatpush2.msra.mxu0 %v58
    %4086 = vmatprep.mubr.f32.mxu0 %v4015
    %4087 = vmatmul.mubr.f32.gmra.mxu0 %v4012
    %v4088 = vpop.f32.mrf.mxu0
    %v4089 = vadd.f32 %v4020, %v4088
    %v4090 = vpop.f32.mrf.mxu0
    %4091 = vdwg.mxu0
    %v4092 = vxor.u32 %v4089, 2147483648
    %v4093 = vmul.f32 %v4092, 1.442695
    %v4094 = vpow.pop %v4093
    %v4095 = vadd.f32 %v4094, 1.0
    %v4096 = vrcp.pop %v4095
    %v4097 = vmul.f32 1.0, %v4096
    %vm4098 = vcmask 25600
    %4099 = vst.msk [vmem:[#allocation2] sm:$0x3] %vm4098, %v4097
    // Predicated region
    $region50: #{custom_lstm_forward.1} parent=1 // pred_check
      _
    $region51: #{custom_lstm_forward.1} parent=1 // pred_check_branch
      %4101 = sbr.rel (0) target = $region53
    $region52: #{custom_lstm_forward.1} parent=1 // pred_region
      %s4103 = ssub.s32 32, 32
      %4104 = vsyncadd [#allocation3], %s4103
      %s4106 = sshll.u32 [#allocation2], 4
      %s4107 = int_to_ptr.vmem [resolvable:$true] %s4106
      %4109 = dma.vmem_to_hbm [thread:$0]  %s4107, 32, %s12, [#allocation3]
    $region53: #{custom_lstm_forward.1} parent=1 // pred_fallthru
      _
    // Predicated region
    $region54: #{custom_lstm_forward.1} parent=1 // pred_check
      _
    $region55: #{custom_lstm_forward.1} parent=1 // pred_check_branch
      %4111 = sbr.rel (0) target = $region57
    $region56: #{custom_lstm_forward.1} parent=1 // pred_region
      %4112 = dma.done [#allocation3], 32
    $region57: #{custom_lstm_forward.1} parent=1 // pred_fallthru
      _
    %4113 = vsyncpa [#allocation3], 1

</llo_original>
